<compile_context>
chip_gen: v6e
topology: v6e:2x2x1
jax: 0.10.0
libtpu: 0.0.40
codegen_flags: <defaults>
</compile_context>

<pallas_src>
import jax
import jax.numpy as jnp
from jax.experimental import pallas as pl
from jax.experimental.pallas import tpu as pltpu


_LANE = 128        # TPU lane width
_SUBLANE = 8       # f32 sublane count
_TIME_CHUNK = 16   # timesteps per grid step (sweepable 16-32)

# PyTorch LSTM gate order is (i, f, g, o); kernel uses (i, f, o, g) so one
# sigmoid covers 3*Hp contiguous lanes and one tanh covers Hp.
_GATE_ORDER = (0, 1, 3, 2)


def _round_up(x, m):
    return (x + m - 1) // m * m


def _reorder_pad_gates(w, H, Hp):
    """Reorder gate blocks (i,f,g,o)->(i,f,o,g) and pad each from H to Hp cols."""
    pads = [(0, 0)] * (w.ndim - 1) + [(0, Hp - H)]
    return jnp.concatenate(
        [jnp.pad(w[..., g * H:(g + 1) * H], pads) for g in _GATE_ORDER], axis=-1)


# --------------------------------------------------------------------------- #
# Fused kernel: per-chunk input projection + LSTM recurrence + final          #
# Linear + Sigmoid.  One grid step == TIME_CHUNK timesteps; h/c persist in    #
# VMEM scratch across grid steps.                                             #
# --------------------------------------------------------------------------- #
def _lstm_kernel(len_ref, x_ref, wih_ref, whh_ref, bias_ref, wout_ref, bout_ref,
                 out_ref, pg_ref, h_ref, c_ref):
    chunk = pl.program_id(0)
    Bp, Hp = h_ref.shape
    C = x_ref.shape[0] // Bp

    @pl.when(chunk == 0)
    def _init():
        h_ref[...] = jnp.zeros_like(h_ref)
        c_ref[...] = jnp.zeros_like(c_ref)

    # Chunk input projection + bias: one (C*Bp, E) @ (E, 4Hp) matmul, NOT on
    # the step-to-step serial chain (rides on idle MXU slack, f32 in VMEM).
    pg_ref[...] = (jnp.dot(x_ref[...], wih_ref[...],
                           preferred_element_type=jnp.float32)
                   + bias_ref[...])

    lengths = len_ref[...]                      # (Bp, 1) int32, resident
    whh = whh_ref[...]                          # (Hp, 4Hp) bf16, resident
    t0 = chunk * C

    def step(s, carry):
        h, c = carry                                            # f32 (Bp, Hp)
        row0 = pl.multiple_of(s * Bp, Bp)
        pre = pg_ref[pl.ds(row0, Bp), :]                        # (Bp, 4Hp) f32
        gates = pre + jnp.dot(h.astype(jnp.bfloat16), whh,
                              preferred_element_type=jnp.float32)
        # gate layout (i, f, o, g): one sigmoid over 3*Hp lanes, one tanh.
        sig = jax.nn.sigmoid(gates[:, 0:3 * Hp])
        i_g = sig[:, 0 * Hp:1 * Hp]
        f_g = sig[:, 1 * Hp:2 * Hp]
        o_g = sig[:, 2 * Hp:3 * Hp]
        g_g = jnp.tanh(gates[:, 3 * Hp:4 * Hp])
        c_new = f_g * c + i_g * g_g
        h_new = o_g * jnp.tanh(c_new)
        live = (t0 + s) < lengths                               # (Bp, 1) bool
        return (jnp.where(live, h_new, h), jnp.where(live, c_new, c))

    h, c = jax.lax.fori_loop(0, C, step, (h_ref[...], c_ref[...]), unroll=True)
    h_ref[...] = h
    c_ref[...] = c

    @pl.when(chunk == pl.num_programs(0) - 1)
    def _finalize():
        logit = (jnp.dot(h.astype(jnp.bfloat16), wout_ref[...],
                         preferred_element_type=jnp.float32) + bout_ref[...])
        out_ref[...] = jax.nn.sigmoid(logit)


# --------------------------------------------------------------------------- #
# Wrapper                                                                      #
# --------------------------------------------------------------------------- #
@jax.jit
def rnn_classifier_forward(sequence, lengths, params):
    """Forward pass equivalent to RNNClassifier.forward (use_lstm=True).

    sequence: (T, B) int32 token ids
    lengths:  (B,) int32 actual lengths (or None)
    returns:  (B,) float32 probabilities in (0, 1)
    """
    T, B = sequence.shape
    emb = params["embedding"].astype(jnp.bfloat16)             # (V, E)
    E = emb.shape[1]
    H = params["w_hh"].shape[0]                                 # w_hh: (H, 4H)

    Bp = _round_up(max(B, _SUBLANE), _SUBLANE)                  # sublane-aligned
    Hp = _round_up(H, _LANE)                                    # lane-aligned gates
    C = _TIME_CHUNK
    Tp = _round_up(T, C)
    G = 4 * Hp

    if lengths is None:
        lengths = jnp.full((B,), T, jnp.int32)
    len_col = jnp.zeros((Bp, 1), jnp.int32).at[:B, 0].set(lengths.astype(jnp.int32))

    # Glue: embedding gather (padding_idx=0 row is zero), padded, flattened to
    # (Tp*Bp, E) bf16 so the streamed block is a plain row range.
    seq_p = jnp.zeros((Tp, Bp), sequence.dtype).at[:T, :B].set(sequence)
    x_flat = emb[seq_p].reshape(Tp * Bp, E)

    # Parameters: per-gate reorder (i,f,o,g) + pad H -> Hp; matmul inputs bf16.
    w_ih = _reorder_pad_gates(params["w_ih"], H, Hp).astype(jnp.bfloat16)      # (E, 4Hp)
    w_hh = _reorder_pad_gates(jnp.pad(params["w_hh"], ((0, Hp - H), (0, 0))),
                              H, Hp).astype(jnp.bfloat16)                      # (Hp, 4Hp)
    bias = _reorder_pad_gates(params["bias"], H, Hp)                           # (1, 4Hp) f32
    w_out = jnp.pad(params["w_out"],
                    ((0, Hp - H), (0, _LANE - 1))).astype(jnp.bfloat16)        # (Hp, 128)
    b_out = jnp.pad(params["b_out"], ((0, 0), (0, _LANE - 1)))                 # (1, 128) f32

    cost = pl.CostEstimate(
        flops=int(2 * Tp * Bp * E * G            # input projection
                  + 2 * Tp * Bp * Hp * G         # recurrent matmuls
                  + 2 * Bp * Hp * _LANE),        # output projection
        transcendentals=int(Tp * Bp * G + Bp * _LANE),
        bytes_accessed=int(Tp * Bp * E * 2                      # x stream (bf16)
                           + (E + Hp) * G * 2 + G * 4           # weights + bias
                           + Hp * _LANE * 2 + _LANE * 4         # output head
                           + Bp * 4 + Bp * _LANE * 4),          # lengths + out
    )

    out = pl.pallas_call(
        _lstm_kernel,
        out_shape=jax.ShapeDtypeStruct((Bp, _LANE), jnp.float32),
        grid_spec=pltpu.PrefetchScalarGridSpec(
            num_scalar_prefetch=0,
            grid=(Tp // C,),
            in_specs=[
                pl.BlockSpec((Bp, 1), lambda c: (0, 0)),          # lengths (resident)
                pl.BlockSpec((C * Bp, E), lambda c: (c, 0)),      # embedded x (streamed)
                pl.BlockSpec((E, G), lambda c: (0, 0)),           # w_ih (resident)
                pl.BlockSpec((Hp, G), lambda c: (0, 0)),          # w_hh (resident)
                pl.BlockSpec((1, G), lambda c: (0, 0)),           # bias
                pl.BlockSpec((Hp, _LANE), lambda c: (0, 0)),      # w_out
                pl.BlockSpec((1, _LANE), lambda c: (0, 0)),       # b_out
            ],
            out_specs=pl.BlockSpec((Bp, _LANE), lambda c: (0, 0)),  # written last chunk
            scratch_shapes=[
                pltpu.VMEM((C * Bp, G), jnp.float32),             # chunk pre-gates
                pltpu.VMEM((Bp, Hp), jnp.float32),                # h state
                pltpu.VMEM((Bp, Hp), jnp.float32),                # c state
            ],
        ),
        compiler_params=pltpu.CompilerParams(
            dimension_semantics=("arbitrary",),
            vmem_limit_bytes=32 * 1024 * 1024),
        cost_estimate=cost,
    )(len_col, x_flat, w_ih, w_hh, bias, w_out, b_out)

    return out[:B, 0]                                            # (B,)


# --------------------------------------------------------------------------- #
# Parameters + references                                                      #
# --------------------------------------------------------------------------- #
def init_params(key, num_embeddings, embedding_dim, hidden_size):
    """Deterministic synthetic parameters matching the PyTorch module shapes."""
    k = jax.random.split(key, 7)
    V, E, H = num_embeddings, embedding_dim, hidden_size
    scale = 0.1
    embedding = scale * jax.random.normal(k[0], (V, E), jnp.float32)
    embedding = embedding.at[0].set(0.0)                        # padding_idx=0
    w_ih_pt = scale * jax.random.normal(k[1], (4 * H, E), jnp.float32)
    w_hh_pt = scale * jax.random.normal(k[2], (4 * H, H), jnp.float32)
    b_ih = scale * jax.random.normal(k[3], (4 * H,), jnp.float32)
    b_hh = scale * jax.random.normal(k[4], (4 * H,), jnp.float32)
    w_out_pt = scale * jax.random.normal(k[5], (1, H), jnp.float32)
    b_out = scale * jax.random.normal(k[6], (1,), jnp.float32)
    return {
        "embedding": embedding,
        "w_ih": w_ih_pt.T,                                      # (E, 4H), PyTorch gate order
        "w_hh": w_hh_pt.T,                                      # (H, 4H)
        "bias": (b_ih + b_hh)[None, :],                         # (1, 4H)
        "w_out": w_out_pt.T,                                    # (H, 1)
        "b_out": b_out[None, :],                                # (1, 1)
    }


def _reference_forward(sequence, lengths, params, match_kernel_precision):
    """Pure-JAX reference; optionally mimics the kernel's bf16 matmul inputs."""
    T, B = sequence.shape
    H = params["w_hh"].shape[0]
    cast = (lambda a: a.astype(jnp.bfloat16)) if match_kernel_precision \
        else (lambda a: a.astype(jnp.float32))
    emb = cast(params["embedding"])
    w_ih, w_hh, w_out = cast(params["w_ih"]), cast(params["w_hh"]), cast(params["w_out"])

    # Pre-gates stay f32 (the fused kernel keeps them in VMEM, no bf16 round).
    pre = jnp.einsum("tbe,ef->tbf", emb[sequence], w_ih,
                     preferred_element_type=jnp.float32) + params["bias"]
    mask = (jnp.arange(T)[:, None] < lengths[None, :])[..., None]   # (T,B,1) bool

    def step(carry, inp):
        h, c = carry
        p_t, m = inp
        gates = p_t + jnp.dot(cast(h), w_hh, preferred_element_type=jnp.float32)
        i = jax.nn.sigmoid(gates[:, 0:H])
        f = jax.nn.sigmoid(gates[:, H:2 * H])
        g = jnp.tanh(gates[:, 2 * H:3 * H])
        o = jax.nn.sigmoid(gates[:, 3 * H:4 * H])
        c_new = f * c + i * g
        h_new = o * jnp.tanh(c_new)
        return (jnp.where(m, h_new, h), jnp.where(m, c_new, c)), None

    (h, _), _ = jax.lax.scan(step, (jnp.zeros((B, H)), jnp.zeros((B, H))), (pre, mask))
    logit = jnp.dot(cast(h), w_out, preferred_element_type=jnp.float32) + params["b_out"]
    return jax.nn.sigmoid(logit).squeeze()


if __name__ == "__main__":
    num_embeddings = 20      # vocabulary size
    embedding_dim = 16
    hidden_size = 32
    seq_len = 8
    batch_size = 2

    key = jax.random.PRNGKey(0)
    pkey, skey = jax.random.split(key)
    params = init_params(pkey, num_embeddings, embedding_dim, hidden_size)

    # Token ids in [1, V) (0 is the padding index); lengths sorted descending
    # as pack_padded_sequence expects; padded positions hold token 0.
    sequence = jax.random.randint(skey, (seq_len, batch_size), 1, num_embeddings,
                                  dtype=jnp.int32)
    lengths = jnp.array([8, 5], dtype=jnp.int32)
    pad_mask = (jnp.arange(seq_len)[:, None] < lengths[None, :])
    sequence = jnp.where(pad_mask, sequence, 0)

    out = jax.block_until_ready(rnn_classifier_forward(sequence, lengths, params))

    ref_match = _reference_forward(sequence, lengths, params, True)   # bf16-matched
    ref_f32 = _reference_forward(sequence, lengths, params, False)    # pure f32
    assert out.shape == (batch_size,)
    assert jnp.allclose(out, ref_match, atol=2e-3, rtol=2e-3), (out, ref_match)
    assert jnp.allclose(out, ref_f32, atol=2e-2, rtol=2e-2), (out, ref_f32)
    assert bool(jnp.all((out > 0.0) & (out < 1.0)))

    print("KERNEL_OK")
</pallas_src>

<mosaic_0001>
module attributes {stable_mosaic.version = 11 : i64} {
  func.func @_lstm_kernel(%arg0: i32, %arg1: memref<8x1xi32, #tpu.memory_space<vmem>>, %arg2: memref<128x16xbf16, #tpu.memory_space<vmem>>, %arg3: memref<16x512xbf16, #tpu.memory_space<vmem>>, %arg4: memref<128x512xbf16, #tpu.memory_space<vmem>>, %arg5: memref<1x512xf32, #tpu.memory_space<vmem>>, %arg6: memref<128x128xbf16, #tpu.memory_space<vmem>>, %arg7: memref<1x128xf32, #tpu.memory_space<vmem>>, %arg8: memref<8x128xf32, #tpu.memory_space<vmem>>, %arg9: memref<128x512xf32, #tpu.memory_space<vmem>>, %arg10: memref<8x128xf32, #tpu.memory_space<vmem>>, %arg11: memref<8x128xf32, #tpu.memory_space<vmem>>) attributes {dimension_semantics = [#tpu.dimension_semantics<arbitrary>], iteration_bounds = array<i64: 1>, scalar_prefetch = 0 : i64, scratch_operands = 3 : i64, tpu.core_type = #tpu.core_type<tc>, window_params = [{pipeline_mode = #tpu.pipeline_mode<synchronous>, transform_indices = @transform_0, window_bounds = array<i64: 8, 1>}, {transform_indices = @transform_1, window_bounds = array<i64: 128, 16>}, {pipeline_mode = #tpu.pipeline_mode<synchronous>, transform_indices = @transform_2, window_bounds = array<i64: 16, 512>}, {pipeline_mode = #tpu.pipeline_mode<synchronous>, transform_indices = @transform_3, window_bounds = array<i64: 128, 512>}, {pipeline_mode = #tpu.pipeline_mode<synchronous>, transform_indices = @transform_4, window_bounds = array<i64: 1, 512>}, {pipeline_mode = #tpu.pipeline_mode<synchronous>, transform_indices = @transform_5, window_bounds = array<i64: 128, 128>}, {pipeline_mode = #tpu.pipeline_mode<synchronous>, transform_indices = @transform_6, window_bounds = array<i64: 1, 128>}, {pipeline_mode = #tpu.pipeline_mode<synchronous>, transform_indices = @transform_7, window_bounds = array<i64: 8, 128>}]} {
    %c0_i32 = arith.constant 0 : i32
    %0 = arith.cmpi eq, %arg0, %c0_i32 : i32
    %1 = arith.extui %0 : i1 to i32
    %c0_i32_0 = arith.constant 0 : i32
    %2 = arith.cmpi ne, %1, %c0_i32_0 : i32
    scf.if %2 {
      %cst_88 = arith.constant 0.000000e+00 : f32
      %532 = vector.broadcast %cst_88 : f32 to vector<8x128xf32>
      %c0_89 = arith.constant 0 : index
      %c0_90 = arith.constant 0 : index
      %533 = vector.load %arg10[%c0_89, %c0_90] : memref<8x128xf32, #tpu.memory_space<vmem>>, vector<8x128xf32>
      tpu.vector_store %arg10[%c0_89, %c0_90], %532 {strides = array<i32>} : memref<8x128xf32, #tpu.memory_space<vmem>>, vector<8x128xf32>,
      %cst_91 = arith.constant 0.000000e+00 : f32
      %534 = vector.broadcast %cst_91 : f32 to vector<8x128xf32>
      %c0_92 = arith.constant 0 : index
      %c0_93 = arith.constant 0 : index
      %535 = vector.load %arg11[%c0_92, %c0_93] : memref<8x128xf32, #tpu.memory_space<vmem>>, vector<8x128xf32>
      tpu.vector_store %arg11[%c0_92, %c0_93], %534 {strides = array<i32>} : memref<8x128xf32, #tpu.memory_space<vmem>>, vector<8x128xf32>,
    } else {
    }
    %c0 = arith.constant 0 : index
    %c0_1 = arith.constant 0 : index
    %3 = vector.load %arg2[%c0, %c0_1] : memref<128x16xbf16, #tpu.memory_space<vmem>>, vector<128x16xbf16>
    %c0_2 = arith.constant 0 : index
    %c0_3 = arith.constant 0 : index
    %4 = vector.load %arg3[%c0_2, %c0_3] : memref<16x512xbf16, #tpu.memory_space<vmem>>, vector<16x512xbf16>
    %cst = arith.constant dense<0.000000e+00> : vector<128x512xf32>
    %5 = tpu.matmul %3, %4, %cst {dimension_numbers = #tpu.dot_dimension_numbers<[1], [0], [0], [1], [0, 0, 1, 1], [], []>} : vector<128x16xbf16>, vector<16x512xbf16>, vector<128x512xf32> -> vector<128x512xf32>
    %c0_4 = arith.constant 0 : index
    %c0_5 = arith.constant 0 : index
    %6 = vector.load %arg5[%c0_4, %c0_5] : memref<1x512xf32, #tpu.memory_space<vmem>>, vector<1x512xf32>
    %7 = vector.broadcast %6 : vector<1x512xf32> to vector<128x512xf32>
    %8 = arith.addf %5, %7 : vector<128x512xf32>
    %c0_6 = arith.constant 0 : index
    %c0_7 = arith.constant 0 : index
    %9 = vector.load %arg9[%c0_6, %c0_7] : memref<128x512xf32, #tpu.memory_space<vmem>>, vector<128x512xf32>
    tpu.vector_store %arg9[%c0_6, %c0_7], %8 {strides = array<i32>} : memref<128x512xf32, #tpu.memory_space<vmem>>, vector<128x512xf32>,
    %c0_8 = arith.constant 0 : index
    %c0_9 = arith.constant 0 : index
    %10 = vector.load %arg1[%c0_8, %c0_9] : memref<8x1xi32, #tpu.memory_space<vmem>>, vector<8x1xi32>
    %c0_10 = arith.constant 0 : index
    %c0_11 = arith.constant 0 : index
    %11 = vector.load %arg4[%c0_10, %c0_11] : memref<128x512xbf16, #tpu.memory_space<vmem>>, vector<128x512xbf16>
    %c16_i32 = arith.constant 16 : i32
    %12 = arith.muli %arg0, %c16_i32 : i32
    %c0_12 = arith.constant 0 : index
    %c0_13 = arith.constant 0 : index
    %13 = vector.load %arg10[%c0_12, %c0_13] : memref<8x128xf32, #tpu.memory_space<vmem>>, vector<8x128xf32>
    %c0_14 = arith.constant 0 : index
    %c0_15 = arith.constant 0 : index
    %14 = vector.load %arg11[%c0_14, %c0_15] : memref<8x128xf32, #tpu.memory_space<vmem>>, vector<8x128xf32>
    %c0_i32_16 = arith.constant 0 : i32
    %c8_i32 = arith.constant 8 : i32
    %15 = arith.muli %c0_i32_16, %c8_i32 : i32
    %16 = tpu.assume_multiple %15, 8 : i32
    %17 = arith.index_cast %16 : i32 to index
    %c0_17 = arith.constant 0 : index
    %18 = vector.load %arg9[%17, %c0_17] : memref<128x512xf32, #tpu.memory_space<vmem>>, vector<8x512xf32>
    %19 = arith.truncf %13 : vector<8x128xf32> to vector<8x128xbf16>
    %cst_18 = arith.constant dense<0.000000e+00> : vector<8x512xf32>
    %20 = tpu.matmul %19, %11, %cst_18 {dimension_numbers = #tpu.dot_dimension_numbers<[1], [0], [0], [1], [0, 0, 1, 1], [], []>} : vector<8x128xbf16>, vector<128x512xbf16>, vector<8x512xf32> -> vector<8x512xf32>
    %21 = arith.addf %18, %20 : vector<8x512xf32>
    %22 = vector.extract_strided_slice %21 {offsets = [0, 0], sizes = [8, 384], strides = [1, 1]} : vector<8x512xf32> to vector<8x384xf32>
    %23 = arith.negf %22 : vector<8x384xf32>
    %24 = math.exp %23 : vector<8x384xf32>
    %cst_19 = arith.constant 1.000000e+00 : f32
    %25 = vector.broadcast %cst_19 : f32 to vector<8x384xf32>
    %26 = arith.addf %25, %24 : vector<8x384xf32>
    %27 = arith.divf %25, %26 : vector<8x384xf32>
    %28 = vector.extract_strided_slice %27 {offsets = [0, 0], sizes = [8, 128], strides = [1, 1]} : vector<8x384xf32> to vector<8x128xf32>
    %29 = vector.extract_strided_slice %27 {offsets = [0, 128], sizes = [8, 128], strides = [1, 1]} : vector<8x384xf32> to vector<8x128xf32>
    %30 = vector.extract_strided_slice %27 {offsets = [0, 256], sizes = [8, 128], strides = [1, 1]} : vector<8x384xf32> to vector<8x128xf32>
    %31 = vector.extract_strided_slice %21 {offsets = [0, 384], sizes = [8, 128], strides = [1, 1]} : vector<8x512xf32> to vector<8x128xf32>
    %32 = math.tanh %31 : vector<8x128xf32>
    %33 = arith.mulf %29, %14 : vector<8x128xf32>
    %34 = arith.mulf %28, %32 : vector<8x128xf32>
    %35 = arith.addf %33, %34 : vector<8x128xf32>
    %36 = math.tanh %35 : vector<8x128xf32>
    %37 = arith.mulf %30, %36 : vector<8x128xf32>
    %38 = arith.addi %12, %c0_i32_16 : i32
    %39 = vector.broadcast %38 : i32 to vector<8x1xi32>
    %40 = arith.cmpi slt, %39, %10 : vector<8x1xi32>
    %41 = vector.shape_cast %40 : vector<8x1xi1> to vector<8x1xi1>
    %42 = vector.broadcast %41 : vector<8x1xi1> to vector<8x128xi1>
    %43 = arith.select %42, %37, %13 : vector<8x128xi1>, vector<8x128xf32>
    %44 = vector.shape_cast %40 : vector<8x1xi1> to vector<8x1xi1>
    %45 = vector.broadcast %44 : vector<8x1xi1> to vector<8x128xi1>
    %46 = arith.select %45, %35, %14 : vector<8x128xi1>, vector<8x128xf32>
    %c1_i32 = arith.constant 1 : i32
    %c8_i32_20 = arith.constant 8 : i32
    %47 = arith.muli %c1_i32, %c8_i32_20 : i32
    %48 = tpu.assume_multiple %47, 8 : i32
    %49 = arith.index_cast %48 : i32 to index
    %c0_21 = arith.constant 0 : index
    %50 = vector.load %arg9[%49, %c0_21] : memref<128x512xf32, #tpu.memory_space<vmem>>, vector<8x512xf32>
    %51 = arith.truncf %43 : vector<8x128xf32> to vector<8x128xbf16>
    %cst_22 = arith.constant dense<0.000000e+00> : vector<8x512xf32>
    %52 = tpu.matmul %51, %11, %cst_22 {dimension_numbers = #tpu.dot_dimension_numbers<[1], [0], [0], [1], [0, 0, 1, 1], [], []>} : vector<8x128xbf16>, vector<128x512xbf16>, vector<8x512xf32> -> vector<8x512xf32>
    %53 = arith.addf %50, %52 : vector<8x512xf32>
    %54 = vector.extract_strided_slice %53 {offsets = [0, 0], sizes = [8, 384], strides = [1, 1]} : vector<8x512xf32> to vector<8x384xf32>
    %55 = arith.negf %54 : vector<8x384xf32>
    %56 = math.exp %55 : vector<8x384xf32>
    %cst_23 = arith.constant 1.000000e+00 : f32
    %57 = vector.broadcast %cst_23 : f32 to vector<8x384xf32>
    %58 = arith.addf %57, %56 : vector<8x384xf32>
    %59 = arith.divf %57, %58 : vector<8x384xf32>
    %60 = vector.extract_strided_slice %59 {offsets = [0, 0], sizes = [8, 128], strides = [1, 1]} : vector<8x384xf32> to vector<8x128xf32>
    %61 = vector.extract_strided_slice %59 {offsets = [0, 128], sizes = [8, 128], strides = [1, 1]} : vector<8x384xf32> to vector<8x128xf32>
    %62 = vector.extract_strided_slice %59 {offsets = [0, 256], sizes = [8, 128], strides = [1, 1]} : vector<8x384xf32> to vector<8x128xf32>
    %63 = vector.extract_strided_slice %53 {offsets = [0, 384], sizes = [8, 128], strides = [1, 1]} : vector<8x512xf32> to vector<8x128xf32>
    %64 = math.tanh %63 : vector<8x128xf32>
    %65 = arith.mulf %61, %46 : vector<8x128xf32>
    %66 = arith.mulf %60, %64 : vector<8x128xf32>
    %67 = arith.addf %65, %66 : vector<8x128xf32>
    %68 = math.tanh %67 : vector<8x128xf32>
    %69 = arith.mulf %62, %68 : vector<8x128xf32>
    %70 = arith.addi %12, %c1_i32 : i32
    %71 = vector.broadcast %70 : i32 to vector<8x1xi32>
    %72 = arith.cmpi slt, %71, %10 : vector<8x1xi32>
    %73 = vector.shape_cast %72 : vector<8x1xi1> to vector<8x1xi1>
    %74 = vector.broadcast %73 : vector<8x1xi1> to vector<8x128xi1>
    %75 = arith.select %74, %69, %43 : vector<8x128xi1>, vector<8x128xf32>
    %76 = vector.shape_cast %72 : vector<8x1xi1> to vector<8x1xi1>
    %77 = vector.broadcast %76 : vector<8x1xi1> to vector<8x128xi1>
    %78 = arith.select %77, %67, %46 : vector<8x128xi1>, vector<8x128xf32>
    %c2_i32 = arith.constant 2 : i32
    %c8_i32_24 = arith.constant 8 : i32
    %79 = arith.muli %c2_i32, %c8_i32_24 : i32
    %80 = tpu.assume_multiple %79, 8 : i32
    %81 = arith.index_cast %80 : i32 to index
    %c0_25 = arith.constant 0 : index
    %82 = vector.load %arg9[%81, %c0_25] : memref<128x512xf32, #tpu.memory_space<vmem>>, vector<8x512xf32>
    %83 = arith.truncf %75 : vector<8x128xf32> to vector<8x128xbf16>
    %cst_26 = arith.constant dense<0.000000e+00> : vector<8x512xf32>
    %84 = tpu.matmul %83, %11, %cst_26 {dimension_numbers = #tpu.dot_dimension_numbers<[1], [0], [0], [1], [0, 0, 1, 1], [], []>} : vector<8x128xbf16>, vector<128x512xbf16>, vector<8x512xf32> -> vector<8x512xf32>
    %85 = arith.addf %82, %84 : vector<8x512xf32>
    %86 = vector.extract_strided_slice %85 {offsets = [0, 0], sizes = [8, 384], strides = [1, 1]} : vector<8x512xf32> to vector<8x384xf32>
    %87 = arith.negf %86 : vector<8x384xf32>
    %88 = math.exp %87 : vector<8x384xf32>
    %cst_27 = arith.constant 1.000000e+00 : f32
    %89 = vector.broadcast %cst_27 : f32 to vector<8x384xf32>
    %90 = arith.addf %89, %88 : vector<8x384xf32>
    %91 = arith.divf %89, %90 : vector<8x384xf32>
    %92 = vector.extract_strided_slice %91 {offsets = [0, 0], sizes = [8, 128], strides = [1, 1]} : vector<8x384xf32> to vector<8x128xf32>
    %93 = vector.extract_strided_slice %91 {offsets = [0, 128], sizes = [8, 128], strides = [1, 1]} : vector<8x384xf32> to vector<8x128xf32>
    %94 = vector.extract_strided_slice %91 {offsets = [0, 256], sizes = [8, 128], strides = [1, 1]} : vector<8x384xf32> to vector<8x128xf32>
    %95 = vector.extract_strided_slice %85 {offsets = [0, 384], sizes = [8, 128], strides = [1, 1]} : vector<8x512xf32> to vector<8x128xf32>
    %96 = math.tanh %95 : vector<8x128xf32>
    %97 = arith.mulf %93, %78 : vector<8x128xf32>
    %98 = arith.mulf %92, %96 : vector<8x128xf32>
    %99 = arith.addf %97, %98 : vector<8x128xf32>
    %100 = math.tanh %99 : vector<8x128xf32>
    %101 = arith.mulf %94, %100 : vector<8x128xf32>
    %102 = arith.addi %12, %c2_i32 : i32
    %103 = vector.broadcast %102 : i32 to vector<8x1xi32>
    %104 = arith.cmpi slt, %103, %10 : vector<8x1xi32>
    %105 = vector.shape_cast %104 : vector<8x1xi1> to vector<8x1xi1>
    %106 = vector.broadcast %105 : vector<8x1xi1> to vector<8x128xi1>
    %107 = arith.select %106, %101, %75 : vector<8x128xi1>, vector<8x128xf32>
    %108 = vector.shape_cast %104 : vector<8x1xi1> to vector<8x1xi1>
    %109 = vector.broadcast %108 : vector<8x1xi1> to vector<8x128xi1>
    %110 = arith.select %109, %99, %78 : vector<8x128xi1>, vector<8x128xf32>
    %c3_i32 = arith.constant 3 : i32
    %c8_i32_28 = arith.constant 8 : i32
    %111 = arith.muli %c3_i32, %c8_i32_28 : i32
    %112 = tpu.assume_multiple %111, 8 : i32
    %113 = arith.index_cast %112 : i32 to index
    %c0_29 = arith.constant 0 : index
    %114 = vector.load %arg9[%113, %c0_29] : memref<128x512xf32, #tpu.memory_space<vmem>>, vector<8x512xf32>
    %115 = arith.truncf %107 : vector<8x128xf32> to vector<8x128xbf16>
    %cst_30 = arith.constant dense<0.000000e+00> : vector<8x512xf32>
    %116 = tpu.matmul %115, %11, %cst_30 {dimension_numbers = #tpu.dot_dimension_numbers<[1], [0], [0], [1], [0, 0, 1, 1], [], []>} : vector<8x128xbf16>, vector<128x512xbf16>, vector<8x512xf32> -> vector<8x512xf32>
    %117 = arith.addf %114, %116 : vector<8x512xf32>
    %118 = vector.extract_strided_slice %117 {offsets = [0, 0], sizes = [8, 384], strides = [1, 1]} : vector<8x512xf32> to vector<8x384xf32>
    %119 = arith.negf %118 : vector<8x384xf32>
    %120 = math.exp %119 : vector<8x384xf32>
    %cst_31 = arith.constant 1.000000e+00 : f32
    %121 = vector.broadcast %cst_31 : f32 to vector<8x384xf32>
    %122 = arith.addf %121, %120 : vector<8x384xf32>
    %123 = arith.divf %121, %122 : vector<8x384xf32>
    %124 = vector.extract_strided_slice %123 {offsets = [0, 0], sizes = [8, 128], strides = [1, 1]} : vector<8x384xf32> to vector<8x128xf32>
    %125 = vector.extract_strided_slice %123 {offsets = [0, 128], sizes = [8, 128], strides = [1, 1]} : vector<8x384xf32> to vector<8x128xf32>
    %126 = vector.extract_strided_slice %123 {offsets = [0, 256], sizes = [8, 128], strides = [1, 1]} : vector<8x384xf32> to vector<8x128xf32>
    %127 = vector.extract_strided_slice %117 {offsets = [0, 384], sizes = [8, 128], strides = [1, 1]} : vector<8x512xf32> to vector<8x128xf32>
    %128 = math.tanh %127 : vector<8x128xf32>
    %129 = arith.mulf %125, %110 : vector<8x128xf32>
    %130 = arith.mulf %124, %128 : vector<8x128xf32>
    %131 = arith.addf %129, %130 : vector<8x128xf32>
    %132 = math.tanh %131 : vector<8x128xf32>
    %133 = arith.mulf %126, %132 : vector<8x128xf32>
    %134 = arith.addi %12, %c3_i32 : i32
    %135 = vector.broadcast %134 : i32 to vector<8x1xi32>
    %136 = arith.cmpi slt, %135, %10 : vector<8x1xi32>
    %137 = vector.shape_cast %136 : vector<8x1xi1> to vector<8x1xi1>
    %138 = vector.broadcast %137 : vector<8x1xi1> to vector<8x128xi1>
    %139 = arith.select %138, %133, %107 : vector<8x128xi1>, vector<8x128xf32>
    %140 = vector.shape_cast %136 : vector<8x1xi1> to vector<8x1xi1>
    %141 = vector.broadcast %140 : vector<8x1xi1> to vector<8x128xi1>
    %142 = arith.select %141, %131, %110 : vector<8x128xi1>, vector<8x128xf32>
    %c4_i32 = arith.constant 4 : i32
    %c8_i32_32 = arith.constant 8 : i32
    %143 = arith.muli %c4_i32, %c8_i32_32 : i32
    %144 = tpu.assume_multiple %143, 8 : i32
    %145 = arith.index_cast %144 : i32 to index
    %c0_33 = arith.constant 0 : index
    %146 = vector.load %arg9[%145, %c0_33] : memref<128x512xf32, #tpu.memory_space<vmem>>, vector<8x512xf32>
    %147 = arith.truncf %139 : vector<8x128xf32> to vector<8x128xbf16>
    %cst_34 = arith.constant dense<0.000000e+00> : vector<8x512xf32>
    %148 = tpu.matmul %147, %11, %cst_34 {dimension_numbers = #tpu.dot_dimension_numbers<[1], [0], [0], [1], [0, 0, 1, 1], [], []>} : vector<8x128xbf16>, vector<128x512xbf16>, vector<8x512xf32> -> vector<8x512xf32>
    %149 = arith.addf %146, %148 : vector<8x512xf32>
    %150 = vector.extract_strided_slice %149 {offsets = [0, 0], sizes = [8, 384], strides = [1, 1]} : vector<8x512xf32> to vector<8x384xf32>
    %151 = arith.negf %150 : vector<8x384xf32>
    %152 = math.exp %151 : vector<8x384xf32>
    %cst_35 = arith.constant 1.000000e+00 : f32
    %153 = vector.broadcast %cst_35 : f32 to vector<8x384xf32>
    %154 = arith.addf %153, %152 : vector<8x384xf32>
    %155 = arith.divf %153, %154 : vector<8x384xf32>
    %156 = vector.extract_strided_slice %155 {offsets = [0, 0], sizes = [8, 128], strides = [1, 1]} : vector<8x384xf32> to vector<8x128xf32>
    %157 = vector.extract_strided_slice %155 {offsets = [0, 128], sizes = [8, 128], strides = [1, 1]} : vector<8x384xf32> to vector<8x128xf32>
    %158 = vector.extract_strided_slice %155 {offsets = [0, 256], sizes = [8, 128], strides = [1, 1]} : vector<8x384xf32> to vector<8x128xf32>
    %159 = vector.extract_strided_slice %149 {offsets = [0, 384], sizes = [8, 128], strides = [1, 1]} : vector<8x512xf32> to vector<8x128xf32>
    %160 = math.tanh %159 : vector<8x128xf32>
    %161 = arith.mulf %157, %142 : vector<8x128xf32>
    %162 = arith.mulf %156, %160 : vector<8x128xf32>
    %163 = arith.addf %161, %162 : vector<8x128xf32>
    %164 = math.tanh %163 : vector<8x128xf32>
    %165 = arith.mulf %158, %164 : vector<8x128xf32>
    %166 = arith.addi %12, %c4_i32 : i32
    %167 = vector.broadcast %166 : i32 to vector<8x1xi32>
    %168 = arith.cmpi slt, %167, %10 : vector<8x1xi32>
    %169 = vector.shape_cast %168 : vector<8x1xi1> to vector<8x1xi1>
    %170 = vector.broadcast %169 : vector<8x1xi1> to vector<8x128xi1>
    %171 = arith.select %170, %165, %139 : vector<8x128xi1>, vector<8x128xf32>
    %172 = vector.shape_cast %168 : vector<8x1xi1> to vector<8x1xi1>
    %173 = vector.broadcast %172 : vector<8x1xi1> to vector<8x128xi1>
    %174 = arith.select %173, %163, %142 : vector<8x128xi1>, vector<8x128xf32>
    %c5_i32 = arith.constant 5 : i32
    %c8_i32_36 = arith.constant 8 : i32
    %175 = arith.muli %c5_i32, %c8_i32_36 : i32
    %176 = tpu.assume_multiple %175, 8 : i32
    %177 = arith.index_cast %176 : i32 to index
    %c0_37 = arith.constant 0 : index
    %178 = vector.load %arg9[%177, %c0_37] : memref<128x512xf32, #tpu.memory_space<vmem>>, vector<8x512xf32>
    %179 = arith.truncf %171 : vector<8x128xf32> to vector<8x128xbf16>
    %cst_38 = arith.constant dense<0.000000e+00> : vector<8x512xf32>
    %180 = tpu.matmul %179, %11, %cst_38 {dimension_numbers = #tpu.dot_dimension_numbers<[1], [0], [0], [1], [0, 0, 1, 1], [], []>} : vector<8x128xbf16>, vector<128x512xbf16>, vector<8x512xf32> -> vector<8x512xf32>
    %181 = arith.addf %178, %180 : vector<8x512xf32>
    %182 = vector.extract_strided_slice %181 {offsets = [0, 0], sizes = [8, 384], strides = [1, 1]} : vector<8x512xf32> to vector<8x384xf32>
    %183 = arith.negf %182 : vector<8x384xf32>
    %184 = math.exp %183 : vector<8x384xf32>
    %cst_39 = arith.constant 1.000000e+00 : f32
    %185 = vector.broadcast %cst_39 : f32 to vector<8x384xf32>
    %186 = arith.addf %185, %184 : vector<8x384xf32>
    %187 = arith.divf %185, %186 : vector<8x384xf32>
    %188 = vector.extract_strided_slice %187 {offsets = [0, 0], sizes = [8, 128], strides = [1, 1]} : vector<8x384xf32> to vector<8x128xf32>
    %189 = vector.extract_strided_slice %187 {offsets = [0, 128], sizes = [8, 128], strides = [1, 1]} : vector<8x384xf32> to vector<8x128xf32>
    %190 = vector.extract_strided_slice %187 {offsets = [0, 256], sizes = [8, 128], strides = [1, 1]} : vector<8x384xf32> to vector<8x128xf32>
    %191 = vector.extract_strided_slice %181 {offsets = [0, 384], sizes = [8, 128], strides = [1, 1]} : vector<8x512xf32> to vector<8x128xf32>
    %192 = math.tanh %191 : vector<8x128xf32>
    %193 = arith.mulf %189, %174 : vector<8x128xf32>
    %194 = arith.mulf %188, %192 : vector<8x128xf32>
    %195 = arith.addf %193, %194 : vector<8x128xf32>
    %196 = math.tanh %195 : vector<8x128xf32>
    %197 = arith.mulf %190, %196 : vector<8x128xf32>
    %198 = arith.addi %12, %c5_i32 : i32
    %199 = vector.broadcast %198 : i32 to vector<8x1xi32>
    %200 = arith.cmpi slt, %199, %10 : vector<8x1xi32>
    %201 = vector.shape_cast %200 : vector<8x1xi1> to vector<8x1xi1>
    %202 = vector.broadcast %201 : vector<8x1xi1> to vector<8x128xi1>
    %203 = arith.select %202, %197, %171 : vector<8x128xi1>, vector<8x128xf32>
    %204 = vector.shape_cast %200 : vector<8x1xi1> to vector<8x1xi1>
    %205 = vector.broadcast %204 : vector<8x1xi1> to vector<8x128xi1>
    %206 = arith.select %205, %195, %174 : vector<8x128xi1>, vector<8x128xf32>
    %c6_i32 = arith.constant 6 : i32
    %c8_i32_40 = arith.constant 8 : i32
    %207 = arith.muli %c6_i32, %c8_i32_40 : i32
    %208 = tpu.assume_multiple %207, 8 : i32
    %209 = arith.index_cast %208 : i32 to index
    %c0_41 = arith.constant 0 : index
    %210 = vector.load %arg9[%209, %c0_41] : memref<128x512xf32, #tpu.memory_space<vmem>>, vector<8x512xf32>
    %211 = arith.truncf %203 : vector<8x128xf32> to vector<8x128xbf16>
    %cst_42 = arith.constant dense<0.000000e+00> : vector<8x512xf32>
    %212 = tpu.matmul %211, %11, %cst_42 {dimension_numbers = #tpu.dot_dimension_numbers<[1], [0], [0], [1], [0, 0, 1, 1], [], []>} : vector<8x128xbf16>, vector<128x512xbf16>, vector<8x512xf32> -> vector<8x512xf32>
    %213 = arith.addf %210, %212 : vector<8x512xf32>
    %214 = vector.extract_strided_slice %213 {offsets = [0, 0], sizes = [8, 384], strides = [1, 1]} : vector<8x512xf32> to vector<8x384xf32>
    %215 = arith.negf %214 : vector<8x384xf32>
    %216 = math.exp %215 : vector<8x384xf32>
    %cst_43 = arith.constant 1.000000e+00 : f32
    %217 = vector.broadcast %cst_43 : f32 to vector<8x384xf32>
    %218 = arith.addf %217, %216 : vector<8x384xf32>
    %219 = arith.divf %217, %218 : vector<8x384xf32>
    %220 = vector.extract_strided_slice %219 {offsets = [0, 0], sizes = [8, 128], strides = [1, 1]} : vector<8x384xf32> to vector<8x128xf32>
    %221 = vector.extract_strided_slice %219 {offsets = [0, 128], sizes = [8, 128], strides = [1, 1]} : vector<8x384xf32> to vector<8x128xf32>
    %222 = vector.extract_strided_slice %219 {offsets = [0, 256], sizes = [8, 128], strides = [1, 1]} : vector<8x384xf32> to vector<8x128xf32>
    %223 = vector.extract_strided_slice %213 {offsets = [0, 384], sizes = [8, 128], strides = [1, 1]} : vector<8x512xf32> to vector<8x128xf32>
    %224 = math.tanh %223 : vector<8x128xf32>
    %225 = arith.mulf %221, %206 : vector<8x128xf32>
    %226 = arith.mulf %220, %224 : vector<8x128xf32>
    %227 = arith.addf %225, %226 : vector<8x128xf32>
    %228 = math.tanh %227 : vector<8x128xf32>
    %229 = arith.mulf %222, %228 : vector<8x128xf32>
    %230 = arith.addi %12, %c6_i32 : i32
    %231 = vector.broadcast %230 : i32 to vector<8x1xi32>
    %232 = arith.cmpi slt, %231, %10 : vector<8x1xi32>
    %233 = vector.shape_cast %232 : vector<8x1xi1> to vector<8x1xi1>
    %234 = vector.broadcast %233 : vector<8x1xi1> to vector<8x128xi1>
    %235 = arith.select %234, %229, %203 : vector<8x128xi1>, vector<8x128xf32>
    %236 = vector.shape_cast %232 : vector<8x1xi1> to vector<8x1xi1>
    %237 = vector.broadcast %236 : vector<8x1xi1> to vector<8x128xi1>
    %238 = arith.select %237, %227, %206 : vector<8x128xi1>, vector<8x128xf32>
    %c7_i32 = arith.constant 7 : i32
    %c8_i32_44 = arith.constant 8 : i32
    %239 = arith.muli %c7_i32, %c8_i32_44 : i32
    %240 = tpu.assume_multiple %239, 8 : i32
    %241 = arith.index_cast %240 : i32 to index
    %c0_45 = arith.constant 0 : index
    %242 = vector.load %arg9[%241, %c0_45] : memref<128x512xf32, #tpu.memory_space<vmem>>, vector<8x512xf32>
    %243 = arith.truncf %235 : vector<8x128xf32> to vector<8x128xbf16>
    %cst_46 = arith.constant dense<0.000000e+00> : vector<8x512xf32>
    %244 = tpu.matmul %243, %11, %cst_46 {dimension_numbers = #tpu.dot_dimension_numbers<[1], [0], [0], [1], [0, 0, 1, 1], [], []>} : vector<8x128xbf16>, vector<128x512xbf16>, vector<8x512xf32> -> vector<8x512xf32>
    %245 = arith.addf %242, %244 : vector<8x512xf32>
    %246 = vector.extract_strided_slice %245 {offsets = [0, 0], sizes = [8, 384], strides = [1, 1]} : vector<8x512xf32> to vector<8x384xf32>
    %247 = arith.negf %246 : vector<8x384xf32>
    %248 = math.exp %247 : vector<8x384xf32>
    %cst_47 = arith.constant 1.000000e+00 : f32
    %249 = vector.broadcast %cst_47 : f32 to vector<8x384xf32>
    %250 = arith.addf %249, %248 : vector<8x384xf32>
    %251 = arith.divf %249, %250 : vector<8x384xf32>
    %252 = vector.extract_strided_slice %251 {offsets = [0, 0], sizes = [8, 128], strides = [1, 1]} : vector<8x384xf32> to vector<8x128xf32>
    %253 = vector.extract_strided_slice %251 {offsets = [0, 128], sizes = [8, 128], strides = [1, 1]} : vector<8x384xf32> to vector<8x128xf32>
    %254 = vector.extract_strided_slice %251 {offsets = [0, 256], sizes = [8, 128], strides = [1, 1]} : vector<8x384xf32> to vector<8x128xf32>
    %255 = vector.extract_strided_slice %245 {offsets = [0, 384], sizes = [8, 128], strides = [1, 1]} : vector<8x512xf32> to vector<8x128xf32>
    %256 = math.tanh %255 : vector<8x128xf32>
    %257 = arith.mulf %253, %238 : vector<8x128xf32>
    %258 = arith.mulf %252, %256 : vector<8x128xf32>
    %259 = arith.addf %257, %258 : vector<8x128xf32>
    %260 = math.tanh %259 : vector<8x128xf32>
    %261 = arith.mulf %254, %260 : vector<8x128xf32>
    %262 = arith.addi %12, %c7_i32 : i32
    %263 = vector.broadcast %262 : i32 to vector<8x1xi32>
    %264 = arith.cmpi slt, %263, %10 : vector<8x1xi32>
    %265 = vector.shape_cast %264 : vector<8x1xi1> to vector<8x1xi1>
    %266 = vector.broadcast %265 : vector<8x1xi1> to vector<8x128xi1>
    %267 = arith.select %266, %261, %235 : vector<8x128xi1>, vector<8x128xf32>
    %268 = vector.shape_cast %264 : vector<8x1xi1> to vector<8x1xi1>
    %269 = vector.broadcast %268 : vector<8x1xi1> to vector<8x128xi1>
    %270 = arith.select %269, %259, %238 : vector<8x128xi1>, vector<8x128xf32>
    %c8_i32_48 = arith.constant 8 : i32
    %c8_i32_49 = arith.constant 8 : i32
    %271 = arith.muli %c8_i32_48, %c8_i32_49 : i32
    %272 = tpu.assume_multiple %271, 8 : i32
    %273 = arith.index_cast %272 : i32 to index
    %c0_50 = arith.constant 0 : index
    %274 = vector.load %arg9[%273, %c0_50] : memref<128x512xf32, #tpu.memory_space<vmem>>, vector<8x512xf32>
    %275 = arith.truncf %267 : vector<8x128xf32> to vector<8x128xbf16>
    %cst_51 = arith.constant dense<0.000000e+00> : vector<8x512xf32>
    %276 = tpu.matmul %275, %11, %cst_51 {dimension_numbers = #tpu.dot_dimension_numbers<[1], [0], [0], [1], [0, 0, 1, 1], [], []>} : vector<8x128xbf16>, vector<128x512xbf16>, vector<8x512xf32> -> vector<8x512xf32>
    %277 = arith.addf %274, %276 : vector<8x512xf32>
    %278 = vector.extract_strided_slice %277 {offsets = [0, 0], sizes = [8, 384], strides = [1, 1]} : vector<8x512xf32> to vector<8x384xf32>
    %279 = arith.negf %278 : vector<8x384xf32>
    %280 = math.exp %279 : vector<8x384xf32>
    %cst_52 = arith.constant 1.000000e+00 : f32
    %281 = vector.broadcast %cst_52 : f32 to vector<8x384xf32>
    %282 = arith.addf %281, %280 : vector<8x384xf32>
    %283 = arith.divf %281, %282 : vector<8x384xf32>
    %284 = vector.extract_strided_slice %283 {offsets = [0, 0], sizes = [8, 128], strides = [1, 1]} : vector<8x384xf32> to vector<8x128xf32>
    %285 = vector.extract_strided_slice %283 {offsets = [0, 128], sizes = [8, 128], strides = [1, 1]} : vector<8x384xf32> to vector<8x128xf32>
    %286 = vector.extract_strided_slice %283 {offsets = [0, 256], sizes = [8, 128], strides = [1, 1]} : vector<8x384xf32> to vector<8x128xf32>
    %287 = vector.extract_strided_slice %277 {offsets = [0, 384], sizes = [8, 128], strides = [1, 1]} : vector<8x512xf32> to vector<8x128xf32>
    %288 = math.tanh %287 : vector<8x128xf32>
    %289 = arith.mulf %285, %270 : vector<8x128xf32>
    %290 = arith.mulf %284, %288 : vector<8x128xf32>
    %291 = arith.addf %289, %290 : vector<8x128xf32>
    %292 = math.tanh %291 : vector<8x128xf32>
    %293 = arith.mulf %286, %292 : vector<8x128xf32>
    %294 = arith.addi %12, %c8_i32_48 : i32
    %295 = vector.broadcast %294 : i32 to vector<8x1xi32>
    %296 = arith.cmpi slt, %295, %10 : vector<8x1xi32>
    %297 = vector.shape_cast %296 : vector<8x1xi1> to vector<8x1xi1>
    %298 = vector.broadcast %297 : vector<8x1xi1> to vector<8x128xi1>
    %299 = arith.select %298, %293, %267 : vector<8x128xi1>, vector<8x128xf32>
    %300 = vector.shape_cast %296 : vector<8x1xi1> to vector<8x1xi1>
    %301 = vector.broadcast %300 : vector<8x1xi1> to vector<8x128xi1>
    %302 = arith.select %301, %291, %270 : vector<8x128xi1>, vector<8x128xf32>
    %c9_i32 = arith.constant 9 : i32
    %c8_i32_53 = arith.constant 8 : i32
    %303 = arith.muli %c9_i32, %c8_i32_53 : i32
    %304 = tpu.assume_multiple %303, 8 : i32
    %305 = arith.index_cast %304 : i32 to index
    %c0_54 = arith.constant 0 : index
    %306 = vector.load %arg9[%305, %c0_54] : memref<128x512xf32, #tpu.memory_space<vmem>>, vector<8x512xf32>
    %307 = arith.truncf %299 : vector<8x128xf32> to vector<8x128xbf16>
    %cst_55 = arith.constant dense<0.000000e+00> : vector<8x512xf32>
    %308 = tpu.matmul %307, %11, %cst_55 {dimension_numbers = #tpu.dot_dimension_numbers<[1], [0], [0], [1], [0, 0, 1, 1], [], []>} : vector<8x128xbf16>, vector<128x512xbf16>, vector<8x512xf32> -> vector<8x512xf32>
    %309 = arith.addf %306, %308 : vector<8x512xf32>
    %310 = vector.extract_strided_slice %309 {offsets = [0, 0], sizes = [8, 384], strides = [1, 1]} : vector<8x512xf32> to vector<8x384xf32>
    %311 = arith.negf %310 : vector<8x384xf32>
    %312 = math.exp %311 : vector<8x384xf32>
    %cst_56 = arith.constant 1.000000e+00 : f32
    %313 = vector.broadcast %cst_56 : f32 to vector<8x384xf32>
    %314 = arith.addf %313, %312 : vector<8x384xf32>
    %315 = arith.divf %313, %314 : vector<8x384xf32>
    %316 = vector.extract_strided_slice %315 {offsets = [0, 0], sizes = [8, 128], strides = [1, 1]} : vector<8x384xf32> to vector<8x128xf32>
    %317 = vector.extract_strided_slice %315 {offsets = [0, 128], sizes = [8, 128], strides = [1, 1]} : vector<8x384xf32> to vector<8x128xf32>
    %318 = vector.extract_strided_slice %315 {offsets = [0, 256], sizes = [8, 128], strides = [1, 1]} : vector<8x384xf32> to vector<8x128xf32>
    %319 = vector.extract_strided_slice %309 {offsets = [0, 384], sizes = [8, 128], strides = [1, 1]} : vector<8x512xf32> to vector<8x128xf32>
    %320 = math.tanh %319 : vector<8x128xf32>
    %321 = arith.mulf %317, %302 : vector<8x128xf32>
    %322 = arith.mulf %316, %320 : vector<8x128xf32>
    %323 = arith.addf %321, %322 : vector<8x128xf32>
    %324 = math.tanh %323 : vector<8x128xf32>
    %325 = arith.mulf %318, %324 : vector<8x128xf32>
    %326 = arith.addi %12, %c9_i32 : i32
    %327 = vector.broadcast %326 : i32 to vector<8x1xi32>
    %328 = arith.cmpi slt, %327, %10 : vector<8x1xi32>
    %329 = vector.shape_cast %328 : vector<8x1xi1> to vector<8x1xi1>
    %330 = vector.broadcast %329 : vector<8x1xi1> to vector<8x128xi1>
    %331 = arith.select %330, %325, %299 : vector<8x128xi1>, vector<8x128xf32>
    %332 = vector.shape_cast %328 : vector<8x1xi1> to vector<8x1xi1>
    %333 = vector.broadcast %332 : vector<8x1xi1> to vector<8x128xi1>
    %334 = arith.select %333, %323, %302 : vector<8x128xi1>, vector<8x128xf32>
    %c10_i32 = arith.constant 10 : i32
    %c8_i32_57 = arith.constant 8 : i32
    %335 = arith.muli %c10_i32, %c8_i32_57 : i32
    %336 = tpu.assume_multiple %335, 8 : i32
    %337 = arith.index_cast %336 : i32 to index
    %c0_58 = arith.constant 0 : index
    %338 = vector.load %arg9[%337, %c0_58] : memref<128x512xf32, #tpu.memory_space<vmem>>, vector<8x512xf32>
    %339 = arith.truncf %331 : vector<8x128xf32> to vector<8x128xbf16>
    %cst_59 = arith.constant dense<0.000000e+00> : vector<8x512xf32>
    %340 = tpu.matmul %339, %11, %cst_59 {dimension_numbers = #tpu.dot_dimension_numbers<[1], [0], [0], [1], [0, 0, 1, 1], [], []>} : vector<8x128xbf16>, vector<128x512xbf16>, vector<8x512xf32> -> vector<8x512xf32>
    %341 = arith.addf %338, %340 : vector<8x512xf32>
    %342 = vector.extract_strided_slice %341 {offsets = [0, 0], sizes = [8, 384], strides = [1, 1]} : vector<8x512xf32> to vector<8x384xf32>
    %343 = arith.negf %342 : vector<8x384xf32>
    %344 = math.exp %343 : vector<8x384xf32>
    %cst_60 = arith.constant 1.000000e+00 : f32
    %345 = vector.broadcast %cst_60 : f32 to vector<8x384xf32>
    %346 = arith.addf %345, %344 : vector<8x384xf32>
    %347 = arith.divf %345, %346 : vector<8x384xf32>
    %348 = vector.extract_strided_slice %347 {offsets = [0, 0], sizes = [8, 128], strides = [1, 1]} : vector<8x384xf32> to vector<8x128xf32>
    %349 = vector.extract_strided_slice %347 {offsets = [0, 128], sizes = [8, 128], strides = [1, 1]} : vector<8x384xf32> to vector<8x128xf32>
    %350 = vector.extract_strided_slice %347 {offsets = [0, 256], sizes = [8, 128], strides = [1, 1]} : vector<8x384xf32> to vector<8x128xf32>
    %351 = vector.extract_strided_slice %341 {offsets = [0, 384], sizes = [8, 128], strides = [1, 1]} : vector<8x512xf32> to vector<8x128xf32>
    %352 = math.tanh %351 : vector<8x128xf32>
    %353 = arith.mulf %349, %334 : vector<8x128xf32>
    %354 = arith.mulf %348, %352 : vector<8x128xf32>
    %355 = arith.addf %353, %354 : vector<8x128xf32>
    %356 = math.tanh %355 : vector<8x128xf32>
    %357 = arith.mulf %350, %356 : vector<8x128xf32>
    %358 = arith.addi %12, %c10_i32 : i32
    %359 = vector.broadcast %358 : i32 to vector<8x1xi32>
    %360 = arith.cmpi slt, %359, %10 : vector<8x1xi32>
    %361 = vector.shape_cast %360 : vector<8x1xi1> to vector<8x1xi1>
    %362 = vector.broadcast %361 : vector<8x1xi1> to vector<8x128xi1>
    %363 = arith.select %362, %357, %331 : vector<8x128xi1>, vector<8x128xf32>
    %364 = vector.shape_cast %360 : vector<8x1xi1> to vector<8x1xi1>
    %365 = vector.broadcast %364 : vector<8x1xi1> to vector<8x128xi1>
    %366 = arith.select %365, %355, %334 : vector<8x128xi1>, vector<8x128xf32>
    %c11_i32 = arith.constant 11 : i32
    %c8_i32_61 = arith.constant 8 : i32
    %367 = arith.muli %c11_i32, %c8_i32_61 : i32
    %368 = tpu.assume_multiple %367, 8 : i32
    %369 = arith.index_cast %368 : i32 to index
    %c0_62 = arith.constant 0 : index
    %370 = vector.load %arg9[%369, %c0_62] : memref<128x512xf32, #tpu.memory_space<vmem>>, vector<8x512xf32>
    %371 = arith.truncf %363 : vector<8x128xf32> to vector<8x128xbf16>
    %cst_63 = arith.constant dense<0.000000e+00> : vector<8x512xf32>
    %372 = tpu.matmul %371, %11, %cst_63 {dimension_numbers = #tpu.dot_dimension_numbers<[1], [0], [0], [1], [0, 0, 1, 1], [], []>} : vector<8x128xbf16>, vector<128x512xbf16>, vector<8x512xf32> -> vector<8x512xf32>
    %373 = arith.addf %370, %372 : vector<8x512xf32>
    %374 = vector.extract_strided_slice %373 {offsets = [0, 0], sizes = [8, 384], strides = [1, 1]} : vector<8x512xf32> to vector<8x384xf32>
    %375 = arith.negf %374 : vector<8x384xf32>
    %376 = math.exp %375 : vector<8x384xf32>
    %cst_64 = arith.constant 1.000000e+00 : f32
    %377 = vector.broadcast %cst_64 : f32 to vector<8x384xf32>
    %378 = arith.addf %377, %376 : vector<8x384xf32>
    %379 = arith.divf %377, %378 : vector<8x384xf32>
    %380 = vector.extract_strided_slice %379 {offsets = [0, 0], sizes = [8, 128], strides = [1, 1]} : vector<8x384xf32> to vector<8x128xf32>
    %381 = vector.extract_strided_slice %379 {offsets = [0, 128], sizes = [8, 128], strides = [1, 1]} : vector<8x384xf32> to vector<8x128xf32>
    %382 = vector.extract_strided_slice %379 {offsets = [0, 256], sizes = [8, 128], strides = [1, 1]} : vector<8x384xf32> to vector<8x128xf32>
    %383 = vector.extract_strided_slice %373 {offsets = [0, 384], sizes = [8, 128], strides = [1, 1]} : vector<8x512xf32> to vector<8x128xf32>
    %384 = math.tanh %383 : vector<8x128xf32>
    %385 = arith.mulf %381, %366 : vector<8x128xf32>
    %386 = arith.mulf %380, %384 : vector<8x128xf32>
    %387 = arith.addf %385, %386 : vector<8x128xf32>
    %388 = math.tanh %387 : vector<8x128xf32>
    %389 = arith.mulf %382, %388 : vector<8x128xf32>
    %390 = arith.addi %12, %c11_i32 : i32
    %391 = vector.broadcast %390 : i32 to vector<8x1xi32>
    %392 = arith.cmpi slt, %391, %10 : vector<8x1xi32>
    %393 = vector.shape_cast %392 : vector<8x1xi1> to vector<8x1xi1>
    %394 = vector.broadcast %393 : vector<8x1xi1> to vector<8x128xi1>
    %395 = arith.select %394, %389, %363 : vector<8x128xi1>, vector<8x128xf32>
    %396 = vector.shape_cast %392 : vector<8x1xi1> to vector<8x1xi1>
    %397 = vector.broadcast %396 : vector<8x1xi1> to vector<8x128xi1>
    %398 = arith.select %397, %387, %366 : vector<8x128xi1>, vector<8x128xf32>
    %c12_i32 = arith.constant 12 : i32
    %c8_i32_65 = arith.constant 8 : i32
    %399 = arith.muli %c12_i32, %c8_i32_65 : i32
    %400 = tpu.assume_multiple %399, 8 : i32
    %401 = arith.index_cast %400 : i32 to index
    %c0_66 = arith.constant 0 : index
    %402 = vector.load %arg9[%401, %c0_66] : memref<128x512xf32, #tpu.memory_space<vmem>>, vector<8x512xf32>
    %403 = arith.truncf %395 : vector<8x128xf32> to vector<8x128xbf16>
    %cst_67 = arith.constant dense<0.000000e+00> : vector<8x512xf32>
    %404 = tpu.matmul %403, %11, %cst_67 {dimension_numbers = #tpu.dot_dimension_numbers<[1], [0], [0], [1], [0, 0, 1, 1], [], []>} : vector<8x128xbf16>, vector<128x512xbf16>, vector<8x512xf32> -> vector<8x512xf32>
    %405 = arith.addf %402, %404 : vector<8x512xf32>
    %406 = vector.extract_strided_slice %405 {offsets = [0, 0], sizes = [8, 384], strides = [1, 1]} : vector<8x512xf32> to vector<8x384xf32>
    %407 = arith.negf %406 : vector<8x384xf32>
    %408 = math.exp %407 : vector<8x384xf32>
    %cst_68 = arith.constant 1.000000e+00 : f32
    %409 = vector.broadcast %cst_68 : f32 to vector<8x384xf32>
    %410 = arith.addf %409, %408 : vector<8x384xf32>
    %411 = arith.divf %409, %410 : vector<8x384xf32>
    %412 = vector.extract_strided_slice %411 {offsets = [0, 0], sizes = [8, 128], strides = [1, 1]} : vector<8x384xf32> to vector<8x128xf32>
    %413 = vector.extract_strided_slice %411 {offsets = [0, 128], sizes = [8, 128], strides = [1, 1]} : vector<8x384xf32> to vector<8x128xf32>
    %414 = vector.extract_strided_slice %411 {offsets = [0, 256], sizes = [8, 128], strides = [1, 1]} : vector<8x384xf32> to vector<8x128xf32>
    %415 = vector.extract_strided_slice %405 {offsets = [0, 384], sizes = [8, 128], strides = [1, 1]} : vector<8x512xf32> to vector<8x128xf32>
    %416 = math.tanh %415 : vector<8x128xf32>
    %417 = arith.mulf %413, %398 : vector<8x128xf32>
    %418 = arith.mulf %412, %416 : vector<8x128xf32>
    %419 = arith.addf %417, %418 : vector<8x128xf32>
    %420 = math.tanh %419 : vector<8x128xf32>
    %421 = arith.mulf %414, %420 : vector<8x128xf32>
    %422 = arith.addi %12, %c12_i32 : i32
    %423 = vector.broadcast %422 : i32 to vector<8x1xi32>
    %424 = arith.cmpi slt, %423, %10 : vector<8x1xi32>
    %425 = vector.shape_cast %424 : vector<8x1xi1> to vector<8x1xi1>
    %426 = vector.broadcast %425 : vector<8x1xi1> to vector<8x128xi1>
    %427 = arith.select %426, %421, %395 : vector<8x128xi1>, vector<8x128xf32>
    %428 = vector.shape_cast %424 : vector<8x1xi1> to vector<8x1xi1>
    %429 = vector.broadcast %428 : vector<8x1xi1> to vector<8x128xi1>
    %430 = arith.select %429, %419, %398 : vector<8x128xi1>, vector<8x128xf32>
    %c13_i32 = arith.constant 13 : i32
    %c8_i32_69 = arith.constant 8 : i32
    %431 = arith.muli %c13_i32, %c8_i32_69 : i32
    %432 = tpu.assume_multiple %431, 8 : i32
    %433 = arith.index_cast %432 : i32 to index
    %c0_70 = arith.constant 0 : index
    %434 = vector.load %arg9[%433, %c0_70] : memref<128x512xf32, #tpu.memory_space<vmem>>, vector<8x512xf32>
    %435 = arith.truncf %427 : vector<8x128xf32> to vector<8x128xbf16>
    %cst_71 = arith.constant dense<0.000000e+00> : vector<8x512xf32>
    %436 = tpu.matmul %435, %11, %cst_71 {dimension_numbers = #tpu.dot_dimension_numbers<[1], [0], [0], [1], [0, 0, 1, 1], [], []>} : vector<8x128xbf16>, vector<128x512xbf16>, vector<8x512xf32> -> vector<8x512xf32>
    %437 = arith.addf %434, %436 : vector<8x512xf32>
    %438 = vector.extract_strided_slice %437 {offsets = [0, 0], sizes = [8, 384], strides = [1, 1]} : vector<8x512xf32> to vector<8x384xf32>
    %439 = arith.negf %438 : vector<8x384xf32>
    %440 = math.exp %439 : vector<8x384xf32>
    %cst_72 = arith.constant 1.000000e+00 : f32
    %441 = vector.broadcast %cst_72 : f32 to vector<8x384xf32>
    %442 = arith.addf %441, %440 : vector<8x384xf32>
    %443 = arith.divf %441, %442 : vector<8x384xf32>
    %444 = vector.extract_strided_slice %443 {offsets = [0, 0], sizes = [8, 128], strides = [1, 1]} : vector<8x384xf32> to vector<8x128xf32>
    %445 = vector.extract_strided_slice %443 {offsets = [0, 128], sizes = [8, 128], strides = [1, 1]} : vector<8x384xf32> to vector<8x128xf32>
    %446 = vector.extract_strided_slice %443 {offsets = [0, 256], sizes = [8, 128], strides = [1, 1]} : vector<8x384xf32> to vector<8x128xf32>
    %447 = vector.extract_strided_slice %437 {offsets = [0, 384], sizes = [8, 128], strides = [1, 1]} : vector<8x512xf32> to vector<8x128xf32>
    %448 = math.tanh %447 : vector<8x128xf32>
    %449 = arith.mulf %445, %430 : vector<8x128xf32>
    %450 = arith.mulf %444, %448 : vector<8x128xf32>
    %451 = arith.addf %449, %450 : vector<8x128xf32>
    %452 = math.tanh %451 : vector<8x128xf32>
    %453 = arith.mulf %446, %452 : vector<8x128xf32>
    %454 = arith.addi %12, %c13_i32 : i32
    %455 = vector.broadcast %454 : i32 to vector<8x1xi32>
    %456 = arith.cmpi slt, %455, %10 : vector<8x1xi32>
    %457 = vector.shape_cast %456 : vector<8x1xi1> to vector<8x1xi1>
    %458 = vector.broadcast %457 : vector<8x1xi1> to vector<8x128xi1>
    %459 = arith.select %458, %453, %427 : vector<8x128xi1>, vector<8x128xf32>
    %460 = vector.shape_cast %456 : vector<8x1xi1> to vector<8x1xi1>
    %461 = vector.broadcast %460 : vector<8x1xi1> to vector<8x128xi1>
    %462 = arith.select %461, %451, %430 : vector<8x128xi1>, vector<8x128xf32>
    %c14_i32 = arith.constant 14 : i32
    %c8_i32_73 = arith.constant 8 : i32
    %463 = arith.muli %c14_i32, %c8_i32_73 : i32
    %464 = tpu.assume_multiple %463, 8 : i32
    %465 = arith.index_cast %464 : i32 to index
    %c0_74 = arith.constant 0 : index
    %466 = vector.load %arg9[%465, %c0_74] : memref<128x512xf32, #tpu.memory_space<vmem>>, vector<8x512xf32>
    %467 = arith.truncf %459 : vector<8x128xf32> to vector<8x128xbf16>
    %cst_75 = arith.constant dense<0.000000e+00> : vector<8x512xf32>
    %468 = tpu.matmul %467, %11, %cst_75 {dimension_numbers = #tpu.dot_dimension_numbers<[1], [0], [0], [1], [0, 0, 1, 1], [], []>} : vector<8x128xbf16>, vector<128x512xbf16>, vector<8x512xf32> -> vector<8x512xf32>
    %469 = arith.addf %466, %468 : vector<8x512xf32>
    %470 = vector.extract_strided_slice %469 {offsets = [0, 0], sizes = [8, 384], strides = [1, 1]} : vector<8x512xf32> to vector<8x384xf32>
    %471 = arith.negf %470 : vector<8x384xf32>
    %472 = math.exp %471 : vector<8x384xf32>
    %cst_76 = arith.constant 1.000000e+00 : f32
    %473 = vector.broadcast %cst_76 : f32 to vector<8x384xf32>
    %474 = arith.addf %473, %472 : vector<8x384xf32>
    %475 = arith.divf %473, %474 : vector<8x384xf32>
    %476 = vector.extract_strided_slice %475 {offsets = [0, 0], sizes = [8, 128], strides = [1, 1]} : vector<8x384xf32> to vector<8x128xf32>
    %477 = vector.extract_strided_slice %475 {offsets = [0, 128], sizes = [8, 128], strides = [1, 1]} : vector<8x384xf32> to vector<8x128xf32>
    %478 = vector.extract_strided_slice %475 {offsets = [0, 256], sizes = [8, 128], strides = [1, 1]} : vector<8x384xf32> to vector<8x128xf32>
    %479 = vector.extract_strided_slice %469 {offsets = [0, 384], sizes = [8, 128], strides = [1, 1]} : vector<8x512xf32> to vector<8x128xf32>
    %480 = math.tanh %479 : vector<8x128xf32>
    %481 = arith.mulf %477, %462 : vector<8x128xf32>
    %482 = arith.mulf %476, %480 : vector<8x128xf32>
    %483 = arith.addf %481, %482 : vector<8x128xf32>
    %484 = math.tanh %483 : vector<8x128xf32>
    %485 = arith.mulf %478, %484 : vector<8x128xf32>
    %486 = arith.addi %12, %c14_i32 : i32
    %487 = vector.broadcast %486 : i32 to vector<8x1xi32>
    %488 = arith.cmpi slt, %487, %10 : vector<8x1xi32>
    %489 = vector.shape_cast %488 : vector<8x1xi1> to vector<8x1xi1>
    %490 = vector.broadcast %489 : vector<8x1xi1> to vector<8x128xi1>
    %491 = arith.select %490, %485, %459 : vector<8x128xi1>, vector<8x128xf32>
    %492 = vector.shape_cast %488 : vector<8x1xi1> to vector<8x1xi1>
    %493 = vector.broadcast %492 : vector<8x1xi1> to vector<8x128xi1>
    %494 = arith.select %493, %483, %462 : vector<8x128xi1>, vector<8x128xf32>
    %c15_i32 = arith.constant 15 : i32
    %c8_i32_77 = arith.constant 8 : i32
    %495 = arith.muli %c15_i32, %c8_i32_77 : i32
    %496 = tpu.assume_multiple %495, 8 : i32
    %497 = arith.index_cast %496 : i32 to index
    %c0_78 = arith.constant 0 : index
    %498 = vector.load %arg9[%497, %c0_78] : memref<128x512xf32, #tpu.memory_space<vmem>>, vector<8x512xf32>
    %499 = arith.truncf %491 : vector<8x128xf32> to vector<8x128xbf16>
    %cst_79 = arith.constant dense<0.000000e+00> : vector<8x512xf32>
    %500 = tpu.matmul %499, %11, %cst_79 {dimension_numbers = #tpu.dot_dimension_numbers<[1], [0], [0], [1], [0, 0, 1, 1], [], []>} : vector<8x128xbf16>, vector<128x512xbf16>, vector<8x512xf32> -> vector<8x512xf32>
    %501 = arith.addf %498, %500 : vector<8x512xf32>
    %502 = vector.extract_strided_slice %501 {offsets = [0, 0], sizes = [8, 384], strides = [1, 1]} : vector<8x512xf32> to vector<8x384xf32>
    %503 = arith.negf %502 : vector<8x384xf32>
    %504 = math.exp %503 : vector<8x384xf32>
    %cst_80 = arith.constant 1.000000e+00 : f32
    %505 = vector.broadcast %cst_80 : f32 to vector<8x384xf32>
    %506 = arith.addf %505, %504 : vector<8x384xf32>
    %507 = arith.divf %505, %506 : vector<8x384xf32>
    %508 = vector.extract_strided_slice %507 {offsets = [0, 0], sizes = [8, 128], strides = [1, 1]} : vector<8x384xf32> to vector<8x128xf32>
    %509 = vector.extract_strided_slice %507 {offsets = [0, 128], sizes = [8, 128], strides = [1, 1]} : vector<8x384xf32> to vector<8x128xf32>
    %510 = vector.extract_strided_slice %507 {offsets = [0, 256], sizes = [8, 128], strides = [1, 1]} : vector<8x384xf32> to vector<8x128xf32>
    %511 = vector.extract_strided_slice %501 {offsets = [0, 384], sizes = [8, 128], strides = [1, 1]} : vector<8x512xf32> to vector<8x128xf32>
    %512 = math.tanh %511 : vector<8x128xf32>
    %513 = arith.mulf %509, %494 : vector<8x128xf32>
    %514 = arith.mulf %508, %512 : vector<8x128xf32>
    %515 = arith.addf %513, %514 : vector<8x128xf32>
    %516 = math.tanh %515 : vector<8x128xf32>
    %517 = arith.mulf %510, %516 : vector<8x128xf32>
    %518 = arith.addi %12, %c15_i32 : i32
    %519 = vector.broadcast %518 : i32 to vector<8x1xi32>
    %520 = arith.cmpi slt, %519, %10 : vector<8x1xi32>
    %521 = vector.shape_cast %520 : vector<8x1xi1> to vector<8x1xi1>
    %522 = vector.broadcast %521 : vector<8x1xi1> to vector<8x128xi1>
    %523 = arith.select %522, %517, %491 : vector<8x128xi1>, vector<8x128xf32>
    %524 = vector.shape_cast %520 : vector<8x1xi1> to vector<8x1xi1>
    %525 = vector.broadcast %524 : vector<8x1xi1> to vector<8x128xi1>
    %526 = arith.select %525, %515, %494 : vector<8x128xi1>, vector<8x128xf32>
    %c16_i32_81 = arith.constant 16 : i32
    %c0_82 = arith.constant 0 : index
    %c0_83 = arith.constant 0 : index
    %527 = vector.load %arg10[%c0_82, %c0_83] : memref<8x128xf32, #tpu.memory_space<vmem>>, vector<8x128xf32>
    tpu.vector_store %arg10[%c0_82, %c0_83], %523 {strides = array<i32>} : memref<8x128xf32, #tpu.memory_space<vmem>>, vector<8x128xf32>,
    %c0_84 = arith.constant 0 : index
    %c0_85 = arith.constant 0 : index
    %528 = vector.load %arg11[%c0_84, %c0_85] : memref<8x128xf32, #tpu.memory_space<vmem>>, vector<8x128xf32>
    tpu.vector_store %arg11[%c0_84, %c0_85], %526 {strides = array<i32>} : memref<8x128xf32, #tpu.memory_space<vmem>>, vector<8x128xf32>,
    %c0_i32_86 = arith.constant 0 : i32
    %529 = arith.cmpi eq, %arg0, %c0_i32_86 : i32
    %530 = arith.extui %529 : i1 to i32
    %c0_i32_87 = arith.constant 0 : i32
    %531 = arith.cmpi ne, %530, %c0_i32_87 : i32
    scf.if %531 {
      %532 = arith.truncf %523 : vector<8x128xf32> to vector<8x128xbf16>
      %c0_88 = arith.constant 0 : index
      %c0_89 = arith.constant 0 : index
      %533 = vector.load %arg6[%c0_88, %c0_89] : memref<128x128xbf16, #tpu.memory_space<vmem>>, vector<128x128xbf16>
      %cst_90 = arith.constant dense<0.000000e+00> : vector<8x128xf32>
      %534 = tpu.matmul %532, %533, %cst_90 {dimension_numbers = #tpu.dot_dimension_numbers<[1], [0], [0], [1], [0, 0, 1, 1], [], []>} : vector<8x128xbf16>, vector<128x128xbf16>, vector<8x128xf32> -> vector<8x128xf32>
      %c0_91 = arith.constant 0 : index
      %c0_92 = arith.constant 0 : index
      %535 = vector.load %arg7[%c0_91, %c0_92] : memref<1x128xf32, #tpu.memory_space<vmem>>, vector<1x128xf32>
      %536 = vector.broadcast %535 : vector<1x128xf32> to vector<8x128xf32>
      %537 = arith.addf %534, %536 : vector<8x128xf32>
      %538 = arith.negf %537 : vector<8x128xf32>
      %539 = math.exp %538 : vector<8x128xf32>
      %cst_93 = arith.constant 1.000000e+00 : f32
      %540 = vector.broadcast %cst_93 : f32 to vector<8x128xf32>
      %541 = arith.addf %540, %539 : vector<8x128xf32>
      %542 = arith.divf %540, %541 : vector<8x128xf32>
      %c0_94 = arith.constant 0 : index
      %c0_95 = arith.constant 0 : index
      %543 = vector.load %arg8[%c0_94, %c0_95] : memref<8x128xf32, #tpu.memory_space<vmem>>, vector<8x128xf32>
      tpu.vector_store %arg8[%c0_94, %c0_95], %542 {strides = array<i32>} : memref<8x128xf32, #tpu.memory_space<vmem>>, vector<8x128xf32>,
    } else {
    }
    return
  }
  func.func @transform_0(%arg0: i32) -> (i32, i32) {
    %c0_i32 = arith.constant 0 : i32
    %c0_i32_0 = arith.constant 0 : i32
    %c0_i32_1 = arith.constant 0 : i32
    return %c0_i32, %c0_i32_0 : i32, i32
  }
  func.func @transform_1(%arg0: i32) -> (i32, i32) {
    %c0_i32 = arith.constant 0 : i32
    %c0_i32_0 = arith.constant 0 : i32
    return %arg0, %c0_i32 : i32, i32
  }
  func.func @transform_2(%arg0: i32) -> (i32, i32) {
    %c0_i32 = arith.constant 0 : i32
    %c0_i32_0 = arith.constant 0 : i32
    %c0_i32_1 = arith.constant 0 : i32
    return %c0_i32, %c0_i32_0 : i32, i32
  }
  func.func @transform_3(%arg0: i32) -> (i32, i32) {
    %c0_i32 = arith.constant 0 : i32
    %c0_i32_0 = arith.constant 0 : i32
    %c0_i32_1 = arith.constant 0 : i32
    return %c0_i32, %c0_i32_0 : i32, i32
  }
  func.func @transform_4(%arg0: i32) -> (i32, i32) {
    %c0_i32 = arith.constant 0 : i32
    %c0_i32_0 = arith.constant 0 : i32
    %c0_i32_1 = arith.constant 0 : i32
    return %c0_i32, %c0_i32_0 : i32, i32
  }
  func.func @transform_5(%arg0: i32) -> (i32, i32) {
    %c0_i32 = arith.constant 0 : i32
    %c0_i32_0 = arith.constant 0 : i32
    %c0_i32_1 = arith.constant 0 : i32
    return %c0_i32, %c0_i32_0 : i32, i32
  }
  func.func @transform_6(%arg0: i32) -> (i32, i32) {
    %c0_i32 = arith.constant 0 : i32
    %c0_i32_0 = arith.constant 0 : i32
    %c0_i32_1 = arith.constant 0 : i32
    return %c0_i32, %c0_i32_0 : i32, i32
  }
  func.func @transform_7(%arg0: i32) -> (i32, i32) {
    %c0_i32 = arith.constant 0 : i32
    %c0_i32_0 = arith.constant 0 : i32
    %c0_i32_1 = arith.constant 0 : i32
    return %c0_i32, %c0_i32_0 : i32, i32
  }
}

</mosaic_0001>

<llo_original>
// kernel: rnn_classifier_forward.1
$region0: #{rnn_classifier_forward.1}
  #allocation0 [shape = 'u32[]', space=smem, size = 0x4, offset = 0x4, fixed_abs, tag = 'smem constant byte address 0x4 - core index']
  #allocation1 [shape = 'u32[144,128]{1,0:T(1,128)}', space=vmem, size = 0x12000, scoped, tag = 'internal scratch']
  #allocation2 [shape = 'f32[128,512]{1,0:T(8,128)}', space=vmem, size = 0x40000, scoped, tag = 'scratch operand']
  #allocation3 [shape = 'f32[8,128]{1,0:T(8,128)}', space=vmem, size = 0x1000, scoped, tag = 'scratch operand']
  #allocation4 [shape = 'f32[8,128]{1,0:T(8,128)}', space=vmem, size = 0x1000, scoped, tag = 'scratch operand']
  %s0 = inlined_call_operand.vmem [shape: s32[8,1], index: 0, kind: input, shape index: {}]
  %s1 = inlined_call_operand.vmem [shape: bf16[128,16], index: 1, kind: input, shape index: {}]
  %s2 = inlined_call_operand.vmem [shape: bf16[16,512], index: 2, kind: input, shape index: {}]
  %s3 = inlined_call_operand.vmem [shape: bf16[128,512], index: 3, kind: input, shape index: {}]
  %s4 = inlined_call_operand.vmem [shape: f32[1,512], index: 4, kind: input, shape index: {}]
  %s5 = inlined_call_operand.vmem [shape: bf16[128,128], index: 5, kind: input, shape index: {}]
  %s6 = inlined_call_operand.vmem [shape: f32[1,128], index: 6, kind: input, shape index: {}]
  %s7 = inlined_call_operand.vmem [shape: f32[8,128], index: 7, kind: output, shape index: {}]
  %s8 = sld [smem:[#allocation0]]
  $region46: #{rnn_classifier_forward.1} parent=0
    _
  %s10 = ssub.s32 1, %s8
  %s11 = scalar_select 0, %s10, %s8
  // Predicated region
  $region2: #{rnn_classifier_forward.1} parent=0 // pred_check
    _
  $region3: #{rnn_classifier_forward.1} parent=0 // pred_check_branch
    %13 = sbr.rel (0) target = $region5
  $region4: #{rnn_classifier_forward.1} parent=0 // pred_region
    _
  $region5: #{rnn_classifier_forward.1} parent=0 // pred_fallthru
    _
  // Predicated region
  $region6: #{rnn_classifier_forward.1} parent=0 // pred_check
    _
  $region7: #{rnn_classifier_forward.1} parent=0 // pred_check_branch
    %15 = sbr.rel (0) target = $region9
  $region8: #{rnn_classifier_forward.1} parent=0 // pred_region
    _
  $region9: #{rnn_classifier_forward.1} parent=0 // pred_fallthru
    _
  // Predicated region
  $region10: #{rnn_classifier_forward.1} parent=0 // pred_check
    _
  $region11: #{rnn_classifier_forward.1} parent=0 // pred_check_branch
    %17 = sbr.rel (0) target = $region13
  $region12: #{rnn_classifier_forward.1} parent=0 // pred_region
    _
  $region13: #{rnn_classifier_forward.1} parent=0 // pred_fallthru
    _
  // Predicated region
  $region14: #{rnn_classifier_forward.1} parent=0 // pred_check
    _
  $region15: #{rnn_classifier_forward.1} parent=0 // pred_check_branch
    %19 = sbr.rel (0) target = $region17
  $region16: #{rnn_classifier_forward.1} parent=0 // pred_region
    _
  $region17: #{rnn_classifier_forward.1} parent=0 // pred_fallthru
    _
  // Predicated region
  $region18: #{rnn_classifier_forward.1} parent=0 // pred_check
    _
  $region19: #{rnn_classifier_forward.1} parent=0 // pred_check_branch
    %21 = sbr.rel (0) target = $region21
  $region20: #{rnn_classifier_forward.1} parent=0 // pred_region
    _
  $region21: #{rnn_classifier_forward.1} parent=0 // pred_fallthru
    _
  // Predicated region
  $region22: #{rnn_classifier_forward.1} parent=0 // pred_check
    _
  $region23: #{rnn_classifier_forward.1} parent=0 // pred_check_branch
    %23 = sbr.rel (0) target = $region25
  $region24: #{rnn_classifier_forward.1} parent=0 // pred_region
    _
  $region25: #{rnn_classifier_forward.1} parent=0 // pred_fallthru
    _
  // Predicated region
  $region26: #{rnn_classifier_forward.1} parent=0 // pred_check
    _
  $region27: #{rnn_classifier_forward.1} parent=0 // pred_check_branch
    %25 = sbr.rel (0) target = $region29
  $region28: #{rnn_classifier_forward.1} parent=0 // pred_region
    _
  $region29: #{rnn_classifier_forward.1} parent=0 // pred_fallthru
    _
  %p27 = scmp.eq.s32.totalorder 0, 0
  // Predicated region
  $region30: #{rnn_classifier_forward.1} parent=0 // pred_check
    %p28 = pneg %p27
  $region31: #{rnn_classifier_forward.1} parent=0 // pred_check_branch
    %30 = sbr.rel (%p28) target = $region33
  $region32: #{rnn_classifier_forward.1} parent=0 // pred_region
    %31 = vst [vmem:[#allocation3] sm:$0xff] 0.0
    %32 = vst [vmem:[#allocation4] sm:$0xff] 0.0
  $region33: #{rnn_classifier_forward.1} parent=0 // pred_fallthru
    _
  %v33 = vld [vmem:[%s1] sm:$0xf]
  %v34 = vld [vmem:[%s1 + $0x4] sm:$0xf]
  %v35 = vld [vmem:[%s1 + $0x8] sm:$0xf]
  %v36 = vld [vmem:[%s1 + $0xc] sm:$0xf]
  %v37 = vld [vmem:[%s1 + $0x10] sm:$0xf]
  %v38 = vld [vmem:[%s1 + $0x14] sm:$0xf]
  %v39 = vld [vmem:[%s1 + $0x18] sm:$0xf]
  %v40 = vld [vmem:[%s1 + $0x1c] sm:$0xf]
  %v41 = vld [vmem:[%s1 + $0x20] sm:$0xf]
  %v42 = vld [vmem:[%s1 + $0x24] sm:$0xf]
  %v43 = vld [vmem:[%s1 + $0x28] sm:$0xf]
  %v44 = vld [vmem:[%s1 + $0x2c] sm:$0xf]
  %v45 = vld [vmem:[%s1 + $0x30] sm:$0xf]
  %v46 = vld [vmem:[%s1 + $0x34] sm:$0xf]
  %v47 = vld [vmem:[%s1 + $0x38] sm:$0xf]
  %v48 = vld [vmem:[%s1 + $0x3c] sm:$0xf]
  %v49 = vld [vmem:[%s2] sm:$0xff]
  %v50 = vld [vmem:[%s2 + $0x8] sm:$0xff]
  %v51 = vld [vmem:[%s2 + $0x10] sm:$0xff]
  %v52 = vld [vmem:[%s2 + $0x18] sm:$0xff]
  %v53 = vld [vmem:[%s4] sm:$0xf]
  %v55 = vlaneseq
  %v56 = vshrl.u32 %v55, 7
  %v57 = vsub.s32 0, %v56
  %v58 = vrot.slane %v53, %v57
  %v59 = vlaneseq
  %v60 = vshrl.u32 %v59, 7
  %v61 = vsub.s32 1, %v60
  %v62 = vrot.slane %v53, %v61
  %v63 = vlaneseq
  %v64 = vshrl.u32 %v63, 7
  %v65 = vsub.s32 2, %v64
  %v66 = vrot.slane %v53, %v65
  %v67 = vlaneseq
  %v68 = vshrl.u32 %v67, 7
  %v69 = vsub.s32 3, %v68
  %v70 = vrot.slane %v53, %v69
  %v91 = vunpack.c.l.b16 %v33
  %v92 = vunpack.c.l.b16 %v34
  %v93 = vunpack.c.l.b16 %v35
  %v94 = vunpack.c.l.b16 %v36
  %v95 = vunpack.c.l.b16 %v37
  %v96 = vunpack.c.l.b16 %v38
  %v97 = vunpack.c.l.b16 %v39
  %v98 = vunpack.c.l.b16 %v40
  %v99 = vunpack.c.l.b16 %v41
  %v100 = vunpack.c.l.b16 %v42
  %v101 = vunpack.c.l.b16 %v43
  %v102 = vunpack.c.l.b16 %v44
  %v103 = vunpack.c.l.b16 %v45
  %v104 = vunpack.c.l.b16 %v46
  %v105 = vunpack.c.l.b16 %v47
  %v106 = vunpack.c.l.b16 %v48
  %v107 = vpack.c.b16 %v92, %v91
  %v108 = vpack.c.b16 %v94, %v93
  %v109 = vpack.c.b16 %v96, %v95
  %v110 = vpack.c.b16 %v98, %v97
  %v111 = vpack.c.b16 %v100, %v99
  %v112 = vpack.c.b16 %v102, %v101
  %v113 = vpack.c.b16 %v104, %v103
  %v114 = vpack.c.b16 %v106, %v105
  %v119 = vunpack.c.l.b16 %v49
  %v120 = vunpack.c.h.b16 %v49
  %v121 = vunpack.c.l.b16 %v50
  %v122 = vunpack.c.h.b16 %v50
  %v123 = vunpack.c.l.b16 %v51
  %v124 = vunpack.c.h.b16 %v51
  %v125 = vunpack.c.l.b16 %v52
  %v126 = vunpack.c.h.b16 %v52
  %v127 = vpack.c.b16 %v123, %v119
  %v128 = vpack.c.b16 %v124, %v120
  %v129 = vpack.c.b16 %v125, %v121
  %v130 = vpack.c.b16 %v126, %v122
  %vm135 = vcmask 130048
  %v137 = vsel %vm135, %v107, 0
  %v140 = vsel %vm135, %v108, 0
  %v143 = vsel %vm135, %v109, 0
  %v146 = vsel %vm135, %v110, 0
  %v149 = vsel %vm135, %v111, 0
  %v152 = vsel %vm135, %v112, 0
  %v155 = vsel %vm135, %v113, 0
  %v158 = vsel %vm135, %v114, 0
  %160 = vmatprep.subr.bf16.mxu0 0
  %161 = vmatpush1.bf16.msra.mxu0 0
  %162 = vmatprep.subr.bf16.mxu0 0
  %163 = vmatpush1.bf16.msra.mxu0 0
  %164 = vmatprep.subr.bf16.mxu0 0
  %165 = vmatpush1.bf16.msra.mxu0 0
  %166 = vmatprep.subr.bf16.mxu0 0
  %167 = vmatpush1.bf16.msra.mxu0 0
  %168 = vmatprep.subr.bf16.mxu0 0
  %169 = vmatpush1.bf16.msra.mxu0 0
  %170 = vmatprep.subr.bf16.mxu0 0
  %171 = vmatpush1.bf16.msra.mxu0 0
  %172 = vmatprep.subr.bf16.mxu0 0
  %173 = vmatpush1.bf16.msra.mxu0 0
  %174 = vmatprep.subr.bf16.mxu0 %v128
  %175 = vmatpush1.bf16.msra.mxu0 %v127
  %176 = vmatprep.subr.bf16.mxu0 0
  %177 = vmatpush2.bf16.msra.mxu0 0
  %178 = vmatprep.subr.bf16.mxu0 0
  %179 = vmatpush2.bf16.msra.mxu0 0
  %180 = vmatprep.subr.bf16.mxu0 0
  %181 = vmatpush2.bf16.msra.mxu0 0
  %182 = vmatprep.subr.bf16.mxu0 0
  %183 = vmatpush2.bf16.msra.mxu0 0
  %184 = vmatprep.subr.bf16.mxu0 0
  %185 = vmatpush2.bf16.msra.mxu0 0
  %186 = vmatprep.subr.bf16.mxu0 0
  %187 = vmatpush2.bf16.msra.mxu0 0
  %188 = vmatprep.subr.bf16.mxu0 0
  %189 = vmatpush2.bf16.msra.mxu0 0
  %190 = vmatprep.subr.bf16.mxu0 0
  %191 = vmatpush2.bf16.msra.mxu0 0
  %192 = vmatprep.mubr.bf16.mxu0 0
  %193 = vmatmul.mubr.bf16.gmra.mxu0 %v137
  %v194 = vpop.f32.mrf.mxu0
  %v195 = vadd.f32 %v58, %v194
  %v196 = vpop.f32.mrf.mxu0
  %v197 = vadd.f32 %v62, %v196
  %v198 = vpop.f32.mrf.mxu0
  %v199 = vadd.f32 %v58, %v198
  %v200 = vpop.f32.mrf.mxu0
  %v201 = vadd.f32 %v62, %v200
  %202 = vmatprep.mubr.bf16.mxu0 0
  %203 = vmatmul.mubr.bf16.gmra.mxu0 %v140
  %v204 = vpop.f32.mrf.mxu0
  %v205 = vadd.f32 %v58, %v204
  %v206 = vpop.f32.mrf.mxu0
  %v207 = vadd.f32 %v62, %v206
  %v208 = vpop.f32.mrf.mxu0
  %v209 = vadd.f32 %v58, %v208
  %v210 = vpop.f32.mrf.mxu0
  %v211 = vadd.f32 %v62, %v210
  %212 = vmatprep.mubr.bf16.mxu0 0
  %213 = vmatmul.mubr.bf16.gmra.mxu0 %v143
  %v214 = vpop.f32.mrf.mxu0
  %v215 = vadd.f32 %v58, %v214
  %v216 = vpop.f32.mrf.mxu0
  %v217 = vadd.f32 %v62, %v216
  %v218 = vpop.f32.mrf.mxu0
  %v219 = vadd.f32 %v58, %v218
  %v220 = vpop.f32.mrf.mxu0
  %v221 = vadd.f32 %v62, %v220
  %222 = vmatprep.mubr.bf16.mxu0 0
  %223 = vmatmul.mubr.bf16.gmra.mxu0 %v146
  %v224 = vpop.f32.mrf.mxu0
  %v225 = vadd.f32 %v58, %v224
  %v226 = vpop.f32.mrf.mxu0
  %v227 = vadd.f32 %v62, %v226
  %v228 = vpop.f32.mrf.mxu0
  %v229 = vadd.f32 %v58, %v228
  %v230 = vpop.f32.mrf.mxu0
  %v231 = vadd.f32 %v62, %v230
  %232 = vmatprep.mubr.bf16.mxu0 0
  %233 = vmatmul.mubr.bf16.gmra.mxu0 %v149
  %v234 = vpop.f32.mrf.mxu0
  %v235 = vadd.f32 %v58, %v234
  %v236 = vpop.f32.mrf.mxu0
  %v237 = vadd.f32 %v62, %v236
  %v238 = vpop.f32.mrf.mxu0
  %v239 = vadd.f32 %v58, %v238
  %v240 = vpop.f32.mrf.mxu0
  %v241 = vadd.f32 %v62, %v240
  %242 = vmatprep.mubr.bf16.mxu0 0
  %243 = vmatmul.mubr.bf16.gmra.mxu0 %v152
  %v244 = vpop.f32.mrf.mxu0
  %v245 = vadd.f32 %v58, %v244
  %v246 = vpop.f32.mrf.mxu0
  %v247 = vadd.f32 %v62, %v246
  %v248 = vpop.f32.mrf.mxu0
  %v249 = vadd.f32 %v58, %v248
  %v250 = vpop.f32.mrf.mxu0
  %v251 = vadd.f32 %v62, %v250
  %252 = vmatprep.mubr.bf16.mxu0 0
  %253 = vmatmul.mubr.bf16.gmra.mxu0 %v155
  %v254 = vpop.f32.mrf.mxu0
  %v255 = vadd.f32 %v58, %v254
  %v256 = vpop.f32.mrf.mxu0
  %v257 = vadd.f32 %v62, %v256
  %v258 = vpop.f32.mrf.mxu0
  %v259 = vadd.f32 %v58, %v258
  %v260 = vpop.f32.mrf.mxu0
  %v261 = vadd.f32 %v62, %v260
  %262 = vmatprep.mubr.bf16.mxu0 0
  %263 = vmatmul.mubr.bf16.gmra.mxu0 %v158
  %v264 = vpop.f32.mrf.mxu0
  %v265 = vadd.f32 %v58, %v264
  %v266 = vpop.f32.mrf.mxu0
  %v267 = vadd.f32 %v62, %v266
  %v268 = vpop.f32.mrf.mxu0
  %v269 = vadd.f32 %v58, %v268
  %v270 = vpop.f32.mrf.mxu0
  %v271 = vadd.f32 %v62, %v270
  %272 = vdwg.mxu0
  %273 = vmatprep.subr.bf16.mxu0 0
  %274 = vmatpush1.bf16.msra.mxu0 0
  %275 = vmatprep.subr.bf16.mxu0 0
  %276 = vmatpush1.bf16.msra.mxu0 0
  %277 = vmatprep.subr.bf16.mxu0 0
  %278 = vmatpush1.bf16.msra.mxu0 0
  %279 = vmatprep.subr.bf16.mxu0 0
  %280 = vmatpush1.bf16.msra.mxu0 0
  %281 = vmatprep.subr.bf16.mxu0 0
  %282 = vmatpush1.bf16.msra.mxu0 0
  %283 = vmatprep.subr.bf16.mxu0 0
  %284 = vmatpush1.bf16.msra.mxu0 0
  %285 = vmatprep.subr.bf16.mxu0 0
  %286 = vmatpush1.bf16.msra.mxu0 0
  %287 = vmatprep.subr.bf16.mxu0 %v130
  %288 = vmatpush1.bf16.msra.mxu0 %v129
  %289 = vmatprep.subr.bf16.mxu0 0
  %290 = vmatpush2.bf16.msra.mxu0 0
  %291 = vmatprep.subr.bf16.mxu0 0
  %292 = vmatpush2.bf16.msra.mxu0 0
  %293 = vmatprep.subr.bf16.mxu0 0
  %294 = vmatpush2.bf16.msra.mxu0 0
  %295 = vmatprep.subr.bf16.mxu0 0
  %296 = vmatpush2.bf16.msra.mxu0 0
  %297 = vmatprep.subr.bf16.mxu0 0
  %298 = vmatpush2.bf16.msra.mxu0 0
  %299 = vmatprep.subr.bf16.mxu0 0
  %300 = vmatpush2.bf16.msra.mxu0 0
  %301 = vmatprep.subr.bf16.mxu0 0
  %302 = vmatpush2.bf16.msra.mxu0 0
  %303 = vmatprep.subr.bf16.mxu0 0
  %304 = vmatpush2.bf16.msra.mxu0 0
  %305 = vmatprep.mubr.bf16.mxu0 0
  %306 = vmatmul.mubr.bf16.gmra.mxu0 %v137
  %v307 = vpop.f32.mrf.mxu0
  %v308 = vadd.f32 %v66, %v307
  %v309 = vpop.f32.mrf.mxu0
  %v310 = vadd.f32 %v70, %v309
  %v311 = vpop.f32.mrf.mxu0
  %v312 = vadd.f32 %v66, %v311
  %v313 = vpop.f32.mrf.mxu0
  %v314 = vadd.f32 %v70, %v313
  %315 = vmatprep.mubr.bf16.mxu0 0
  %316 = vmatmul.mubr.bf16.gmra.mxu0 %v140
  %v317 = vpop.f32.mrf.mxu0
  %v318 = vadd.f32 %v66, %v317
  %v319 = vpop.f32.mrf.mxu0
  %v320 = vadd.f32 %v70, %v319
  %v321 = vpop.f32.mrf.mxu0
  %v322 = vadd.f32 %v66, %v321
  %v323 = vpop.f32.mrf.mxu0
  %v324 = vadd.f32 %v70, %v323
  %325 = vmatprep.mubr.bf16.mxu0 0
  %326 = vmatmul.mubr.bf16.gmra.mxu0 %v143
  %v327 = vpop.f32.mrf.mxu0
  %v328 = vadd.f32 %v66, %v327
  %v329 = vpop.f32.mrf.mxu0
  %v330 = vadd.f32 %v70, %v329
  %v331 = vpop.f32.mrf.mxu0
  %v332 = vadd.f32 %v66, %v331
  %v333 = vpop.f32.mrf.mxu0
  %v334 = vadd.f32 %v70, %v333
  %335 = vmatprep.mubr.bf16.mxu0 0
  %336 = vmatmul.mubr.bf16.gmra.mxu0 %v146
  %v337 = vpop.f32.mrf.mxu0
  %v338 = vadd.f32 %v66, %v337
  %v339 = vpop.f32.mrf.mxu0
  %v340 = vadd.f32 %v70, %v339
  %v341 = vpop.f32.mrf.mxu0
  %v342 = vadd.f32 %v66, %v341
  %v343 = vpop.f32.mrf.mxu0
  %v344 = vadd.f32 %v70, %v343
  %345 = vmatprep.mubr.bf16.mxu0 0
  %346 = vmatmul.mubr.bf16.gmra.mxu0 %v149
  %v347 = vpop.f32.mrf.mxu0
  %v348 = vadd.f32 %v66, %v347
  %v349 = vpop.f32.mrf.mxu0
  %v350 = vadd.f32 %v70, %v349
  %v351 = vpop.f32.mrf.mxu0
  %v352 = vadd.f32 %v66, %v351
  %v353 = vpop.f32.mrf.mxu0
  %v354 = vadd.f32 %v70, %v353
  %355 = vmatprep.mubr.bf16.mxu0 0
  %356 = vmatmul.mubr.bf16.gmra.mxu0 %v152
  %v357 = vpop.f32.mrf.mxu0
  %v358 = vadd.f32 %v66, %v357
  %v359 = vpop.f32.mrf.mxu0
  %v360 = vadd.f32 %v70, %v359
  %v361 = vpop.f32.mrf.mxu0
  %v362 = vadd.f32 %v66, %v361
  %v363 = vpop.f32.mrf.mxu0
  %v364 = vadd.f32 %v70, %v363
  %365 = vmatprep.mubr.bf16.mxu0 0
  %366 = vmatmul.mubr.bf16.gmra.mxu0 %v155
  %v367 = vpop.f32.mrf.mxu0
  %v368 = vadd.f32 %v66, %v367
  %v369 = vpop.f32.mrf.mxu0
  %v370 = vadd.f32 %v70, %v369
  %v371 = vpop.f32.mrf.mxu0
  %v372 = vadd.f32 %v66, %v371
  %v373 = vpop.f32.mrf.mxu0
  %v374 = vadd.f32 %v70, %v373
  %375 = vmatprep.mubr.bf16.mxu0 0
  %376 = vmatmul.mubr.bf16.gmra.mxu0 %v158
  %v377 = vpop.f32.mrf.mxu0
  %v378 = vadd.f32 %v66, %v377
  %v379 = vpop.f32.mrf.mxu0
  %v380 = vadd.f32 %v70, %v379
  %v381 = vpop.f32.mrf.mxu0
  %v382 = vadd.f32 %v66, %v381
  %v383 = vpop.f32.mrf.mxu0
  %v384 = vadd.f32 %v70, %v383
  %385 = vdwg.mxu0
  %386 = vst [vmem:[#allocation2] sm:$0xff] %v195
  %387 = vst [vmem:[#allocation2 + $0x8] sm:$0xff] %v197
  %388 = vst [vmem:[#allocation2 + $0x10] sm:$0xff] %v308
  %389 = vst [vmem:[#allocation2 + $0x18] sm:$0xff] %v310
  %390 = vst [vmem:[#allocation2 + $0x20] sm:$0xff] %v199
  %391 = vst [vmem:[#allocation2 + $0x28] sm:$0xff] %v201
  %392 = vst [vmem:[#allocation2 + $0x30] sm:$0xff] %v312
  %393 = vst [vmem:[#allocation2 + $0x38] sm:$0xff] %v314
  %394 = vst [vmem:[#allocation2 + $0x40] sm:$0xff] %v205
  %395 = vst [vmem:[#allocation2 + $0x48] sm:$0xff] %v207
  %396 = vst [vmem:[#allocation2 + $0x50] sm:$0xff] %v318
  %397 = vst [vmem:[#allocation2 + $0x58] sm:$0xff] %v320
  %398 = vst [vmem:[#allocation2 + $0x60] sm:$0xff] %v209
  %399 = vst [vmem:[#allocation2 + $0x68] sm:$0xff] %v211
  %400 = vst [vmem:[#allocation2 + $0x70] sm:$0xff] %v322
  %401 = vst [vmem:[#allocation2 + $0x78] sm:$0xff] %v324
  %402 = vst [vmem:[#allocation2 + $0x80] sm:$0xff] %v215
  %403 = vst [vmem:[#allocation2 + $0x88] sm:$0xff] %v217
  %404 = vst [vmem:[#allocation2 + $0x90] sm:$0xff] %v328
  %405 = vst [vmem:[#allocation2 + $0x98] sm:$0xff] %v330
  %406 = vst [vmem:[#allocation2 + $0xa0] sm:$0xff] %v219
  %407 = vst [vmem:[#allocation2 + $0xa8] sm:$0xff] %v221
  %408 = vst [vmem:[#allocation2 + $0xb0] sm:$0xff] %v332
  %409 = vst [vmem:[#allocation2 + $0xb8] sm:$0xff] %v334
  %410 = vst [vmem:[#allocation2 + $0xc0] sm:$0xff] %v225
  %411 = vst [vmem:[#allocation2 + $0xc8] sm:$0xff] %v227
  %412 = vst [vmem:[#allocation2 + $0xd0] sm:$0xff] %v338
  %413 = vst [vmem:[#allocation2 + $0xd8] sm:$0xff] %v340
  %414 = vst [vmem:[#allocation2 + $0xe0] sm:$0xff] %v229
  %415 = vst [vmem:[#allocation2 + $0xe8] sm:$0xff] %v231
  %416 = vst [vmem:[#allocation2 + $0xf0] sm:$0xff] %v342
  %417 = vst [vmem:[#allocation2 + $0xf8] sm:$0xff] %v344
  %418 = vst [vmem:[#allocation2 + $0x100] sm:$0xff] %v235
  %419 = vst [vmem:[#allocation2 + $0x108] sm:$0xff] %v237
  %420 = vst [vmem:[#allocation2 + $0x110] sm:$0xff] %v348
  %421 = vst [vmem:[#allocation2 + $0x118] sm:$0xff] %v350
  %422 = vst [vmem:[#allocation2 + $0x120] sm:$0xff] %v239
  %423 = vst [vmem:[#allocation2 + $0x128] sm:$0xff] %v241
  %424 = vst [vmem:[#allocation2 + $0x130] sm:$0xff] %v352
  %425 = vst [vmem:[#allocation2 + $0x138] sm:$0xff] %v354
  %426 = vst [vmem:[#allocation2 + $0x140] sm:$0xff] %v245
  %427 = vst [vmem:[#allocation2 + $0x148] sm:$0xff] %v247
  %428 = vst [vmem:[#allocation2 + $0x150] sm:$0xff] %v358
  %429 = vst [vmem:[#allocation2 + $0x158] sm:$0xff] %v360
  %430 = vst [vmem:[#allocation2 + $0x160] sm:$0xff] %v249
  %431 = vst [vmem:[#allocation2 + $0x168] sm:$0xff] %v251
  %432 = vst [vmem:[#allocation2 + $0x170] sm:$0xff] %v362
  %433 = vst [vmem:[#allocation2 + $0x178] sm:$0xff] %v364
  %434 = vst [vmem:[#allocation2 + $0x180] sm:$0xff] %v255
  %435 = vst [vmem:[#allocation2 + $0x188] sm:$0xff] %v257
  %436 = vst [vmem:[#allocation2 + $0x190] sm:$0xff] %v368
  %437 = vst [vmem:[#allocation2 + $0x198] sm:$0xff] %v370
  %438 = vst [vmem:[#allocation2 + $0x1a0] sm:$0xff] %v259
  %439 = vst [vmem:[#allocation2 + $0x1a8] sm:$0xff] %v261
  %440 = vst [vmem:[#allocation2 + $0x1b0] sm:$0xff] %v372
  %441 = vst [vmem:[#allocation2 + $0x1b8] sm:$0xff] %v374
  %442 = vst [vmem:[#allocation2 + $0x1c0] sm:$0xff] %v265
  %443 = vst [vmem:[#allocation2 + $0x1c8] sm:$0xff] %v267
  %444 = vst [vmem:[#allocation2 + $0x1d0] sm:$0xff] %v378
  %445 = vst [vmem:[#allocation2 + $0x1d8] sm:$0xff] %v380
  %446 = vst [vmem:[#allocation2 + $0x1e0] sm:$0xff] %v269
  %447 = vst [vmem:[#allocation2 + $0x1e8] sm:$0xff] %v271
  %448 = vst [vmem:[#allocation2 + $0x1f0] sm:$0xff] %v382
  %449 = vst [vmem:[#allocation2 + $0x1f8] sm:$0xff] %v384
  %v450 = vld [vmem:[%s0] sm:$0xff]
  %v451 = vld [vmem:[%s3] sm:$0xff]
  %v452 = vld [vmem:[%s3 + $0x8] sm:$0xff]
  %v453 = vld [vmem:[%s3 + $0x10] sm:$0xff]
  %v454 = vld [vmem:[%s3 + $0x18] sm:$0xff]
  %v455 = vld [vmem:[%s3 + $0x20] sm:$0xff]
  %v456 = vld [vmem:[%s3 + $0x28] sm:$0xff]
  %v457 = vld [vmem:[%s3 + $0x30] sm:$0xff]
  %v458 = vld [vmem:[%s3 + $0x38] sm:$0xff]
  %v459 = vld [vmem:[%s3 + $0x40] sm:$0xff]
  %v460 = vld [vmem:[%s3 + $0x48] sm:$0xff]
  %v461 = vld [vmem:[%s3 + $0x50] sm:$0xff]
  %v462 = vld [vmem:[%s3 + $0x58] sm:$0xff]
  %v463 = vld [vmem:[%s3 + $0x60] sm:$0xff]
  %v464 = vld [vmem:[%s3 + $0x68] sm:$0xff]
  %v465 = vld [vmem:[%s3 + $0x70] sm:$0xff]
  %v466 = vld [vmem:[%s3 + $0x78] sm:$0xff]
  %v467 = vld [vmem:[%s3 + $0x80] sm:$0xff]
  %v468 = vld [vmem:[%s3 + $0x88] sm:$0xff]
  %v469 = vld [vmem:[%s3 + $0x90] sm:$0xff]
  %v470 = vld [vmem:[%s3 + $0x98] sm:$0xff]
  %v471 = vld [vmem:[%s3 + $0xa0] sm:$0xff]
  %v472 = vld [vmem:[%s3 + $0xa8] sm:$0xff]
  %v473 = vld [vmem:[%s3 + $0xb0] sm:$0xff]
  %v474 = vld [vmem:[%s3 + $0xb8] sm:$0xff]
  %v475 = vld [vmem:[%s3 + $0xc0] sm:$0xff]
  %v476 = vld [vmem:[%s3 + $0xc8] sm:$0xff]
  %v477 = vld [vmem:[%s3 + $0xd0] sm:$0xff]
  %v478 = vld [vmem:[%s3 + $0xd8] sm:$0xff]
  %v479 = vld [vmem:[%s3 + $0xe0] sm:$0xff]
  %v480 = vld [vmem:[%s3 + $0xe8] sm:$0xff]
  %v481 = vld [vmem:[%s3 + $0xf0] sm:$0xff]
  %v482 = vld [vmem:[%s3 + $0xf8] sm:$0xff]
  %s483 = smul.u32 0, 16
  %v484 = vld [vmem:[#allocation3] sm:$0xff]
  %v485 = vld [vmem:[#allocation4] sm:$0xff]
  %s486 = smul.u32 0, 4
  %s487 = smul.addr %s486, 8
  %s488 = scalar_lea.vmem [#allocation2], %s487
  %v489 = vld [vmem:[%s488] sm:$0xff]
  %v490 = vld [vmem:[%s488 + $0x8] sm:$0xff]
  %v491 = vld [vmem:[%s488 + $0x10] sm:$0xff]
  %v492 = vld [vmem:[%s488 + $0x18] sm:$0xff]
  %v493 = vpack.c.bf16 %v484, %v484
  %v526 = vunpack.c.l.b16 %v451
  %v527 = vunpack.c.h.b16 %v451
  %v528 = vunpack.c.l.b16 %v452
  %v529 = vunpack.c.h.b16 %v452
  %v530 = vunpack.c.l.b16 %v453
  %v531 = vunpack.c.h.b16 %v453
  %v532 = vunpack.c.l.b16 %v454
  %v533 = vunpack.c.h.b16 %v454
  %v534 = vunpack.c.l.b16 %v455
  %v535 = vunpack.c.h.b16 %v455
  %v536 = vunpack.c.l.b16 %v456
  %v537 = vunpack.c.h.b16 %v456
  %v538 = vunpack.c.l.b16 %v457
  %v539 = vunpack.c.h.b16 %v457
  %v540 = vunpack.c.l.b16 %v458
  %v541 = vunpack.c.h.b16 %v458
  %v542 = vunpack.c.l.b16 %v459
  %v543 = vunpack.c.h.b16 %v459
  %v544 = vunpack.c.l.b16 %v460
  %v545 = vunpack.c.h.b16 %v460
  %v546 = vunpack.c.l.b16 %v461
  %v547 = vunpack.c.h.b16 %v461
  %v548 = vunpack.c.l.b16 %v462
  %v549 = vunpack.c.h.b16 %v462
  %v550 = vunpack.c.l.b16 %v463
  %v551 = vunpack.c.h.b16 %v463
  %v552 = vunpack.c.l.b16 %v464
  %v553 = vunpack.c.h.b16 %v464
  %v554 = vunpack.c.l.b16 %v465
  %v555 = vunpack.c.h.b16 %v465
  %v556 = vunpack.c.l.b16 %v466
  %v557 = vunpack.c.h.b16 %v466
  %v558 = vunpack.c.l.b16 %v467
  %v559 = vunpack.c.h.b16 %v467
  %v560 = vunpack.c.l.b16 %v468
  %v561 = vunpack.c.h.b16 %v468
  %v562 = vunpack.c.l.b16 %v469
  %v563 = vunpack.c.h.b16 %v469
  %v564 = vunpack.c.l.b16 %v470
  %v565 = vunpack.c.h.b16 %v470
  %v566 = vunpack.c.l.b16 %v471
  %v567 = vunpack.c.h.b16 %v471
  %v568 = vunpack.c.l.b16 %v472
  %v569 = vunpack.c.h.b16 %v472
  %v570 = vunpack.c.l.b16 %v473
  %v571 = vunpack.c.h.b16 %v473
  %v572 = vunpack.c.l.b16 %v474
  %v573 = vunpack.c.h.b16 %v474
  %v574 = vunpack.c.l.b16 %v475
  %v575 = vunpack.c.h.b16 %v475
  %v576 = vunpack.c.l.b16 %v476
  %v577 = vunpack.c.h.b16 %v476
  %v578 = vunpack.c.l.b16 %v477
  %v579 = vunpack.c.h.b16 %v477
  %v580 = vunpack.c.l.b16 %v478
  %v581 = vunpack.c.h.b16 %v478
  %v582 = vunpack.c.l.b16 %v479
  %v583 = vunpack.c.h.b16 %v479
  %v584 = vunpack.c.l.b16 %v480
  %v585 = vunpack.c.h.b16 %v480
  %v586 = vunpack.c.l.b16 %v481
  %v587 = vunpack.c.h.b16 %v481
  %v588 = vunpack.c.l.b16 %v482
  %v589 = vunpack.c.h.b16 %v482
  %v590 = vpack.c.b16 %v530, %v526
  %v591 = vpack.c.b16 %v531, %v527
  %v592 = vpack.c.b16 %v532, %v528
  %v593 = vpack.c.b16 %v533, %v529
  %v594 = vpack.c.b16 %v538, %v534
  %v595 = vpack.c.b16 %v539, %v535
  %v596 = vpack.c.b16 %v540, %v536
  %v597 = vpack.c.b16 %v541, %v537
  %v598 = vpack.c.b16 %v546, %v542
  %v599 = vpack.c.b16 %v547, %v543
  %v600 = vpack.c.b16 %v548, %v544
  %v601 = vpack.c.b16 %v549, %v545
  %v602 = vpack.c.b16 %v554, %v550
  %v603 = vpack.c.b16 %v555, %v551
  %v604 = vpack.c.b16 %v556, %v552
  %v605 = vpack.c.b16 %v557, %v553
  %v606 = vpack.c.b16 %v562, %v558
  %v607 = vpack.c.b16 %v563, %v559
  %v608 = vpack.c.b16 %v564, %v560
  %v609 = vpack.c.b16 %v565, %v561
  %v610 = vpack.c.b16 %v570, %v566
  %v611 = vpack.c.b16 %v571, %v567
  %v612 = vpack.c.b16 %v572, %v568
  %v613 = vpack.c.b16 %v573, %v569
  %v614 = vpack.c.b16 %v578, %v574
  %v615 = vpack.c.b16 %v579, %v575
  %v616 = vpack.c.b16 %v580, %v576
  %v617 = vpack.c.b16 %v581, %v577
  %v618 = vpack.c.b16 %v586, %v582
  %v619 = vpack.c.b16 %v587, %v583
  %v620 = vpack.c.b16 %v588, %v584
  %v621 = vpack.c.b16 %v589, %v585
  %654 = vmatprep.subr.bf16.mxu0 %v619
  %655 = vmatpush1.bf16.msra.mxu0 %v618
  %656 = vmatprep.subr.bf16.mxu0 %v615
  %657 = vmatpush1.bf16.msra.mxu0 %v614
  %658 = vmatprep.subr.bf16.mxu0 %v611
  %659 = vmatpush1.bf16.msra.mxu0 %v610
  %660 = vmatprep.subr.bf16.mxu0 %v607
  %661 = vmatpush1.bf16.msra.mxu0 %v606
  %662 = vmatprep.subr.bf16.mxu0 %v603
  %663 = vmatpush1.bf16.msra.mxu0 %v602
  %664 = vmatprep.subr.bf16.mxu0 %v599
  %665 = vmatpush1.bf16.msra.mxu0 %v598
  %666 = vmatprep.subr.bf16.mxu0 %v595
  %667 = vmatpush1.bf16.msra.mxu0 %v594
  %668 = vmatprep.subr.bf16.mxu0 %v591
  %669 = vmatpush1.bf16.msra.mxu0 %v590
  %670 = vmatprep.subr.bf16.mxu0 0
  %671 = vmatpush2.bf16.msra.mxu0 0
  %672 = vmatprep.subr.bf16.mxu0 0
  %673 = vmatpush2.bf16.msra.mxu0 0
  %674 = vmatprep.subr.bf16.mxu0 0
  %675 = vmatpush2.bf16.msra.mxu0 0
  %676 = vmatprep.subr.bf16.mxu0 0
  %677 = vmatpush2.bf16.msra.mxu0 0
  %678 = vmatprep.subr.bf16.mxu0 0
  %679 = vmatpush2.bf16.msra.mxu0 0
  %680 = vmatprep.subr.bf16.mxu0 0
  %681 = vmatpush2.bf16.msra.mxu0 0
  %682 = vmatprep.subr.bf16.mxu0 0
  %683 = vmatpush2.bf16.msra.mxu0 0
  %684 = vmatprep.subr.bf16.mxu0 0
  %685 = vmatpush2.bf16.msra.mxu0 0
  %686 = vmatprep.mubr.bf16.mxu0 0
  %687 = vmatmul.mubr.bf16.gmra.mxu0 %v493
  %v688 = vpop.f32.mrf.mxu0
  %v689 = vadd.f32 0.0, %v688
  %v690 = vpop.f32.mrf.mxu0
  %v691 = vadd.f32 0.0, %v690
  %v692 = vpop.f32.mrf.mxu0
  %v693 = vpop.f32.mrf.mxu0
  %694 = vdwg.mxu0
  %695 = vmatprep.subr.bf16.mxu0 %v621
  %696 = vmatpush1.bf16.msra.mxu0 %v620
  %697 = vmatprep.subr.bf16.mxu0 %v617
  %698 = vmatpush1.bf16.msra.mxu0 %v616
  %699 = vmatprep.subr.bf16.mxu0 %v613
  %700 = vmatpush1.bf16.msra.mxu0 %v612
  %701 = vmatprep.subr.bf16.mxu0 %v609
  %702 = vmatpush1.bf16.msra.mxu0 %v608
  %703 = vmatprep.subr.bf16.mxu0 %v605
  %704 = vmatpush1.bf16.msra.mxu0 %v604
  %705 = vmatprep.subr.bf16.mxu0 %v601
  %706 = vmatpush1.bf16.msra.mxu0 %v600
  %707 = vmatprep.subr.bf16.mxu0 %v597
  %708 = vmatpush1.bf16.msra.mxu0 %v596
  %709 = vmatprep.subr.bf16.mxu0 %v593
  %710 = vmatpush1.bf16.msra.mxu0 %v592
  %711 = vmatprep.subr.bf16.mxu0 0
  %712 = vmatpush2.bf16.msra.mxu0 0
  %713 = vmatprep.subr.bf16.mxu0 0
  %714 = vmatpush2.bf16.msra.mxu0 0
  %715 = vmatprep.subr.bf16.mxu0 0
  %716 = vmatpush2.bf16.msra.mxu0 0
  %717 = vmatprep.subr.bf16.mxu0 0
  %718 = vmatpush2.bf16.msra.mxu0 0
  %719 = vmatprep.subr.bf16.mxu0 0
  %720 = vmatpush2.bf16.msra.mxu0 0
  %721 = vmatprep.subr.bf16.mxu0 0
  %722 = vmatpush2.bf16.msra.mxu0 0
  %723 = vmatprep.subr.bf16.mxu0 0
  %724 = vmatpush2.bf16.msra.mxu0 0
  %725 = vmatprep.subr.bf16.mxu0 0
  %726 = vmatpush2.bf16.msra.mxu0 0
  %727 = vmatprep.mubr.bf16.mxu0 0
  %728 = vmatmul.mubr.bf16.gmra.mxu0 %v493
  %v729 = vpop.f32.mrf.mxu0
  %v730 = vadd.f32 0.0, %v729
  %v731 = vpop.f32.mrf.mxu0
  %v732 = vadd.f32 0.0, %v731
  %v733 = vpop.f32.mrf.mxu0
  %v734 = vpop.f32.mrf.mxu0
  %735 = vdwg.mxu0
  %v736 = vadd.f32 %v489, %v689
  %v737 = vadd.f32 %v490, %v691
  %v738 = vadd.f32 %v491, %v730
  %v739 = vadd.f32 %v492, %v732
  %v740 = vxor.u32 %v736, 2147483648
  %v741 = vxor.u32 %v737, 2147483648
  %v742 = vxor.u32 %v738, 2147483648
  %v743 = vmul.f32 %v740, 1.442695
  %v744 = vpow.pop %v743
  %v745 = vmul.f32 %v741, 1.442695
  %v746 = vpow.pop %v745
  %v747 = vmul.f32 %v742, 1.442695
  %v748 = vpow.pop %v747
  %v749 = vadd.f32 %v744, 1.0
  %v750 = vadd.f32 %v746, 1.0
  %v751 = vadd.f32 %v748, 1.0
  %v752 = vrcp.pop %v749
  %v753 = vmul.f32 1.0, %v752
  %v754 = vrcp.pop %v750
  %v755 = vmul.f32 1.0, %v754
  %v756 = vrcp.pop %v751
  %v757 = vmul.f32 1.0, %v756
  %v758 = vtanh.pop %v739
  %v759 = vmul.f32 %v755, %v485
  %v760 = vmul.f32 %v753, %v758
  %v761 = vadd.f32 %v759, %v760
  %v762 = vtanh.pop %v761
  %v763 = vmul.f32 %v757, %v762
  %v764 = vstv %s483
  %vm765 = vcmp.lt.s32.totalorder %v764, %v450
  %v766 = vsel %vm765, 1, 0
  %767 = vset.pattern.permute.xlu0 0
  %768 = vperm.xlu0 %767, %v766
  %v769 = vpop.permute.xlu0 %768
  %vm770 = vcmp.eq.s32.totalorder %v769, 1
  %v771 = vsel %vm770, %v763, %v484
  %v772 = vsel %vm770, %v761, %v485
  %s773 = smul.u32 1, 4
  %s774 = smul.addr %s773, 8
  %s775 = scalar_lea.vmem [#allocation2], %s774
  %v776 = vld [vmem:[%s775] sm:$0xff]
  %v777 = vld [vmem:[%s775 + $0x8] sm:$0xff]
  %v778 = vld [vmem:[%s775 + $0x10] sm:$0xff]
  %v779 = vld [vmem:[%s775 + $0x18] sm:$0xff]
  %v780 = vpack.c.bf16 %v771, %v771
  %781 = vmatprep.subr.bf16.mxu0 %v619
  %782 = vmatpush1.bf16.msra.mxu0 %v618
  %783 = vmatprep.subr.bf16.mxu0 %v615
  %784 = vmatpush1.bf16.msra.mxu0 %v614
  %785 = vmatprep.subr.bf16.mxu0 %v611
  %786 = vmatpush1.bf16.msra.mxu0 %v610
  %787 = vmatprep.subr.bf16.mxu0 %v607
  %788 = vmatpush1.bf16.msra.mxu0 %v606
  %789 = vmatprep.subr.bf16.mxu0 %v603
  %790 = vmatpush1.bf16.msra.mxu0 %v602
  %791 = vmatprep.subr.bf16.mxu0 %v599
  %792 = vmatpush1.bf16.msra.mxu0 %v598
  %793 = vmatprep.subr.bf16.mxu0 %v595
  %794 = vmatpush1.bf16.msra.mxu0 %v594
  %795 = vmatprep.subr.bf16.mxu0 %v591
  %796 = vmatpush1.bf16.msra.mxu0 %v590
  %797 = vmatprep.subr.bf16.mxu0 0
  %798 = vmatpush2.bf16.msra.mxu0 0
  %799 = vmatprep.subr.bf16.mxu0 0
  %800 = vmatpush2.bf16.msra.mxu0 0
  %801 = vmatprep.subr.bf16.mxu0 0
  %802 = vmatpush2.bf16.msra.mxu0 0
  %803 = vmatprep.subr.bf16.mxu0 0
  %804 = vmatpush2.bf16.msra.mxu0 0
  %805 = vmatprep.subr.bf16.mxu0 0
  %806 = vmatpush2.bf16.msra.mxu0 0
  %807 = vmatprep.subr.bf16.mxu0 0
  %808 = vmatpush2.bf16.msra.mxu0 0
  %809 = vmatprep.subr.bf16.mxu0 0
  %810 = vmatpush2.bf16.msra.mxu0 0
  %811 = vmatprep.subr.bf16.mxu0 0
  %812 = vmatpush2.bf16.msra.mxu0 0
  %813 = vmatprep.mubr.bf16.mxu0 0
  %814 = vmatmul.mubr.bf16.gmra.mxu0 %v780
  %v815 = vpop.f32.mrf.mxu0
  %v816 = vadd.f32 0.0, %v815
  %v817 = vpop.f32.mrf.mxu0
  %v818 = vadd.f32 0.0, %v817
  %v819 = vpop.f32.mrf.mxu0
  %v820 = vpop.f32.mrf.mxu0
  %821 = vdwg.mxu0
  %822 = vmatprep.subr.bf16.mxu0 %v621
  %823 = vmatpush1.bf16.msra.mxu0 %v620
  %824 = vmatprep.subr.bf16.mxu0 %v617
  %825 = vmatpush1.bf16.msra.mxu0 %v616
  %826 = vmatprep.subr.bf16.mxu0 %v613
  %827 = vmatpush1.bf16.msra.mxu0 %v612
  %828 = vmatprep.subr.bf16.mxu0 %v609
  %829 = vmatpush1.bf16.msra.mxu0 %v608
  %830 = vmatprep.subr.bf16.mxu0 %v605
  %831 = vmatpush1.bf16.msra.mxu0 %v604
  %832 = vmatprep.subr.bf16.mxu0 %v601
  %833 = vmatpush1.bf16.msra.mxu0 %v600
  %834 = vmatprep.subr.bf16.mxu0 %v597
  %835 = vmatpush1.bf16.msra.mxu0 %v596
  %836 = vmatprep.subr.bf16.mxu0 %v593
  %837 = vmatpush1.bf16.msra.mxu0 %v592
  %838 = vmatprep.subr.bf16.mxu0 0
  %839 = vmatpush2.bf16.msra.mxu0 0
  %840 = vmatprep.subr.bf16.mxu0 0
  %841 = vmatpush2.bf16.msra.mxu0 0
  %842 = vmatprep.subr.bf16.mxu0 0
  %843 = vmatpush2.bf16.msra.mxu0 0
  %844 = vmatprep.subr.bf16.mxu0 0
  %845 = vmatpush2.bf16.msra.mxu0 0
  %846 = vmatprep.subr.bf16.mxu0 0
  %847 = vmatpush2.bf16.msra.mxu0 0
  %848 = vmatprep.subr.bf16.mxu0 0
  %849 = vmatpush2.bf16.msra.mxu0 0
  %850 = vmatprep.subr.bf16.mxu0 0
  %851 = vmatpush2.bf16.msra.mxu0 0
  %852 = vmatprep.subr.bf16.mxu0 0
  %853 = vmatpush2.bf16.msra.mxu0 0
  %854 = vmatprep.mubr.bf16.mxu0 0
  %855 = vmatmul.mubr.bf16.gmra.mxu0 %v780
  %v856 = vpop.f32.mrf.mxu0
  %v857 = vadd.f32 0.0, %v856
  %v858 = vpop.f32.mrf.mxu0
  %v859 = vadd.f32 0.0, %v858
  %v860 = vpop.f32.mrf.mxu0
  %v861 = vpop.f32.mrf.mxu0
  %862 = vdwg.mxu0
  %v863 = vadd.f32 %v776, %v816
  %v864 = vadd.f32 %v777, %v818
  %v865 = vadd.f32 %v778, %v857
  %v866 = vadd.f32 %v779, %v859
  %v867 = vxor.u32 %v863, 2147483648
  %v868 = vxor.u32 %v864, 2147483648
  %v869 = vxor.u32 %v865, 2147483648
  %v870 = vmul.f32 %v867, 1.442695
  %v871 = vpow.pop %v870
  %v872 = vmul.f32 %v868, 1.442695
  %v873 = vpow.pop %v872
  %v874 = vmul.f32 %v869, 1.442695
  %v875 = vpow.pop %v874
  %v876 = vadd.f32 %v871, 1.0
  %v877 = vadd.f32 %v873, 1.0
  %v878 = vadd.f32 %v875, 1.0
  %v879 = vrcp.pop %v876
  %v880 = vmul.f32 1.0, %v879
  %v881 = vrcp.pop %v877
  %v882 = vmul.f32 1.0, %v881
  %v883 = vrcp.pop %v878
  %v884 = vmul.f32 1.0, %v883
  %v885 = vtanh.pop %v866
  %v886 = vmul.f32 %v882, %v772
  %v887 = vmul.f32 %v880, %v885
  %v888 = vadd.f32 %v886, %v887
  %v889 = vtanh.pop %v888
  %v890 = vmul.f32 %v884, %v889
  %s891 = sadd.s32 %s483, 1
  %v892 = vstv %s891
  %vm893 = vcmp.lt.s32.totalorder %v892, %v450
  %v894 = vsel %vm893, 1, 0
  %895 = vset.pattern.permute.xlu0 0
  %896 = vperm.xlu0 %895, %v894
  %v897 = vpop.permute.xlu0 %896
  %vm898 = vcmp.eq.s32.totalorder %v897, 1
  %v899 = vsel %vm898, %v890, %v771
  %v900 = vsel %vm898, %v888, %v772
  %s901 = smul.u32 2, 4
  %s902 = smul.addr %s901, 8
  %s903 = scalar_lea.vmem [#allocation2], %s902
  %v904 = vld [vmem:[%s903] sm:$0xff]
  %v905 = vld [vmem:[%s903 + $0x8] sm:$0xff]
  %v906 = vld [vmem:[%s903 + $0x10] sm:$0xff]
  %v907 = vld [vmem:[%s903 + $0x18] sm:$0xff]
  %v908 = vpack.c.bf16 %v899, %v899
  %909 = vmatprep.subr.bf16.mxu0 %v619
  %910 = vmatpush1.bf16.msra.mxu0 %v618
  %911 = vmatprep.subr.bf16.mxu0 %v615
  %912 = vmatpush1.bf16.msra.mxu0 %v614
  %913 = vmatprep.subr.bf16.mxu0 %v611
  %914 = vmatpush1.bf16.msra.mxu0 %v610
  %915 = vmatprep.subr.bf16.mxu0 %v607
  %916 = vmatpush1.bf16.msra.mxu0 %v606
  %917 = vmatprep.subr.bf16.mxu0 %v603
  %918 = vmatpush1.bf16.msra.mxu0 %v602
  %919 = vmatprep.subr.bf16.mxu0 %v599
  %920 = vmatpush1.bf16.msra.mxu0 %v598
  %921 = vmatprep.subr.bf16.mxu0 %v595
  %922 = vmatpush1.bf16.msra.mxu0 %v594
  %923 = vmatprep.subr.bf16.mxu0 %v591
  %924 = vmatpush1.bf16.msra.mxu0 %v590
  %925 = vmatprep.subr.bf16.mxu0 0
  %926 = vmatpush2.bf16.msra.mxu0 0
  %927 = vmatprep.subr.bf16.mxu0 0
  %928 = vmatpush2.bf16.msra.mxu0 0
  %929 = vmatprep.subr.bf16.mxu0 0
  %930 = vmatpush2.bf16.msra.mxu0 0
  %931 = vmatprep.subr.bf16.mxu0 0
  %932 = vmatpush2.bf16.msra.mxu0 0
  %933 = vmatprep.subr.bf16.mxu0 0
  %934 = vmatpush2.bf16.msra.mxu0 0
  %935 = vmatprep.subr.bf16.mxu0 0
  %936 = vmatpush2.bf16.msra.mxu0 0
  %937 = vmatprep.subr.bf16.mxu0 0
  %938 = vmatpush2.bf16.msra.mxu0 0
  %939 = vmatprep.subr.bf16.mxu0 0
  %940 = vmatpush2.bf16.msra.mxu0 0
  %941 = vmatprep.mubr.bf16.mxu0 0
  %942 = vmatmul.mubr.bf16.gmra.mxu0 %v908
  %v943 = vpop.f32.mrf.mxu0
  %v944 = vadd.f32 0.0, %v943
  %v945 = vpop.f32.mrf.mxu0
  %v946 = vadd.f32 0.0, %v945
  %v947 = vpop.f32.mrf.mxu0
  %v948 = vpop.f32.mrf.mxu0
  %949 = vdwg.mxu0
  %950 = vmatprep.subr.bf16.mxu0 %v621
  %951 = vmatpush1.bf16.msra.mxu0 %v620
  %952 = vmatprep.subr.bf16.mxu0 %v617
  %953 = vmatpush1.bf16.msra.mxu0 %v616
  %954 = vmatprep.subr.bf16.mxu0 %v613
  %955 = vmatpush1.bf16.msra.mxu0 %v612
  %956 = vmatprep.subr.bf16.mxu0 %v609
  %957 = vmatpush1.bf16.msra.mxu0 %v608
  %958 = vmatprep.subr.bf16.mxu0 %v605
  %959 = vmatpush1.bf16.msra.mxu0 %v604
  %960 = vmatprep.subr.bf16.mxu0 %v601
  %961 = vmatpush1.bf16.msra.mxu0 %v600
  %962 = vmatprep.subr.bf16.mxu0 %v597
  %963 = vmatpush1.bf16.msra.mxu0 %v596
  %964 = vmatprep.subr.bf16.mxu0 %v593
  %965 = vmatpush1.bf16.msra.mxu0 %v592
  %966 = vmatprep.subr.bf16.mxu0 0
  %967 = vmatpush2.bf16.msra.mxu0 0
  %968 = vmatprep.subr.bf16.mxu0 0
  %969 = vmatpush2.bf16.msra.mxu0 0
  %970 = vmatprep.subr.bf16.mxu0 0
  %971 = vmatpush2.bf16.msra.mxu0 0
  %972 = vmatprep.subr.bf16.mxu0 0
  %973 = vmatpush2.bf16.msra.mxu0 0
  %974 = vmatprep.subr.bf16.mxu0 0
  %975 = vmatpush2.bf16.msra.mxu0 0
  %976 = vmatprep.subr.bf16.mxu0 0
  %977 = vmatpush2.bf16.msra.mxu0 0
  %978 = vmatprep.subr.bf16.mxu0 0
  %979 = vmatpush2.bf16.msra.mxu0 0
  %980 = vmatprep.subr.bf16.mxu0 0
  %981 = vmatpush2.bf16.msra.mxu0 0
  %982 = vmatprep.mubr.bf16.mxu0 0
  %983 = vmatmul.mubr.bf16.gmra.mxu0 %v908
  %v984 = vpop.f32.mrf.mxu0
  %v985 = vadd.f32 0.0, %v984
  %v986 = vpop.f32.mrf.mxu0
  %v987 = vadd.f32 0.0, %v986
  %v988 = vpop.f32.mrf.mxu0
  %v989 = vpop.f32.mrf.mxu0
  %990 = vdwg.mxu0
  %v991 = vadd.f32 %v904, %v944
  %v992 = vadd.f32 %v905, %v946
  %v993 = vadd.f32 %v906, %v985
  %v994 = vadd.f32 %v907, %v987
  %v995 = vxor.u32 %v991, 2147483648
  %v996 = vxor.u32 %v992, 2147483648
  %v997 = vxor.u32 %v993, 2147483648
  %v998 = vmul.f32 %v995, 1.442695
  %v999 = vpow.pop %v998
  %v1000 = vmul.f32 %v996, 1.442695
  %v1001 = vpow.pop %v1000
  %v1002 = vmul.f32 %v997, 1.442695
  %v1003 = vpow.pop %v1002
  %v1004 = vadd.f32 %v999, 1.0
  %v1005 = vadd.f32 %v1001, 1.0
  %v1006 = vadd.f32 %v1003, 1.0
  %v1007 = vrcp.pop %v1004
  %v1008 = vmul.f32 1.0, %v1007
  %v1009 = vrcp.pop %v1005
  %v1010 = vmul.f32 1.0, %v1009
  %v1011 = vrcp.pop %v1006
  %v1012 = vmul.f32 1.0, %v1011
  %v1013 = vtanh.pop %v994
  %v1014 = vmul.f32 %v1010, %v900
  %v1015 = vmul.f32 %v1008, %v1013
  %v1016 = vadd.f32 %v1014, %v1015
  %v1017 = vtanh.pop %v1016
  %v1018 = vmul.f32 %v1012, %v1017
  %s1019 = sadd.s32 %s483, 2
  %v1020 = vstv %s1019
  %vm1021 = vcmp.lt.s32.totalorder %v1020, %v450
  %v1022 = vsel %vm1021, 1, 0
  %1023 = vset.pattern.permute.xlu0 0
  %1024 = vperm.xlu0 %1023, %v1022
  %v1025 = vpop.permute.xlu0 %1024
  %vm1026 = vcmp.eq.s32.totalorder %v1025, 1
  %v1027 = vsel %vm1026, %v1018, %v899
  %v1028 = vsel %vm1026, %v1016, %v900
  %s1029 = smul.u32 3, 4
  %s1030 = smul.addr %s1029, 8
  %s1031 = scalar_lea.vmem [#allocation2], %s1030
  %v1032 = vld [vmem:[%s1031] sm:$0xff]
  %v1033 = vld [vmem:[%s1031 + $0x8] sm:$0xff]
  %v1034 = vld [vmem:[%s1031 + $0x10] sm:$0xff]
  %v1035 = vld [vmem:[%s1031 + $0x18] sm:$0xff]
  %v1036 = vpack.c.bf16 %v1027, %v1027
  %1037 = vmatprep.subr.bf16.mxu0 %v619
  %1038 = vmatpush1.bf16.msra.mxu0 %v618
  %1039 = vmatprep.subr.bf16.mxu0 %v615
  %1040 = vmatpush1.bf16.msra.mxu0 %v614
  %1041 = vmatprep.subr.bf16.mxu0 %v611
  %1042 = vmatpush1.bf16.msra.mxu0 %v610
  %1043 = vmatprep.subr.bf16.mxu0 %v607
  %1044 = vmatpush1.bf16.msra.mxu0 %v606
  %1045 = vmatprep.subr.bf16.mxu0 %v603
  %1046 = vmatpush1.bf16.msra.mxu0 %v602
  %1047 = vmatprep.subr.bf16.mxu0 %v599
  %1048 = vmatpush1.bf16.msra.mxu0 %v598
  %1049 = vmatprep.subr.bf16.mxu0 %v595
  %1050 = vmatpush1.bf16.msra.mxu0 %v594
  %1051 = vmatprep.subr.bf16.mxu0 %v591
  %1052 = vmatpush1.bf16.msra.mxu0 %v590
  %1053 = vmatprep.subr.bf16.mxu0 0
  %1054 = vmatpush2.bf16.msra.mxu0 0
  %1055 = vmatprep.subr.bf16.mxu0 0
  %1056 = vmatpush2.bf16.msra.mxu0 0
  %1057 = vmatprep.subr.bf16.mxu0 0
  %1058 = vmatpush2.bf16.msra.mxu0 0
  %1059 = vmatprep.subr.bf16.mxu0 0
  %1060 = vmatpush2.bf16.msra.mxu0 0
  %1061 = vmatprep.subr.bf16.mxu0 0
  %1062 = vmatpush2.bf16.msra.mxu0 0
  %1063 = vmatprep.subr.bf16.mxu0 0
  %1064 = vmatpush2.bf16.msra.mxu0 0
  %1065 = vmatprep.subr.bf16.mxu0 0
  %1066 = vmatpush2.bf16.msra.mxu0 0
  %1067 = vmatprep.subr.bf16.mxu0 0
  %1068 = vmatpush2.bf16.msra.mxu0 0
  %1069 = vmatprep.mubr.bf16.mxu0 0
  %1070 = vmatmul.mubr.bf16.gmra.mxu0 %v1036
  %v1071 = vpop.f32.mrf.mxu0
  %v1072 = vadd.f32 0.0, %v1071
  %v1073 = vpop.f32.mrf.mxu0
  %v1074 = vadd.f32 0.0, %v1073
  %v1075 = vpop.f32.mrf.mxu0
  %v1076 = vpop.f32.mrf.mxu0
  %1077 = vdwg.mxu0
  %1078 = vmatprep.subr.bf16.mxu0 %v621
  %1079 = vmatpush1.bf16.msra.mxu0 %v620
  %1080 = vmatprep.subr.bf16.mxu0 %v617
  %1081 = vmatpush1.bf16.msra.mxu0 %v616
  %1082 = vmatprep.subr.bf16.mxu0 %v613
  %1083 = vmatpush1.bf16.msra.mxu0 %v612
  %1084 = vmatprep.subr.bf16.mxu0 %v609
  %1085 = vmatpush1.bf16.msra.mxu0 %v608
  %1086 = vmatprep.subr.bf16.mxu0 %v605
  %1087 = vmatpush1.bf16.msra.mxu0 %v604
  %1088 = vmatprep.subr.bf16.mxu0 %v601
  %1089 = vmatpush1.bf16.msra.mxu0 %v600
  %1090 = vmatprep.subr.bf16.mxu0 %v597
  %1091 = vmatpush1.bf16.msra.mxu0 %v596
  %1092 = vmatprep.subr.bf16.mxu0 %v593
  %1093 = vmatpush1.bf16.msra.mxu0 %v592
  %1094 = vmatprep.subr.bf16.mxu0 0
  %1095 = vmatpush2.bf16.msra.mxu0 0
  %1096 = vmatprep.subr.bf16.mxu0 0
  %1097 = vmatpush2.bf16.msra.mxu0 0
  %1098 = vmatprep.subr.bf16.mxu0 0
  %1099 = vmatpush2.bf16.msra.mxu0 0
  %1100 = vmatprep.subr.bf16.mxu0 0
  %1101 = vmatpush2.bf16.msra.mxu0 0
  %1102 = vmatprep.subr.bf16.mxu0 0
  %1103 = vmatpush2.bf16.msra.mxu0 0
  %1104 = vmatprep.subr.bf16.mxu0 0
  %1105 = vmatpush2.bf16.msra.mxu0 0
  %1106 = vmatprep.subr.bf16.mxu0 0
  %1107 = vmatpush2.bf16.msra.mxu0 0
  %1108 = vmatprep.subr.bf16.mxu0 0
  %1109 = vmatpush2.bf16.msra.mxu0 0
  %1110 = vmatprep.mubr.bf16.mxu0 0
  %1111 = vmatmul.mubr.bf16.gmra.mxu0 %v1036
  %v1112 = vpop.f32.mrf.mxu0
  %v1113 = vadd.f32 0.0, %v1112
  %v1114 = vpop.f32.mrf.mxu0
  %v1115 = vadd.f32 0.0, %v1114
  %v1116 = vpop.f32.mrf.mxu0
  %v1117 = vpop.f32.mrf.mxu0
  %1118 = vdwg.mxu0
  %v1119 = vadd.f32 %v1032, %v1072
  %v1120 = vadd.f32 %v1033, %v1074
  %v1121 = vadd.f32 %v1034, %v1113
  %v1122 = vadd.f32 %v1035, %v1115
  %v1123 = vxor.u32 %v1119, 2147483648
  %v1124 = vxor.u32 %v1120, 2147483648
  %v1125 = vxor.u32 %v1121, 2147483648
  %v1126 = vmul.f32 %v1123, 1.442695
  %v1127 = vpow.pop %v1126
  %v1128 = vmul.f32 %v1124, 1.442695
  %v1129 = vpow.pop %v1128
  %v1130 = vmul.f32 %v1125, 1.442695
  %v1131 = vpow.pop %v1130
  %v1132 = vadd.f32 %v1127, 1.0
  %v1133 = vadd.f32 %v1129, 1.0
  %v1134 = vadd.f32 %v1131, 1.0
  %v1135 = vrcp.pop %v1132
  %v1136 = vmul.f32 1.0, %v1135
  %v1137 = vrcp.pop %v1133
  %v1138 = vmul.f32 1.0, %v1137
  %v1139 = vrcp.pop %v1134
  %v1140 = vmul.f32 1.0, %v1139
  %v1141 = vtanh.pop %v1122
  %v1142 = vmul.f32 %v1138, %v1028
  %v1143 = vmul.f32 %v1136, %v1141
  %v1144 = vadd.f32 %v1142, %v1143
  %v1145 = vtanh.pop %v1144
  %v1146 = vmul.f32 %v1140, %v1145
  %s1147 = sadd.s32 %s483, 3
  %v1148 = vstv %s1147
  %vm1149 = vcmp.lt.s32.totalorder %v1148, %v450
  %v1150 = vsel %vm1149, 1, 0
  %1151 = vset.pattern.permute.xlu0 0
  %1152 = vperm.xlu0 %1151, %v1150
  %v1153 = vpop.permute.xlu0 %1152
  %vm1154 = vcmp.eq.s32.totalorder %v1153, 1
  %v1155 = vsel %vm1154, %v1146, %v1027
  %v1156 = vsel %vm1154, %v1144, %v1028
  %s1157 = smul.u32 4, 4
  %s1158 = smul.addr %s1157, 8
  %s1159 = scalar_lea.vmem [#allocation2], %s1158
  %v1160 = vld [vmem:[%s1159] sm:$0xff]
  %v1161 = vld [vmem:[%s1159 + $0x8] sm:$0xff]
  %v1162 = vld [vmem:[%s1159 + $0x10] sm:$0xff]
  %v1163 = vld [vmem:[%s1159 + $0x18] sm:$0xff]
  %v1164 = vpack.c.bf16 %v1155, %v1155
  %1165 = vmatprep.subr.bf16.mxu0 %v619
  %1166 = vmatpush1.bf16.msra.mxu0 %v618
  %1167 = vmatprep.subr.bf16.mxu0 %v615
  %1168 = vmatpush1.bf16.msra.mxu0 %v614
  %1169 = vmatprep.subr.bf16.mxu0 %v611
  %1170 = vmatpush1.bf16.msra.mxu0 %v610
  %1171 = vmatprep.subr.bf16.mxu0 %v607
  %1172 = vmatpush1.bf16.msra.mxu0 %v606
  %1173 = vmatprep.subr.bf16.mxu0 %v603
  %1174 = vmatpush1.bf16.msra.mxu0 %v602
  %1175 = vmatprep.subr.bf16.mxu0 %v599
  %1176 = vmatpush1.bf16.msra.mxu0 %v598
  %1177 = vmatprep.subr.bf16.mxu0 %v595
  %1178 = vmatpush1.bf16.msra.mxu0 %v594
  %1179 = vmatprep.subr.bf16.mxu0 %v591
  %1180 = vmatpush1.bf16.msra.mxu0 %v590
  %1181 = vmatprep.subr.bf16.mxu0 0
  %1182 = vmatpush2.bf16.msra.mxu0 0
  %1183 = vmatprep.subr.bf16.mxu0 0
  %1184 = vmatpush2.bf16.msra.mxu0 0
  %1185 = vmatprep.subr.bf16.mxu0 0
  %1186 = vmatpush2.bf16.msra.mxu0 0
  %1187 = vmatprep.subr.bf16.mxu0 0
  %1188 = vmatpush2.bf16.msra.mxu0 0
  %1189 = vmatprep.subr.bf16.mxu0 0
  %1190 = vmatpush2.bf16.msra.mxu0 0
  %1191 = vmatprep.subr.bf16.mxu0 0
  %1192 = vmatpush2.bf16.msra.mxu0 0
  %1193 = vmatprep.subr.bf16.mxu0 0
  %1194 = vmatpush2.bf16.msra.mxu0 0
  %1195 = vmatprep.subr.bf16.mxu0 0
  %1196 = vmatpush2.bf16.msra.mxu0 0
  %1197 = vmatprep.mubr.bf16.mxu0 0
  %1198 = vmatmul.mubr.bf16.gmra.mxu0 %v1164
  %v1199 = vpop.f32.mrf.mxu0
  %v1200 = vadd.f32 0.0, %v1199
  %v1201 = vpop.f32.mrf.mxu0
  %v1202 = vadd.f32 0.0, %v1201
  %v1203 = vpop.f32.mrf.mxu0
  %v1204 = vpop.f32.mrf.mxu0
  %1205 = vdwg.mxu0
  %1206 = vmatprep.subr.bf16.mxu0 %v621
  %1207 = vmatpush1.bf16.msra.mxu0 %v620
  %1208 = vmatprep.subr.bf16.mxu0 %v617
  %1209 = vmatpush1.bf16.msra.mxu0 %v616
  %1210 = vmatprep.subr.bf16.mxu0 %v613
  %1211 = vmatpush1.bf16.msra.mxu0 %v612
  %1212 = vmatprep.subr.bf16.mxu0 %v609
  %1213 = vmatpush1.bf16.msra.mxu0 %v608
  %1214 = vmatprep.subr.bf16.mxu0 %v605
  %1215 = vmatpush1.bf16.msra.mxu0 %v604
  %1216 = vmatprep.subr.bf16.mxu0 %v601
  %1217 = vmatpush1.bf16.msra.mxu0 %v600
  %1218 = vmatprep.subr.bf16.mxu0 %v597
  %1219 = vmatpush1.bf16.msra.mxu0 %v596
  %1220 = vmatprep.subr.bf16.mxu0 %v593
  %1221 = vmatpush1.bf16.msra.mxu0 %v592
  %1222 = vmatprep.subr.bf16.mxu0 0
  %1223 = vmatpush2.bf16.msra.mxu0 0
  %1224 = vmatprep.subr.bf16.mxu0 0
  %1225 = vmatpush2.bf16.msra.mxu0 0
  %1226 = vmatprep.subr.bf16.mxu0 0
  %1227 = vmatpush2.bf16.msra.mxu0 0
  %1228 = vmatprep.subr.bf16.mxu0 0
  %1229 = vmatpush2.bf16.msra.mxu0 0
  %1230 = vmatprep.subr.bf16.mxu0 0
  %1231 = vmatpush2.bf16.msra.mxu0 0
  %1232 = vmatprep.subr.bf16.mxu0 0
  %1233 = vmatpush2.bf16.msra.mxu0 0
  %1234 = vmatprep.subr.bf16.mxu0 0
  %1235 = vmatpush2.bf16.msra.mxu0 0
  %1236 = vmatprep.subr.bf16.mxu0 0
  %1237 = vmatpush2.bf16.msra.mxu0 0
  %1238 = vmatprep.mubr.bf16.mxu0 0
  %1239 = vmatmul.mubr.bf16.gmra.mxu0 %v1164
  %v1240 = vpop.f32.mrf.mxu0
  %v1241 = vadd.f32 0.0, %v1240
  %v1242 = vpop.f32.mrf.mxu0
  %v1243 = vadd.f32 0.0, %v1242
  %v1244 = vpop.f32.mrf.mxu0
  %v1245 = vpop.f32.mrf.mxu0
  %1246 = vdwg.mxu0
  %v1247 = vadd.f32 %v1160, %v1200
  %v1248 = vadd.f32 %v1161, %v1202
  %v1249 = vadd.f32 %v1162, %v1241
  %v1250 = vadd.f32 %v1163, %v1243
  %v1251 = vxor.u32 %v1247, 2147483648
  %v1252 = vxor.u32 %v1248, 2147483648
  %v1253 = vxor.u32 %v1249, 2147483648
  %v1254 = vmul.f32 %v1251, 1.442695
  %v1255 = vpow.pop %v1254
  %v1256 = vmul.f32 %v1252, 1.442695
  %v1257 = vpow.pop %v1256
  %v1258 = vmul.f32 %v1253, 1.442695
  %v1259 = vpow.pop %v1258
  %v1260 = vadd.f32 %v1255, 1.0
  %v1261 = vadd.f32 %v1257, 1.0
  %v1262 = vadd.f32 %v1259, 1.0
  %v1263 = vrcp.pop %v1260
  %v1264 = vmul.f32 1.0, %v1263
  %v1265 = vrcp.pop %v1261
  %v1266 = vmul.f32 1.0, %v1265
  %v1267 = vrcp.pop %v1262
  %v1268 = vmul.f32 1.0, %v1267
  %v1269 = vtanh.pop %v1250
  %v1270 = vmul.f32 %v1266, %v1156
  %v1271 = vmul.f32 %v1264, %v1269
  %v1272 = vadd.f32 %v1270, %v1271
  %v1273 = vtanh.pop %v1272
  %v1274 = vmul.f32 %v1268, %v1273
  %s1275 = sadd.s32 %s483, 4
  %v1276 = vstv %s1275
  %vm1277 = vcmp.lt.s32.totalorder %v1276, %v450
  %v1278 = vsel %vm1277, 1, 0
  %1279 = vset.pattern.permute.xlu0 0
  %1280 = vperm.xlu0 %1279, %v1278
  %v1281 = vpop.permute.xlu0 %1280
  %vm1282 = vcmp.eq.s32.totalorder %v1281, 1
  %v1283 = vsel %vm1282, %v1274, %v1155
  %v1284 = vsel %vm1282, %v1272, %v1156
  %s1285 = smul.u32 5, 4
  %s1286 = smul.addr %s1285, 8
  %s1287 = scalar_lea.vmem [#allocation2], %s1286
  %v1288 = vld [vmem:[%s1287] sm:$0xff]
  %v1289 = vld [vmem:[%s1287 + $0x8] sm:$0xff]
  %v1290 = vld [vmem:[%s1287 + $0x10] sm:$0xff]
  %v1291 = vld [vmem:[%s1287 + $0x18] sm:$0xff]
  %v1292 = vpack.c.bf16 %v1283, %v1283
  %1293 = vmatprep.subr.bf16.mxu0 %v619
  %1294 = vmatpush1.bf16.msra.mxu0 %v618
  %1295 = vmatprep.subr.bf16.mxu0 %v615
  %1296 = vmatpush1.bf16.msra.mxu0 %v614
  %1297 = vmatprep.subr.bf16.mxu0 %v611
  %1298 = vmatpush1.bf16.msra.mxu0 %v610
  %1299 = vmatprep.subr.bf16.mxu0 %v607
  %1300 = vmatpush1.bf16.msra.mxu0 %v606
  %1301 = vmatprep.subr.bf16.mxu0 %v603
  %1302 = vmatpush1.bf16.msra.mxu0 %v602
  %1303 = vmatprep.subr.bf16.mxu0 %v599
  %1304 = vmatpush1.bf16.msra.mxu0 %v598
  %1305 = vmatprep.subr.bf16.mxu0 %v595
  %1306 = vmatpush1.bf16.msra.mxu0 %v594
  %1307 = vmatprep.subr.bf16.mxu0 %v591
  %1308 = vmatpush1.bf16.msra.mxu0 %v590
  %1309 = vmatprep.subr.bf16.mxu0 0
  %1310 = vmatpush2.bf16.msra.mxu0 0
  %1311 = vmatprep.subr.bf16.mxu0 0
  %1312 = vmatpush2.bf16.msra.mxu0 0
  %1313 = vmatprep.subr.bf16.mxu0 0
  %1314 = vmatpush2.bf16.msra.mxu0 0
  %1315 = vmatprep.subr.bf16.mxu0 0
  %1316 = vmatpush2.bf16.msra.mxu0 0
  %1317 = vmatprep.subr.bf16.mxu0 0
  %1318 = vmatpush2.bf16.msra.mxu0 0
  %1319 = vmatprep.subr.bf16.mxu0 0
  %1320 = vmatpush2.bf16.msra.mxu0 0
  %1321 = vmatprep.subr.bf16.mxu0 0
  %1322 = vmatpush2.bf16.msra.mxu0 0
  %1323 = vmatprep.subr.bf16.mxu0 0
  %1324 = vmatpush2.bf16.msra.mxu0 0
  %1325 = vmatprep.mubr.bf16.mxu0 0
  %1326 = vmatmul.mubr.bf16.gmra.mxu0 %v1292
  %v1327 = vpop.f32.mrf.mxu0
  %v1328 = vadd.f32 0.0, %v1327
  %v1329 = vpop.f32.mrf.mxu0
  %v1330 = vadd.f32 0.0, %v1329
  %v1331 = vpop.f32.mrf.mxu0
  %v1332 = vpop.f32.mrf.mxu0
  %1333 = vdwg.mxu0
  %1334 = vmatprep.subr.bf16.mxu0 %v621
  %1335 = vmatpush1.bf16.msra.mxu0 %v620
  %1336 = vmatprep.subr.bf16.mxu0 %v617
  %1337 = vmatpush1.bf16.msra.mxu0 %v616
  %1338 = vmatprep.subr.bf16.mxu0 %v613
  %1339 = vmatpush1.bf16.msra.mxu0 %v612
  %1340 = vmatprep.subr.bf16.mxu0 %v609
  %1341 = vmatpush1.bf16.msra.mxu0 %v608
  %1342 = vmatprep.subr.bf16.mxu0 %v605
  %1343 = vmatpush1.bf16.msra.mxu0 %v604
  %1344 = vmatprep.subr.bf16.mxu0 %v601
  %1345 = vmatpush1.bf16.msra.mxu0 %v600
  %1346 = vmatprep.subr.bf16.mxu0 %v597
  %1347 = vmatpush1.bf16.msra.mxu0 %v596
  %1348 = vmatprep.subr.bf16.mxu0 %v593
  %1349 = vmatpush1.bf16.msra.mxu0 %v592
  %1350 = vmatprep.subr.bf16.mxu0 0
  %1351 = vmatpush2.bf16.msra.mxu0 0
  %1352 = vmatprep.subr.bf16.mxu0 0
  %1353 = vmatpush2.bf16.msra.mxu0 0
  %1354 = vmatprep.subr.bf16.mxu0 0
  %1355 = vmatpush2.bf16.msra.mxu0 0
  %1356 = vmatprep.subr.bf16.mxu0 0
  %1357 = vmatpush2.bf16.msra.mxu0 0
  %1358 = vmatprep.subr.bf16.mxu0 0
  %1359 = vmatpush2.bf16.msra.mxu0 0
  %1360 = vmatprep.subr.bf16.mxu0 0
  %1361 = vmatpush2.bf16.msra.mxu0 0
  %1362 = vmatprep.subr.bf16.mxu0 0
  %1363 = vmatpush2.bf16.msra.mxu0 0
  %1364 = vmatprep.subr.bf16.mxu0 0
  %1365 = vmatpush2.bf16.msra.mxu0 0
  %1366 = vmatprep.mubr.bf16.mxu0 0
  %1367 = vmatmul.mubr.bf16.gmra.mxu0 %v1292
  %v1368 = vpop.f32.mrf.mxu0
  %v1369 = vadd.f32 0.0, %v1368
  %v1370 = vpop.f32.mrf.mxu0
  %v1371 = vadd.f32 0.0, %v1370
  %v1372 = vpop.f32.mrf.mxu0
  %v1373 = vpop.f32.mrf.mxu0
  %1374 = vdwg.mxu0
  %v1375 = vadd.f32 %v1288, %v1328
  %v1376 = vadd.f32 %v1289, %v1330
  %v1377 = vadd.f32 %v1290, %v1369
  %v1378 = vadd.f32 %v1291, %v1371
  %v1379 = vxor.u32 %v1375, 2147483648
  %v1380 = vxor.u32 %v1376, 2147483648
  %v1381 = vxor.u32 %v1377, 2147483648
  %v1382 = vmul.f32 %v1379, 1.442695
  %v1383 = vpow.pop %v1382
  %v1384 = vmul.f32 %v1380, 1.442695
  %v1385 = vpow.pop %v1384
  %v1386 = vmul.f32 %v1381, 1.442695
  %v1387 = vpow.pop %v1386
  %v1388 = vadd.f32 %v1383, 1.0
  %v1389 = vadd.f32 %v1385, 1.0
  %v1390 = vadd.f32 %v1387, 1.0
  %v1391 = vrcp.pop %v1388
  %v1392 = vmul.f32 1.0, %v1391
  %v1393 = vrcp.pop %v1389
  %v1394 = vmul.f32 1.0, %v1393
  %v1395 = vrcp.pop %v1390
  %v1396 = vmul.f32 1.0, %v1395
  %v1397 = vtanh.pop %v1378
  %v1398 = vmul.f32 %v1394, %v1284
  %v1399 = vmul.f32 %v1392, %v1397
  %v1400 = vadd.f32 %v1398, %v1399
  %v1401 = vtanh.pop %v1400
  %v1402 = vmul.f32 %v1396, %v1401
  %s1403 = sadd.s32 %s483, 5
  %v1404 = vstv %s1403
  %vm1405 = vcmp.lt.s32.totalorder %v1404, %v450
  %v1406 = vsel %vm1405, 1, 0
  %1407 = vset.pattern.permute.xlu0 0
  %1408 = vperm.xlu0 %1407, %v1406
  %v1409 = vpop.permute.xlu0 %1408
  %vm1410 = vcmp.eq.s32.totalorder %v1409, 1
  %v1411 = vsel %vm1410, %v1402, %v1283
  %v1412 = vsel %vm1410, %v1400, %v1284
  %s1413 = smul.u32 6, 4
  %s1414 = smul.addr %s1413, 8
  %s1415 = scalar_lea.vmem [#allocation2], %s1414
  %v1416 = vld [vmem:[%s1415] sm:$0xff]
  %v1417 = vld [vmem:[%s1415 + $0x8] sm:$0xff]
  %v1418 = vld [vmem:[%s1415 + $0x10] sm:$0xff]
  %v1419 = vld [vmem:[%s1415 + $0x18] sm:$0xff]
  %v1420 = vpack.c.bf16 %v1411, %v1411
  %1421 = vmatprep.subr.bf16.mxu0 %v619
  %1422 = vmatpush1.bf16.msra.mxu0 %v618
  %1423 = vmatprep.subr.bf16.mxu0 %v615
  %1424 = vmatpush1.bf16.msra.mxu0 %v614
  %1425 = vmatprep.subr.bf16.mxu0 %v611
  %1426 = vmatpush1.bf16.msra.mxu0 %v610
  %1427 = vmatprep.subr.bf16.mxu0 %v607
  %1428 = vmatpush1.bf16.msra.mxu0 %v606
  %1429 = vmatprep.subr.bf16.mxu0 %v603
  %1430 = vmatpush1.bf16.msra.mxu0 %v602
  %1431 = vmatprep.subr.bf16.mxu0 %v599
  %1432 = vmatpush1.bf16.msra.mxu0 %v598
  %1433 = vmatprep.subr.bf16.mxu0 %v595
  %1434 = vmatpush1.bf16.msra.mxu0 %v594
  %1435 = vmatprep.subr.bf16.mxu0 %v591
  %1436 = vmatpush1.bf16.msra.mxu0 %v590
  %1437 = vmatprep.subr.bf16.mxu0 0
  %1438 = vmatpush2.bf16.msra.mxu0 0
  %1439 = vmatprep.subr.bf16.mxu0 0
  %1440 = vmatpush2.bf16.msra.mxu0 0
  %1441 = vmatprep.subr.bf16.mxu0 0
  %1442 = vmatpush2.bf16.msra.mxu0 0
  %1443 = vmatprep.subr.bf16.mxu0 0
  %1444 = vmatpush2.bf16.msra.mxu0 0
  %1445 = vmatprep.subr.bf16.mxu0 0
  %1446 = vmatpush2.bf16.msra.mxu0 0
  %1447 = vmatprep.subr.bf16.mxu0 0
  %1448 = vmatpush2.bf16.msra.mxu0 0
  %1449 = vmatprep.subr.bf16.mxu0 0
  %1450 = vmatpush2.bf16.msra.mxu0 0
  %1451 = vmatprep.subr.bf16.mxu0 0
  %1452 = vmatpush2.bf16.msra.mxu0 0
  %1453 = vmatprep.mubr.bf16.mxu0 0
  %1454 = vmatmul.mubr.bf16.gmra.mxu0 %v1420
  %v1455 = vpop.f32.mrf.mxu0
  %v1456 = vadd.f32 0.0, %v1455
  %v1457 = vpop.f32.mrf.mxu0
  %v1458 = vadd.f32 0.0, %v1457
  %v1459 = vpop.f32.mrf.mxu0
  %v1460 = vpop.f32.mrf.mxu0
  %1461 = vdwg.mxu0
  %1462 = vmatprep.subr.bf16.mxu0 %v621
  %1463 = vmatpush1.bf16.msra.mxu0 %v620
  %1464 = vmatprep.subr.bf16.mxu0 %v617
  %1465 = vmatpush1.bf16.msra.mxu0 %v616
  %1466 = vmatprep.subr.bf16.mxu0 %v613
  %1467 = vmatpush1.bf16.msra.mxu0 %v612
  %1468 = vmatprep.subr.bf16.mxu0 %v609
  %1469 = vmatpush1.bf16.msra.mxu0 %v608
  %1470 = vmatprep.subr.bf16.mxu0 %v605
  %1471 = vmatpush1.bf16.msra.mxu0 %v604
  %1472 = vmatprep.subr.bf16.mxu0 %v601
  %1473 = vmatpush1.bf16.msra.mxu0 %v600
  %1474 = vmatprep.subr.bf16.mxu0 %v597
  %1475 = vmatpush1.bf16.msra.mxu0 %v596
  %1476 = vmatprep.subr.bf16.mxu0 %v593
  %1477 = vmatpush1.bf16.msra.mxu0 %v592
  %1478 = vmatprep.subr.bf16.mxu0 0
  %1479 = vmatpush2.bf16.msra.mxu0 0
  %1480 = vmatprep.subr.bf16.mxu0 0
  %1481 = vmatpush2.bf16.msra.mxu0 0
  %1482 = vmatprep.subr.bf16.mxu0 0
  %1483 = vmatpush2.bf16.msra.mxu0 0
  %1484 = vmatprep.subr.bf16.mxu0 0
  %1485 = vmatpush2.bf16.msra.mxu0 0
  %1486 = vmatprep.subr.bf16.mxu0 0
  %1487 = vmatpush2.bf16.msra.mxu0 0
  %1488 = vmatprep.subr.bf16.mxu0 0
  %1489 = vmatpush2.bf16.msra.mxu0 0
  %1490 = vmatprep.subr.bf16.mxu0 0
  %1491 = vmatpush2.bf16.msra.mxu0 0
  %1492 = vmatprep.subr.bf16.mxu0 0
  %1493 = vmatpush2.bf16.msra.mxu0 0
  %1494 = vmatprep.mubr.bf16.mxu0 0
  %1495 = vmatmul.mubr.bf16.gmra.mxu0 %v1420
  %v1496 = vpop.f32.mrf.mxu0
  %v1497 = vadd.f32 0.0, %v1496
  %v1498 = vpop.f32.mrf.mxu0
  %v1499 = vadd.f32 0.0, %v1498
  %v1500 = vpop.f32.mrf.mxu0
  %v1501 = vpop.f32.mrf.mxu0
  %1502 = vdwg.mxu0
  %v1503 = vadd.f32 %v1416, %v1456
  %v1504 = vadd.f32 %v1417, %v1458
  %v1505 = vadd.f32 %v1418, %v1497
  %v1506 = vadd.f32 %v1419, %v1499
  %v1507 = vxor.u32 %v1503, 2147483648
  %v1508 = vxor.u32 %v1504, 2147483648
  %v1509 = vxor.u32 %v1505, 2147483648
  %v1510 = vmul.f32 %v1507, 1.442695
  %v1511 = vpow.pop %v1510
  %v1512 = vmul.f32 %v1508, 1.442695
  %v1513 = vpow.pop %v1512
  %v1514 = vmul.f32 %v1509, 1.442695
  %v1515 = vpow.pop %v1514
  %v1516 = vadd.f32 %v1511, 1.0
  %v1517 = vadd.f32 %v1513, 1.0
  %v1518 = vadd.f32 %v1515, 1.0
  %v1519 = vrcp.pop %v1516
  %v1520 = vmul.f32 1.0, %v1519
  %v1521 = vrcp.pop %v1517
  %v1522 = vmul.f32 1.0, %v1521
  %v1523 = vrcp.pop %v1518
  %v1524 = vmul.f32 1.0, %v1523
  %v1525 = vtanh.pop %v1506
  %v1526 = vmul.f32 %v1522, %v1412
  %v1527 = vmul.f32 %v1520, %v1525
  %v1528 = vadd.f32 %v1526, %v1527
  %v1529 = vtanh.pop %v1528
  %v1530 = vmul.f32 %v1524, %v1529
  %s1531 = sadd.s32 %s483, 6
  %v1532 = vstv %s1531
  %vm1533 = vcmp.lt.s32.totalorder %v1532, %v450
  %v1534 = vsel %vm1533, 1, 0
  %1535 = vset.pattern.permute.xlu0 0
  %1536 = vperm.xlu0 %1535, %v1534
  %v1537 = vpop.permute.xlu0 %1536
  %vm1538 = vcmp.eq.s32.totalorder %v1537, 1
  %v1539 = vsel %vm1538, %v1530, %v1411
  %v1540 = vsel %vm1538, %v1528, %v1412
  %s1541 = smul.u32 7, 4
  %s1542 = smul.addr %s1541, 8
  %s1543 = scalar_lea.vmem [#allocation2], %s1542
  %v1544 = vld [vmem:[%s1543] sm:$0xff]
  %v1545 = vld [vmem:[%s1543 + $0x8] sm:$0xff]
  %v1546 = vld [vmem:[%s1543 + $0x10] sm:$0xff]
  %v1547 = vld [vmem:[%s1543 + $0x18] sm:$0xff]
  %v1548 = vpack.c.bf16 %v1539, %v1539
  %1549 = vmatprep.subr.bf16.mxu0 %v619
  %1550 = vmatpush1.bf16.msra.mxu0 %v618
  %1551 = vmatprep.subr.bf16.mxu0 %v615
  %1552 = vmatpush1.bf16.msra.mxu0 %v614
  %1553 = vmatprep.subr.bf16.mxu0 %v611
  %1554 = vmatpush1.bf16.msra.mxu0 %v610
  %1555 = vmatprep.subr.bf16.mxu0 %v607
  %1556 = vmatpush1.bf16.msra.mxu0 %v606
  %1557 = vmatprep.subr.bf16.mxu0 %v603
  %1558 = vmatpush1.bf16.msra.mxu0 %v602
  %1559 = vmatprep.subr.bf16.mxu0 %v599
  %1560 = vmatpush1.bf16.msra.mxu0 %v598
  %1561 = vmatprep.subr.bf16.mxu0 %v595
  %1562 = vmatpush1.bf16.msra.mxu0 %v594
  %1563 = vmatprep.subr.bf16.mxu0 %v591
  %1564 = vmatpush1.bf16.msra.mxu0 %v590
  %1565 = vmatprep.subr.bf16.mxu0 0
  %1566 = vmatpush2.bf16.msra.mxu0 0
  %1567 = vmatprep.subr.bf16.mxu0 0
  %1568 = vmatpush2.bf16.msra.mxu0 0
  %1569 = vmatprep.subr.bf16.mxu0 0
  %1570 = vmatpush2.bf16.msra.mxu0 0
  %1571 = vmatprep.subr.bf16.mxu0 0
  %1572 = vmatpush2.bf16.msra.mxu0 0
  %1573 = vmatprep.subr.bf16.mxu0 0
  %1574 = vmatpush2.bf16.msra.mxu0 0
  %1575 = vmatprep.subr.bf16.mxu0 0
  %1576 = vmatpush2.bf16.msra.mxu0 0
  %1577 = vmatprep.subr.bf16.mxu0 0
  %1578 = vmatpush2.bf16.msra.mxu0 0
  %1579 = vmatprep.subr.bf16.mxu0 0
  %1580 = vmatpush2.bf16.msra.mxu0 0
  %1581 = vmatprep.mubr.bf16.mxu0 0
  %1582 = vmatmul.mubr.bf16.gmra.mxu0 %v1548
  %v1583 = vpop.f32.mrf.mxu0
  %v1584 = vadd.f32 0.0, %v1583
  %v1585 = vpop.f32.mrf.mxu0
  %v1586 = vadd.f32 0.0, %v1585
  %v1587 = vpop.f32.mrf.mxu0
  %v1588 = vpop.f32.mrf.mxu0
  %1589 = vdwg.mxu0
  %1590 = vmatprep.subr.bf16.mxu0 %v621
  %1591 = vmatpush1.bf16.msra.mxu0 %v620
  %1592 = vmatprep.subr.bf16.mxu0 %v617
  %1593 = vmatpush1.bf16.msra.mxu0 %v616
  %1594 = vmatprep.subr.bf16.mxu0 %v613
  %1595 = vmatpush1.bf16.msra.mxu0 %v612
  %1596 = vmatprep.subr.bf16.mxu0 %v609
  %1597 = vmatpush1.bf16.msra.mxu0 %v608
  %1598 = vmatprep.subr.bf16.mxu0 %v605
  %1599 = vmatpush1.bf16.msra.mxu0 %v604
  %1600 = vmatprep.subr.bf16.mxu0 %v601
  %1601 = vmatpush1.bf16.msra.mxu0 %v600
  %1602 = vmatprep.subr.bf16.mxu0 %v597
  %1603 = vmatpush1.bf16.msra.mxu0 %v596
  %1604 = vmatprep.subr.bf16.mxu0 %v593
  %1605 = vmatpush1.bf16.msra.mxu0 %v592
  %1606 = vmatprep.subr.bf16.mxu0 0
  %1607 = vmatpush2.bf16.msra.mxu0 0
  %1608 = vmatprep.subr.bf16.mxu0 0
  %1609 = vmatpush2.bf16.msra.mxu0 0
  %1610 = vmatprep.subr.bf16.mxu0 0
  %1611 = vmatpush2.bf16.msra.mxu0 0
  %1612 = vmatprep.subr.bf16.mxu0 0
  %1613 = vmatpush2.bf16.msra.mxu0 0
  %1614 = vmatprep.subr.bf16.mxu0 0
  %1615 = vmatpush2.bf16.msra.mxu0 0
  %1616 = vmatprep.subr.bf16.mxu0 0
  %1617 = vmatpush2.bf16.msra.mxu0 0
  %1618 = vmatprep.subr.bf16.mxu0 0
  %1619 = vmatpush2.bf16.msra.mxu0 0
  %1620 = vmatprep.subr.bf16.mxu0 0
  %1621 = vmatpush2.bf16.msra.mxu0 0
  %1622 = vmatprep.mubr.bf16.mxu0 0
  %1623 = vmatmul.mubr.bf16.gmra.mxu0 %v1548
  %v1624 = vpop.f32.mrf.mxu0
  %v1625 = vadd.f32 0.0, %v1624
  %v1626 = vpop.f32.mrf.mxu0
  %v1627 = vadd.f32 0.0, %v1626
  %v1628 = vpop.f32.mrf.mxu0
  %v1629 = vpop.f32.mrf.mxu0
  %1630 = vdwg.mxu0
  %v1631 = vadd.f32 %v1544, %v1584
  %v1632 = vadd.f32 %v1545, %v1586
  %v1633 = vadd.f32 %v1546, %v1625
  %v1634 = vadd.f32 %v1547, %v1627
  %v1635 = vxor.u32 %v1631, 2147483648
  %v1636 = vxor.u32 %v1632, 2147483648
  %v1637 = vxor.u32 %v1633, 2147483648
  %v1638 = vmul.f32 %v1635, 1.442695
  %v1639 = vpow.pop %v1638
  %v1640 = vmul.f32 %v1636, 1.442695
  %v1641 = vpow.pop %v1640
  %v1642 = vmul.f32 %v1637, 1.442695
  %v1643 = vpow.pop %v1642
  %v1644 = vadd.f32 %v1639, 1.0
  %v1645 = vadd.f32 %v1641, 1.0
  %v1646 = vadd.f32 %v1643, 1.0
  %v1647 = vrcp.pop %v1644
  %v1648 = vmul.f32 1.0, %v1647
  %v1649 = vrcp.pop %v1645
  %v1650 = vmul.f32 1.0, %v1649
  %v1651 = vrcp.pop %v1646
  %v1652 = vmul.f32 1.0, %v1651
  %v1653 = vtanh.pop %v1634
  %v1654 = vmul.f32 %v1650, %v1540
  %v1655 = vmul.f32 %v1648, %v1653
  %v1656 = vadd.f32 %v1654, %v1655
  %v1657 = vtanh.pop %v1656
  %v1658 = vmul.f32 %v1652, %v1657
  %s1659 = sadd.s32 %s483, 7
  %v1660 = vstv %s1659
  %vm1661 = vcmp.lt.s32.totalorder %v1660, %v450
  %v1662 = vsel %vm1661, 1, 0
  %1663 = vset.pattern.permute.xlu0 0
  %1664 = vperm.xlu0 %1663, %v1662
  %v1665 = vpop.permute.xlu0 %1664
  %vm1666 = vcmp.eq.s32.totalorder %v1665, 1
  %v1667 = vsel %vm1666, %v1658, %v1539
  %v1668 = vsel %vm1666, %v1656, %v1540
  %s1669 = smul.u32 8, 4
  %s1670 = smul.addr %s1669, 8
  %s1671 = scalar_lea.vmem [#allocation2], %s1670
  %v1672 = vld [vmem:[%s1671] sm:$0xff]
  %v1673 = vld [vmem:[%s1671 + $0x8] sm:$0xff]
  %v1674 = vld [vmem:[%s1671 + $0x10] sm:$0xff]
  %v1675 = vld [vmem:[%s1671 + $0x18] sm:$0xff]
  %v1676 = vpack.c.bf16 %v1667, %v1667
  %1677 = vmatprep.subr.bf16.mxu0 %v619
  %1678 = vmatpush1.bf16.msra.mxu0 %v618
  %1679 = vmatprep.subr.bf16.mxu0 %v615
  %1680 = vmatpush1.bf16.msra.mxu0 %v614
  %1681 = vmatprep.subr.bf16.mxu0 %v611
  %1682 = vmatpush1.bf16.msra.mxu0 %v610
  %1683 = vmatprep.subr.bf16.mxu0 %v607
  %1684 = vmatpush1.bf16.msra.mxu0 %v606
  %1685 = vmatprep.subr.bf16.mxu0 %v603
  %1686 = vmatpush1.bf16.msra.mxu0 %v602
  %1687 = vmatprep.subr.bf16.mxu0 %v599
  %1688 = vmatpush1.bf16.msra.mxu0 %v598
  %1689 = vmatprep.subr.bf16.mxu0 %v595
  %1690 = vmatpush1.bf16.msra.mxu0 %v594
  %1691 = vmatprep.subr.bf16.mxu0 %v591
  %1692 = vmatpush1.bf16.msra.mxu0 %v590
  %1693 = vmatprep.subr.bf16.mxu0 0
  %1694 = vmatpush2.bf16.msra.mxu0 0
  %1695 = vmatprep.subr.bf16.mxu0 0
  %1696 = vmatpush2.bf16.msra.mxu0 0
  %1697 = vmatprep.subr.bf16.mxu0 0
  %1698 = vmatpush2.bf16.msra.mxu0 0
  %1699 = vmatprep.subr.bf16.mxu0 0
  %1700 = vmatpush2.bf16.msra.mxu0 0
  %1701 = vmatprep.subr.bf16.mxu0 0
  %1702 = vmatpush2.bf16.msra.mxu0 0
  %1703 = vmatprep.subr.bf16.mxu0 0
  %1704 = vmatpush2.bf16.msra.mxu0 0
  %1705 = vmatprep.subr.bf16.mxu0 0
  %1706 = vmatpush2.bf16.msra.mxu0 0
  %1707 = vmatprep.subr.bf16.mxu0 0
  %1708 = vmatpush2.bf16.msra.mxu0 0
  %1709 = vmatprep.mubr.bf16.mxu0 0
  %1710 = vmatmul.mubr.bf16.gmra.mxu0 %v1676
  %v1711 = vpop.f32.mrf.mxu0
  %v1712 = vadd.f32 0.0, %v1711
  %v1713 = vpop.f32.mrf.mxu0
  %v1714 = vadd.f32 0.0, %v1713
  %v1715 = vpop.f32.mrf.mxu0
  %v1716 = vpop.f32.mrf.mxu0
  %1717 = vdwg.mxu0
  %1718 = vmatprep.subr.bf16.mxu0 %v621
  %1719 = vmatpush1.bf16.msra.mxu0 %v620
  %1720 = vmatprep.subr.bf16.mxu0 %v617
  %1721 = vmatpush1.bf16.msra.mxu0 %v616
  %1722 = vmatprep.subr.bf16.mxu0 %v613
  %1723 = vmatpush1.bf16.msra.mxu0 %v612
  %1724 = vmatprep.subr.bf16.mxu0 %v609
  %1725 = vmatpush1.bf16.msra.mxu0 %v608
  %1726 = vmatprep.subr.bf16.mxu0 %v605
  %1727 = vmatpush1.bf16.msra.mxu0 %v604
  %1728 = vmatprep.subr.bf16.mxu0 %v601
  %1729 = vmatpush1.bf16.msra.mxu0 %v600
  %1730 = vmatprep.subr.bf16.mxu0 %v597
  %1731 = vmatpush1.bf16.msra.mxu0 %v596
  %1732 = vmatprep.subr.bf16.mxu0 %v593
  %1733 = vmatpush1.bf16.msra.mxu0 %v592
  %1734 = vmatprep.subr.bf16.mxu0 0
  %1735 = vmatpush2.bf16.msra.mxu0 0
  %1736 = vmatprep.subr.bf16.mxu0 0
  %1737 = vmatpush2.bf16.msra.mxu0 0
  %1738 = vmatprep.subr.bf16.mxu0 0
  %1739 = vmatpush2.bf16.msra.mxu0 0
  %1740 = vmatprep.subr.bf16.mxu0 0
  %1741 = vmatpush2.bf16.msra.mxu0 0
  %1742 = vmatprep.subr.bf16.mxu0 0
  %1743 = vmatpush2.bf16.msra.mxu0 0
  %1744 = vmatprep.subr.bf16.mxu0 0
  %1745 = vmatpush2.bf16.msra.mxu0 0
  %1746 = vmatprep.subr.bf16.mxu0 0
  %1747 = vmatpush2.bf16.msra.mxu0 0
  %1748 = vmatprep.subr.bf16.mxu0 0
  %1749 = vmatpush2.bf16.msra.mxu0 0
  %1750 = vmatprep.mubr.bf16.mxu0 0
  %1751 = vmatmul.mubr.bf16.gmra.mxu0 %v1676
  %v1752 = vpop.f32.mrf.mxu0
  %v1753 = vadd.f32 0.0, %v1752
  %v1754 = vpop.f32.mrf.mxu0
  %v1755 = vadd.f32 0.0, %v1754
  %v1756 = vpop.f32.mrf.mxu0
  %v1757 = vpop.f32.mrf.mxu0
  %1758 = vdwg.mxu0
  %v1759 = vadd.f32 %v1672, %v1712
  %v1760 = vadd.f32 %v1673, %v1714
  %v1761 = vadd.f32 %v1674, %v1753
  %v1762 = vadd.f32 %v1675, %v1755
  %v1763 = vxor.u32 %v1759, 2147483648
  %v1764 = vxor.u32 %v1760, 2147483648
  %v1765 = vxor.u32 %v1761, 2147483648
  %v1766 = vmul.f32 %v1763, 1.442695
  %v1767 = vpow.pop %v1766
  %v1768 = vmul.f32 %v1764, 1.442695
  %v1769 = vpow.pop %v1768
  %v1770 = vmul.f32 %v1765, 1.442695
  %v1771 = vpow.pop %v1770
  %v1772 = vadd.f32 %v1767, 1.0
  %v1773 = vadd.f32 %v1769, 1.0
  %v1774 = vadd.f32 %v1771, 1.0
  %v1775 = vrcp.pop %v1772
  %v1776 = vmul.f32 1.0, %v1775
  %v1777 = vrcp.pop %v1773
  %v1778 = vmul.f32 1.0, %v1777
  %v1779 = vrcp.pop %v1774
  %v1780 = vmul.f32 1.0, %v1779
  %v1781 = vtanh.pop %v1762
  %v1782 = vmul.f32 %v1778, %v1668
  %v1783 = vmul.f32 %v1776, %v1781
  %v1784 = vadd.f32 %v1782, %v1783
  %v1785 = vtanh.pop %v1784
  %v1786 = vmul.f32 %v1780, %v1785
  %s1787 = sadd.s32 %s483, 8
  %v1788 = vstv %s1787
  %vm1789 = vcmp.lt.s32.totalorder %v1788, %v450
  %v1790 = vsel %vm1789, 1, 0
  %1791 = vset.pattern.permute.xlu0 0
  %1792 = vperm.xlu0 %1791, %v1790
  %v1793 = vpop.permute.xlu0 %1792
  %vm1794 = vcmp.eq.s32.totalorder %v1793, 1
  %v1795 = vsel %vm1794, %v1786, %v1667
  %v1796 = vsel %vm1794, %v1784, %v1668
  %s1797 = smul.u32 9, 4
  %s1798 = smul.addr %s1797, 8
  %s1799 = scalar_lea.vmem [#allocation2], %s1798
  %v1800 = vld [vmem:[%s1799] sm:$0xff]
  %v1801 = vld [vmem:[%s1799 + $0x8] sm:$0xff]
  %v1802 = vld [vmem:[%s1799 + $0x10] sm:$0xff]
  %v1803 = vld [vmem:[%s1799 + $0x18] sm:$0xff]
  %v1804 = vpack.c.bf16 %v1795, %v1795
  %1805 = vmatprep.subr.bf16.mxu0 %v619
  %1806 = vmatpush1.bf16.msra.mxu0 %v618
  %1807 = vmatprep.subr.bf16.mxu0 %v615
  %1808 = vmatpush1.bf16.msra.mxu0 %v614
  %1809 = vmatprep.subr.bf16.mxu0 %v611
  %1810 = vmatpush1.bf16.msra.mxu0 %v610
  %1811 = vmatprep.subr.bf16.mxu0 %v607
  %1812 = vmatpush1.bf16.msra.mxu0 %v606
  %1813 = vmatprep.subr.bf16.mxu0 %v603
  %1814 = vmatpush1.bf16.msra.mxu0 %v602
  %1815 = vmatprep.subr.bf16.mxu0 %v599
  %1816 = vmatpush1.bf16.msra.mxu0 %v598
  %1817 = vmatprep.subr.bf16.mxu0 %v595
  %1818 = vmatpush1.bf16.msra.mxu0 %v594
  %1819 = vmatprep.subr.bf16.mxu0 %v591
  %1820 = vmatpush1.bf16.msra.mxu0 %v590
  %1821 = vmatprep.subr.bf16.mxu0 0
  %1822 = vmatpush2.bf16.msra.mxu0 0
  %1823 = vmatprep.subr.bf16.mxu0 0
  %1824 = vmatpush2.bf16.msra.mxu0 0
  %1825 = vmatprep.subr.bf16.mxu0 0
  %1826 = vmatpush2.bf16.msra.mxu0 0
  %1827 = vmatprep.subr.bf16.mxu0 0
  %1828 = vmatpush2.bf16.msra.mxu0 0
  %1829 = vmatprep.subr.bf16.mxu0 0
  %1830 = vmatpush2.bf16.msra.mxu0 0
  %1831 = vmatprep.subr.bf16.mxu0 0
  %1832 = vmatpush2.bf16.msra.mxu0 0
  %1833 = vmatprep.subr.bf16.mxu0 0
  %1834 = vmatpush2.bf16.msra.mxu0 0
  %1835 = vmatprep.subr.bf16.mxu0 0
  %1836 = vmatpush2.bf16.msra.mxu0 0
  %1837 = vmatprep.mubr.bf16.mxu0 0
  %1838 = vmatmul.mubr.bf16.gmra.mxu0 %v1804
  %v1839 = vpop.f32.mrf.mxu0
  %v1840 = vadd.f32 0.0, %v1839
  %v1841 = vpop.f32.mrf.mxu0
  %v1842 = vadd.f32 0.0, %v1841
  %v1843 = vpop.f32.mrf.mxu0
  %v1844 = vpop.f32.mrf.mxu0
  %1845 = vdwg.mxu0
  %1846 = vmatprep.subr.bf16.mxu0 %v621
  %1847 = vmatpush1.bf16.msra.mxu0 %v620
  %1848 = vmatprep.subr.bf16.mxu0 %v617
  %1849 = vmatpush1.bf16.msra.mxu0 %v616
  %1850 = vmatprep.subr.bf16.mxu0 %v613
  %1851 = vmatpush1.bf16.msra.mxu0 %v612
  %1852 = vmatprep.subr.bf16.mxu0 %v609
  %1853 = vmatpush1.bf16.msra.mxu0 %v608
  %1854 = vmatprep.subr.bf16.mxu0 %v605
  %1855 = vmatpush1.bf16.msra.mxu0 %v604
  %1856 = vmatprep.subr.bf16.mxu0 %v601
  %1857 = vmatpush1.bf16.msra.mxu0 %v600
  %1858 = vmatprep.subr.bf16.mxu0 %v597
  %1859 = vmatpush1.bf16.msra.mxu0 %v596
  %1860 = vmatprep.subr.bf16.mxu0 %v593
  %1861 = vmatpush1.bf16.msra.mxu0 %v592
  %1862 = vmatprep.subr.bf16.mxu0 0
  %1863 = vmatpush2.bf16.msra.mxu0 0
  %1864 = vmatprep.subr.bf16.mxu0 0
  %1865 = vmatpush2.bf16.msra.mxu0 0
  %1866 = vmatprep.subr.bf16.mxu0 0
  %1867 = vmatpush2.bf16.msra.mxu0 0
  %1868 = vmatprep.subr.bf16.mxu0 0
  %1869 = vmatpush2.bf16.msra.mxu0 0
  %1870 = vmatprep.subr.bf16.mxu0 0
  %1871 = vmatpush2.bf16.msra.mxu0 0
  %1872 = vmatprep.subr.bf16.mxu0 0
  %1873 = vmatpush2.bf16.msra.mxu0 0
  %1874 = vmatprep.subr.bf16.mxu0 0
  %1875 = vmatpush2.bf16.msra.mxu0 0
  %1876 = vmatprep.subr.bf16.mxu0 0
  %1877 = vmatpush2.bf16.msra.mxu0 0
  %1878 = vmatprep.mubr.bf16.mxu0 0
  %1879 = vmatmul.mubr.bf16.gmra.mxu0 %v1804
  %v1880 = vpop.f32.mrf.mxu0
  %v1881 = vadd.f32 0.0, %v1880
  %v1882 = vpop.f32.mrf.mxu0
  %v1883 = vadd.f32 0.0, %v1882
  %v1884 = vpop.f32.mrf.mxu0
  %v1885 = vpop.f32.mrf.mxu0
  %1886 = vdwg.mxu0
  %v1887 = vadd.f32 %v1800, %v1840
  %v1888 = vadd.f32 %v1801, %v1842
  %v1889 = vadd.f32 %v1802, %v1881
  %v1890 = vadd.f32 %v1803, %v1883
  %v1891 = vxor.u32 %v1887, 2147483648
  %v1892 = vxor.u32 %v1888, 2147483648
  %v1893 = vxor.u32 %v1889, 2147483648
  %v1894 = vmul.f32 %v1891, 1.442695
  %v1895 = vpow.pop %v1894
  %v1896 = vmul.f32 %v1892, 1.442695
  %v1897 = vpow.pop %v1896
  %v1898 = vmul.f32 %v1893, 1.442695
  %v1899 = vpow.pop %v1898
  %v1900 = vadd.f32 %v1895, 1.0
  %v1901 = vadd.f32 %v1897, 1.0
  %v1902 = vadd.f32 %v1899, 1.0
  %v1903 = vrcp.pop %v1900
  %v1904 = vmul.f32 1.0, %v1903
  %v1905 = vrcp.pop %v1901
  %v1906 = vmul.f32 1.0, %v1905
  %v1907 = vrcp.pop %v1902
  %v1908 = vmul.f32 1.0, %v1907
  %v1909 = vtanh.pop %v1890
  %v1910 = vmul.f32 %v1906, %v1796
  %v1911 = vmul.f32 %v1904, %v1909
  %v1912 = vadd.f32 %v1910, %v1911
  %v1913 = vtanh.pop %v1912
  %v1914 = vmul.f32 %v1908, %v1913
  %s1915 = sadd.s32 %s483, 9
  %v1916 = vstv %s1915
  %vm1917 = vcmp.lt.s32.totalorder %v1916, %v450
  %v1918 = vsel %vm1917, 1, 0
  %1919 = vset.pattern.permute.xlu0 0
  %1920 = vperm.xlu0 %1919, %v1918
  %v1921 = vpop.permute.xlu0 %1920
  %vm1922 = vcmp.eq.s32.totalorder %v1921, 1
  %v1923 = vsel %vm1922, %v1914, %v1795
  %v1924 = vsel %vm1922, %v1912, %v1796
  %s1925 = smul.u32 10, 4
  %s1926 = smul.addr %s1925, 8
  %s1927 = scalar_lea.vmem [#allocation2], %s1926
  %v1928 = vld [vmem:[%s1927] sm:$0xff]
  %v1929 = vld [vmem:[%s1927 + $0x8] sm:$0xff]
  %v1930 = vld [vmem:[%s1927 + $0x10] sm:$0xff]
  %v1931 = vld [vmem:[%s1927 + $0x18] sm:$0xff]
  %v1932 = vpack.c.bf16 %v1923, %v1923
  %1933 = vmatprep.subr.bf16.mxu0 %v619
  %1934 = vmatpush1.bf16.msra.mxu0 %v618
  %1935 = vmatprep.subr.bf16.mxu0 %v615
  %1936 = vmatpush1.bf16.msra.mxu0 %v614
  %1937 = vmatprep.subr.bf16.mxu0 %v611
  %1938 = vmatpush1.bf16.msra.mxu0 %v610
  %1939 = vmatprep.subr.bf16.mxu0 %v607
  %1940 = vmatpush1.bf16.msra.mxu0 %v606
  %1941 = vmatprep.subr.bf16.mxu0 %v603
  %1942 = vmatpush1.bf16.msra.mxu0 %v602
  %1943 = vmatprep.subr.bf16.mxu0 %v599
  %1944 = vmatpush1.bf16.msra.mxu0 %v598
  %1945 = vmatprep.subr.bf16.mxu0 %v595
  %1946 = vmatpush1.bf16.msra.mxu0 %v594
  %1947 = vmatprep.subr.bf16.mxu0 %v591
  %1948 = vmatpush1.bf16.msra.mxu0 %v590
  %1949 = vmatprep.subr.bf16.mxu0 0
  %1950 = vmatpush2.bf16.msra.mxu0 0
  %1951 = vmatprep.subr.bf16.mxu0 0
  %1952 = vmatpush2.bf16.msra.mxu0 0
  %1953 = vmatprep.subr.bf16.mxu0 0
  %1954 = vmatpush2.bf16.msra.mxu0 0
  %1955 = vmatprep.subr.bf16.mxu0 0
  %1956 = vmatpush2.bf16.msra.mxu0 0
  %1957 = vmatprep.subr.bf16.mxu0 0
  %1958 = vmatpush2.bf16.msra.mxu0 0
  %1959 = vmatprep.subr.bf16.mxu0 0
  %1960 = vmatpush2.bf16.msra.mxu0 0
  %1961 = vmatprep.subr.bf16.mxu0 0
  %1962 = vmatpush2.bf16.msra.mxu0 0
  %1963 = vmatprep.subr.bf16.mxu0 0
  %1964 = vmatpush2.bf16.msra.mxu0 0
  %1965 = vmatprep.mubr.bf16.mxu0 0
  %1966 = vmatmul.mubr.bf16.gmra.mxu0 %v1932
  %v1967 = vpop.f32.mrf.mxu0
  %v1968 = vadd.f32 0.0, %v1967
  %v1969 = vpop.f32.mrf.mxu0
  %v1970 = vadd.f32 0.0, %v1969
  %v1971 = vpop.f32.mrf.mxu0
  %v1972 = vpop.f32.mrf.mxu0
  %1973 = vdwg.mxu0
  %1974 = vmatprep.subr.bf16.mxu0 %v621
  %1975 = vmatpush1.bf16.msra.mxu0 %v620
  %1976 = vmatprep.subr.bf16.mxu0 %v617
  %1977 = vmatpush1.bf16.msra.mxu0 %v616
  %1978 = vmatprep.subr.bf16.mxu0 %v613
  %1979 = vmatpush1.bf16.msra.mxu0 %v612
  %1980 = vmatprep.subr.bf16.mxu0 %v609
  %1981 = vmatpush1.bf16.msra.mxu0 %v608
  %1982 = vmatprep.subr.bf16.mxu0 %v605
  %1983 = vmatpush1.bf16.msra.mxu0 %v604
  %1984 = vmatprep.subr.bf16.mxu0 %v601
  %1985 = vmatpush1.bf16.msra.mxu0 %v600
  %1986 = vmatprep.subr.bf16.mxu0 %v597
  %1987 = vmatpush1.bf16.msra.mxu0 %v596
  %1988 = vmatprep.subr.bf16.mxu0 %v593
  %1989 = vmatpush1.bf16.msra.mxu0 %v592
  %1990 = vmatprep.subr.bf16.mxu0 0
  %1991 = vmatpush2.bf16.msra.mxu0 0
  %1992 = vmatprep.subr.bf16.mxu0 0
  %1993 = vmatpush2.bf16.msra.mxu0 0
  %1994 = vmatprep.subr.bf16.mxu0 0
  %1995 = vmatpush2.bf16.msra.mxu0 0
  %1996 = vmatprep.subr.bf16.mxu0 0
  %1997 = vmatpush2.bf16.msra.mxu0 0
  %1998 = vmatprep.subr.bf16.mxu0 0
  %1999 = vmatpush2.bf16.msra.mxu0 0
  %2000 = vmatprep.subr.bf16.mxu0 0
  %2001 = vmatpush2.bf16.msra.mxu0 0
  %2002 = vmatprep.subr.bf16.mxu0 0
  %2003 = vmatpush2.bf16.msra.mxu0 0
  %2004 = vmatprep.subr.bf16.mxu0 0
  %2005 = vmatpush2.bf16.msra.mxu0 0
  %2006 = vmatprep.mubr.bf16.mxu0 0
  %2007 = vmatmul.mubr.bf16.gmra.mxu0 %v1932
  %v2008 = vpop.f32.mrf.mxu0
  %v2009 = vadd.f32 0.0, %v2008
  %v2010 = vpop.f32.mrf.mxu0
  %v2011 = vadd.f32 0.0, %v2010
  %v2012 = vpop.f32.mrf.mxu0
  %v2013 = vpop.f32.mrf.mxu0
  %2014 = vdwg.mxu0
  %v2015 = vadd.f32 %v1928, %v1968
  %v2016 = vadd.f32 %v1929, %v1970
  %v2017 = vadd.f32 %v1930, %v2009
  %v2018 = vadd.f32 %v1931, %v2011
  %v2019 = vxor.u32 %v2015, 2147483648
  %v2020 = vxor.u32 %v2016, 2147483648
  %v2021 = vxor.u32 %v2017, 2147483648
  %v2022 = vmul.f32 %v2019, 1.442695
  %v2023 = vpow.pop %v2022
  %v2024 = vmul.f32 %v2020, 1.442695
  %v2025 = vpow.pop %v2024
  %v2026 = vmul.f32 %v2021, 1.442695
  %v2027 = vpow.pop %v2026
  %v2028 = vadd.f32 %v2023, 1.0
  %v2029 = vadd.f32 %v2025, 1.0
  %v2030 = vadd.f32 %v2027, 1.0
  %v2031 = vrcp.pop %v2028
  %v2032 = vmul.f32 1.0, %v2031
  %v2033 = vrcp.pop %v2029
  %v2034 = vmul.f32 1.0, %v2033
  %v2035 = vrcp.pop %v2030
  %v2036 = vmul.f32 1.0, %v2035
  %v2037 = vtanh.pop %v2018
  %v2038 = vmul.f32 %v2034, %v1924
  %v2039 = vmul.f32 %v2032, %v2037
  %v2040 = vadd.f32 %v2038, %v2039
  %v2041 = vtanh.pop %v2040
  %v2042 = vmul.f32 %v2036, %v2041
  %s2043 = sadd.s32 %s483, 10
  %v2044 = vstv %s2043
  %vm2045 = vcmp.lt.s32.totalorder %v2044, %v450
  %v2046 = vsel %vm2045, 1, 0
  %2047 = vset.pattern.permute.xlu0 0
  %2048 = vperm.xlu0 %2047, %v2046
  %v2049 = vpop.permute.xlu0 %2048
  %vm2050 = vcmp.eq.s32.totalorder %v2049, 1
  %v2051 = vsel %vm2050, %v2042, %v1923
  %v2052 = vsel %vm2050, %v2040, %v1924
  %s2053 = smul.u32 11, 4
  %s2054 = smul.addr %s2053, 8
  %s2055 = scalar_lea.vmem [#allocation2], %s2054
  %v2056 = vld [vmem:[%s2055] sm:$0xff]
  %v2057 = vld [vmem:[%s2055 + $0x8] sm:$0xff]
  %v2058 = vld [vmem:[%s2055 + $0x10] sm:$0xff]
  %v2059 = vld [vmem:[%s2055 + $0x18] sm:$0xff]
  %v2060 = vpack.c.bf16 %v2051, %v2051
  %2061 = vmatprep.subr.bf16.mxu0 %v619
  %2062 = vmatpush1.bf16.msra.mxu0 %v618
  %2063 = vmatprep.subr.bf16.mxu0 %v615
  %2064 = vmatpush1.bf16.msra.mxu0 %v614
  %2065 = vmatprep.subr.bf16.mxu0 %v611
  %2066 = vmatpush1.bf16.msra.mxu0 %v610
  %2067 = vmatprep.subr.bf16.mxu0 %v607
  %2068 = vmatpush1.bf16.msra.mxu0 %v606
  %2069 = vmatprep.subr.bf16.mxu0 %v603
  %2070 = vmatpush1.bf16.msra.mxu0 %v602
  %2071 = vmatprep.subr.bf16.mxu0 %v599
  %2072 = vmatpush1.bf16.msra.mxu0 %v598
  %2073 = vmatprep.subr.bf16.mxu0 %v595
  %2074 = vmatpush1.bf16.msra.mxu0 %v594
  %2075 = vmatprep.subr.bf16.mxu0 %v591
  %2076 = vmatpush1.bf16.msra.mxu0 %v590
  %2077 = vmatprep.subr.bf16.mxu0 0
  %2078 = vmatpush2.bf16.msra.mxu0 0
  %2079 = vmatprep.subr.bf16.mxu0 0
  %2080 = vmatpush2.bf16.msra.mxu0 0
  %2081 = vmatprep.subr.bf16.mxu0 0
  %2082 = vmatpush2.bf16.msra.mxu0 0
  %2083 = vmatprep.subr.bf16.mxu0 0
  %2084 = vmatpush2.bf16.msra.mxu0 0
  %2085 = vmatprep.subr.bf16.mxu0 0
  %2086 = vmatpush2.bf16.msra.mxu0 0
  %2087 = vmatprep.subr.bf16.mxu0 0
  %2088 = vmatpush2.bf16.msra.mxu0 0
  %2089 = vmatprep.subr.bf16.mxu0 0
  %2090 = vmatpush2.bf16.msra.mxu0 0
  %2091 = vmatprep.subr.bf16.mxu0 0
  %2092 = vmatpush2.bf16.msra.mxu0 0
  %2093 = vmatprep.mubr.bf16.mxu0 0
  %2094 = vmatmul.mubr.bf16.gmra.mxu0 %v2060
  %v2095 = vpop.f32.mrf.mxu0
  %v2096 = vadd.f32 0.0, %v2095
  %v2097 = vpop.f32.mrf.mxu0
  %v2098 = vadd.f32 0.0, %v2097
  %v2099 = vpop.f32.mrf.mxu0
  %v2100 = vpop.f32.mrf.mxu0
  %2101 = vdwg.mxu0
  %2102 = vmatprep.subr.bf16.mxu0 %v621
  %2103 = vmatpush1.bf16.msra.mxu0 %v620
  %2104 = vmatprep.subr.bf16.mxu0 %v617
  %2105 = vmatpush1.bf16.msra.mxu0 %v616
  %2106 = vmatprep.subr.bf16.mxu0 %v613
  %2107 = vmatpush1.bf16.msra.mxu0 %v612
  %2108 = vmatprep.subr.bf16.mxu0 %v609
  %2109 = vmatpush1.bf16.msra.mxu0 %v608
  %2110 = vmatprep.subr.bf16.mxu0 %v605
  %2111 = vmatpush1.bf16.msra.mxu0 %v604
  %2112 = vmatprep.subr.bf16.mxu0 %v601
  %2113 = vmatpush1.bf16.msra.mxu0 %v600
  %2114 = vmatprep.subr.bf16.mxu0 %v597
  %2115 = vmatpush1.bf16.msra.mxu0 %v596
  %2116 = vmatprep.subr.bf16.mxu0 %v593
  %2117 = vmatpush1.bf16.msra.mxu0 %v592
  %2118 = vmatprep.subr.bf16.mxu0 0
  %2119 = vmatpush2.bf16.msra.mxu0 0
  %2120 = vmatprep.subr.bf16.mxu0 0
  %2121 = vmatpush2.bf16.msra.mxu0 0
  %2122 = vmatprep.subr.bf16.mxu0 0
  %2123 = vmatpush2.bf16.msra.mxu0 0
  %2124 = vmatprep.subr.bf16.mxu0 0
  %2125 = vmatpush2.bf16.msra.mxu0 0
  %2126 = vmatprep.subr.bf16.mxu0 0
  %2127 = vmatpush2.bf16.msra.mxu0 0
  %2128 = vmatprep.subr.bf16.mxu0 0
  %2129 = vmatpush2.bf16.msra.mxu0 0
  %2130 = vmatprep.subr.bf16.mxu0 0
  %2131 = vmatpush2.bf16.msra.mxu0 0
  %2132 = vmatprep.subr.bf16.mxu0 0
  %2133 = vmatpush2.bf16.msra.mxu0 0
  %2134 = vmatprep.mubr.bf16.mxu0 0
  %2135 = vmatmul.mubr.bf16.gmra.mxu0 %v2060
  %v2136 = vpop.f32.mrf.mxu0
  %v2137 = vadd.f32 0.0, %v2136
  %v2138 = vpop.f32.mrf.mxu0
  %v2139 = vadd.f32 0.0, %v2138
  %v2140 = vpop.f32.mrf.mxu0
  %v2141 = vpop.f32.mrf.mxu0
  %2142 = vdwg.mxu0
  %v2143 = vadd.f32 %v2056, %v2096
  %v2144 = vadd.f32 %v2057, %v2098
  %v2145 = vadd.f32 %v2058, %v2137
  %v2146 = vadd.f32 %v2059, %v2139
  %v2147 = vxor.u32 %v2143, 2147483648
  %v2148 = vxor.u32 %v2144, 2147483648
  %v2149 = vxor.u32 %v2145, 2147483648
  %v2150 = vmul.f32 %v2147, 1.442695
  %v2151 = vpow.pop %v2150
  %v2152 = vmul.f32 %v2148, 1.442695
  %v2153 = vpow.pop %v2152
  %v2154 = vmul.f32 %v2149, 1.442695
  %v2155 = vpow.pop %v2154
  %v2156 = vadd.f32 %v2151, 1.0
  %v2157 = vadd.f32 %v2153, 1.0
  %v2158 = vadd.f32 %v2155, 1.0
  %v2159 = vrcp.pop %v2156
  %v2160 = vmul.f32 1.0, %v2159
  %v2161 = vrcp.pop %v2157
  %v2162 = vmul.f32 1.0, %v2161
  %v2163 = vrcp.pop %v2158
  %v2164 = vmul.f32 1.0, %v2163
  %v2165 = vtanh.pop %v2146
  %v2166 = vmul.f32 %v2162, %v2052
  %v2167 = vmul.f32 %v2160, %v2165
  %v2168 = vadd.f32 %v2166, %v2167
  %v2169 = vtanh.pop %v2168
  %v2170 = vmul.f32 %v2164, %v2169
  %s2171 = sadd.s32 %s483, 11
  %v2172 = vstv %s2171
  %vm2173 = vcmp.lt.s32.totalorder %v2172, %v450
  %v2174 = vsel %vm2173, 1, 0
  %2175 = vset.pattern.permute.xlu0 0
  %2176 = vperm.xlu0 %2175, %v2174
  %v2177 = vpop.permute.xlu0 %2176
  %vm2178 = vcmp.eq.s32.totalorder %v2177, 1
  %v2179 = vsel %vm2178, %v2170, %v2051
  %v2180 = vsel %vm2178, %v2168, %v2052
  %s2181 = smul.u32 12, 4
  %s2182 = smul.addr %s2181, 8
  %s2183 = scalar_lea.vmem [#allocation2], %s2182
  %v2184 = vld [vmem:[%s2183] sm:$0xff]
  %v2185 = vld [vmem:[%s2183 + $0x8] sm:$0xff]
  %v2186 = vld [vmem:[%s2183 + $0x10] sm:$0xff]
  %v2187 = vld [vmem:[%s2183 + $0x18] sm:$0xff]
  %v2188 = vpack.c.bf16 %v2179, %v2179
  %2189 = vmatprep.subr.bf16.mxu0 %v619
  %2190 = vmatpush1.bf16.msra.mxu0 %v618
  %2191 = vmatprep.subr.bf16.mxu0 %v615
  %2192 = vmatpush1.bf16.msra.mxu0 %v614
  %2193 = vmatprep.subr.bf16.mxu0 %v611
  %2194 = vmatpush1.bf16.msra.mxu0 %v610
  %2195 = vmatprep.subr.bf16.mxu0 %v607
  %2196 = vmatpush1.bf16.msra.mxu0 %v606
  %2197 = vmatprep.subr.bf16.mxu0 %v603
  %2198 = vmatpush1.bf16.msra.mxu0 %v602
  %2199 = vmatprep.subr.bf16.mxu0 %v599
  %2200 = vmatpush1.bf16.msra.mxu0 %v598
  %2201 = vmatprep.subr.bf16.mxu0 %v595
  %2202 = vmatpush1.bf16.msra.mxu0 %v594
  %2203 = vmatprep.subr.bf16.mxu0 %v591
  %2204 = vmatpush1.bf16.msra.mxu0 %v590
  %2205 = vmatprep.subr.bf16.mxu0 0
  %2206 = vmatpush2.bf16.msra.mxu0 0
  %2207 = vmatprep.subr.bf16.mxu0 0
  %2208 = vmatpush2.bf16.msra.mxu0 0
  %2209 = vmatprep.subr.bf16.mxu0 0
  %2210 = vmatpush2.bf16.msra.mxu0 0
  %2211 = vmatprep.subr.bf16.mxu0 0
  %2212 = vmatpush2.bf16.msra.mxu0 0
  %2213 = vmatprep.subr.bf16.mxu0 0
  %2214 = vmatpush2.bf16.msra.mxu0 0
  %2215 = vmatprep.subr.bf16.mxu0 0
  %2216 = vmatpush2.bf16.msra.mxu0 0
  %2217 = vmatprep.subr.bf16.mxu0 0
  %2218 = vmatpush2.bf16.msra.mxu0 0
  %2219 = vmatprep.subr.bf16.mxu0 0
  %2220 = vmatpush2.bf16.msra.mxu0 0
  %2221 = vmatprep.mubr.bf16.mxu0 0
  %2222 = vmatmul.mubr.bf16.gmra.mxu0 %v2188
  %v2223 = vpop.f32.mrf.mxu0
  %v2224 = vadd.f32 0.0, %v2223
  %v2225 = vpop.f32.mrf.mxu0
  %v2226 = vadd.f32 0.0, %v2225
  %v2227 = vpop.f32.mrf.mxu0
  %v2228 = vpop.f32.mrf.mxu0
  %2229 = vdwg.mxu0
  %2230 = vmatprep.subr.bf16.mxu0 %v621
  %2231 = vmatpush1.bf16.msra.mxu0 %v620
  %2232 = vmatprep.subr.bf16.mxu0 %v617
  %2233 = vmatpush1.bf16.msra.mxu0 %v616
  %2234 = vmatprep.subr.bf16.mxu0 %v613
  %2235 = vmatpush1.bf16.msra.mxu0 %v612
  %2236 = vmatprep.subr.bf16.mxu0 %v609
  %2237 = vmatpush1.bf16.msra.mxu0 %v608
  %2238 = vmatprep.subr.bf16.mxu0 %v605
  %2239 = vmatpush1.bf16.msra.mxu0 %v604
  %2240 = vmatprep.subr.bf16.mxu0 %v601
  %2241 = vmatpush1.bf16.msra.mxu0 %v600
  %2242 = vmatprep.subr.bf16.mxu0 %v597
  %2243 = vmatpush1.bf16.msra.mxu0 %v596
  %2244 = vmatprep.subr.bf16.mxu0 %v593
  %2245 = vmatpush1.bf16.msra.mxu0 %v592
  %2246 = vmatprep.subr.bf16.mxu0 0
  %2247 = vmatpush2.bf16.msra.mxu0 0
  %2248 = vmatprep.subr.bf16.mxu0 0
  %2249 = vmatpush2.bf16.msra.mxu0 0
  %2250 = vmatprep.subr.bf16.mxu0 0
  %2251 = vmatpush2.bf16.msra.mxu0 0
  %2252 = vmatprep.subr.bf16.mxu0 0
  %2253 = vmatpush2.bf16.msra.mxu0 0
  %2254 = vmatprep.subr.bf16.mxu0 0
  %2255 = vmatpush2.bf16.msra.mxu0 0
  %2256 = vmatprep.subr.bf16.mxu0 0
  %2257 = vmatpush2.bf16.msra.mxu0 0
  %2258 = vmatprep.subr.bf16.mxu0 0
  %2259 = vmatpush2.bf16.msra.mxu0 0
  %2260 = vmatprep.subr.bf16.mxu0 0
  %2261 = vmatpush2.bf16.msra.mxu0 0
  %2262 = vmatprep.mubr.bf16.mxu0 0
  %2263 = vmatmul.mubr.bf16.gmra.mxu0 %v2188
  %v2264 = vpop.f32.mrf.mxu0
  %v2265 = vadd.f32 0.0, %v2264
  %v2266 = vpop.f32.mrf.mxu0
  %v2267 = vadd.f32 0.0, %v2266
  %v2268 = vpop.f32.mrf.mxu0
  %v2269 = vpop.f32.mrf.mxu0
  %2270 = vdwg.mxu0
  %v2271 = vadd.f32 %v2184, %v2224
  %v2272 = vadd.f32 %v2185, %v2226
  %v2273 = vadd.f32 %v2186, %v2265
  %v2274 = vadd.f32 %v2187, %v2267
  %v2275 = vxor.u32 %v2271, 2147483648
  %v2276 = vxor.u32 %v2272, 2147483648
  %v2277 = vxor.u32 %v2273, 2147483648
  %v2278 = vmul.f32 %v2275, 1.442695
  %v2279 = vpow.pop %v2278
  %v2280 = vmul.f32 %v2276, 1.442695
  %v2281 = vpow.pop %v2280
  %v2282 = vmul.f32 %v2277, 1.442695
  %v2283 = vpow.pop %v2282
  %v2284 = vadd.f32 %v2279, 1.0
  %v2285 = vadd.f32 %v2281, 1.0
  %v2286 = vadd.f32 %v2283, 1.0
  %v2287 = vrcp.pop %v2284
  %v2288 = vmul.f32 1.0, %v2287
  %v2289 = vrcp.pop %v2285
  %v2290 = vmul.f32 1.0, %v2289
  %v2291 = vrcp.pop %v2286
  %v2292 = vmul.f32 1.0, %v2291
  %v2293 = vtanh.pop %v2274
  %v2294 = vmul.f32 %v2290, %v2180
  %v2295 = vmul.f32 %v2288, %v2293
  %v2296 = vadd.f32 %v2294, %v2295
  %v2297 = vtanh.pop %v2296
  %v2298 = vmul.f32 %v2292, %v2297
  %s2299 = sadd.s32 %s483, 12
  %v2300 = vstv %s2299
  %vm2301 = vcmp.lt.s32.totalorder %v2300, %v450
  %v2302 = vsel %vm2301, 1, 0
  %2303 = vset.pattern.permute.xlu0 0
  %2304 = vperm.xlu0 %2303, %v2302
  %v2305 = vpop.permute.xlu0 %2304
  %vm2306 = vcmp.eq.s32.totalorder %v2305, 1
  %v2307 = vsel %vm2306, %v2298, %v2179
  %v2308 = vsel %vm2306, %v2296, %v2180
  %s2309 = smul.u32 13, 4
  %s2310 = smul.addr %s2309, 8
  %s2311 = scalar_lea.vmem [#allocation2], %s2310
  %v2312 = vld [vmem:[%s2311] sm:$0xff]
  %v2313 = vld [vmem:[%s2311 + $0x8] sm:$0xff]
  %v2314 = vld [vmem:[%s2311 + $0x10] sm:$0xff]
  %v2315 = vld [vmem:[%s2311 + $0x18] sm:$0xff]
  %v2316 = vpack.c.bf16 %v2307, %v2307
  %2317 = vmatprep.subr.bf16.mxu0 %v619
  %2318 = vmatpush1.bf16.msra.mxu0 %v618
  %2319 = vmatprep.subr.bf16.mxu0 %v615
  %2320 = vmatpush1.bf16.msra.mxu0 %v614
  %2321 = vmatprep.subr.bf16.mxu0 %v611
  %2322 = vmatpush1.bf16.msra.mxu0 %v610
  %2323 = vmatprep.subr.bf16.mxu0 %v607
  %2324 = vmatpush1.bf16.msra.mxu0 %v606
  %2325 = vmatprep.subr.bf16.mxu0 %v603
  %2326 = vmatpush1.bf16.msra.mxu0 %v602
  %2327 = vmatprep.subr.bf16.mxu0 %v599
  %2328 = vmatpush1.bf16.msra.mxu0 %v598
  %2329 = vmatprep.subr.bf16.mxu0 %v595
  %2330 = vmatpush1.bf16.msra.mxu0 %v594
  %2331 = vmatprep.subr.bf16.mxu0 %v591
  %2332 = vmatpush1.bf16.msra.mxu0 %v590
  %2333 = vmatprep.subr.bf16.mxu0 0
  %2334 = vmatpush2.bf16.msra.mxu0 0
  %2335 = vmatprep.subr.bf16.mxu0 0
  %2336 = vmatpush2.bf16.msra.mxu0 0
  %2337 = vmatprep.subr.bf16.mxu0 0
  %2338 = vmatpush2.bf16.msra.mxu0 0
  %2339 = vmatprep.subr.bf16.mxu0 0
  %2340 = vmatpush2.bf16.msra.mxu0 0
  %2341 = vmatprep.subr.bf16.mxu0 0
  %2342 = vmatpush2.bf16.msra.mxu0 0
  %2343 = vmatprep.subr.bf16.mxu0 0
  %2344 = vmatpush2.bf16.msra.mxu0 0
  %2345 = vmatprep.subr.bf16.mxu0 0
  %2346 = vmatpush2.bf16.msra.mxu0 0
  %2347 = vmatprep.subr.bf16.mxu0 0
  %2348 = vmatpush2.bf16.msra.mxu0 0
  %2349 = vmatprep.mubr.bf16.mxu0 0
  %2350 = vmatmul.mubr.bf16.gmra.mxu0 %v2316
  %v2351 = vpop.f32.mrf.mxu0
  %v2352 = vadd.f32 0.0, %v2351
  %v2353 = vpop.f32.mrf.mxu0
  %v2354 = vadd.f32 0.0, %v2353
  %v2355 = vpop.f32.mrf.mxu0
  %v2356 = vpop.f32.mrf.mxu0
  %2357 = vdwg.mxu0
  %2358 = vmatprep.subr.bf16.mxu0 %v621
  %2359 = vmatpush1.bf16.msra.mxu0 %v620
  %2360 = vmatprep.subr.bf16.mxu0 %v617
  %2361 = vmatpush1.bf16.msra.mxu0 %v616
  %2362 = vmatprep.subr.bf16.mxu0 %v613
  %2363 = vmatpush1.bf16.msra.mxu0 %v612
  %2364 = vmatprep.subr.bf16.mxu0 %v609
  %2365 = vmatpush1.bf16.msra.mxu0 %v608
  %2366 = vmatprep.subr.bf16.mxu0 %v605
  %2367 = vmatpush1.bf16.msra.mxu0 %v604
  %2368 = vmatprep.subr.bf16.mxu0 %v601
  %2369 = vmatpush1.bf16.msra.mxu0 %v600
  %2370 = vmatprep.subr.bf16.mxu0 %v597
  %2371 = vmatpush1.bf16.msra.mxu0 %v596
  %2372 = vmatprep.subr.bf16.mxu0 %v593
  %2373 = vmatpush1.bf16.msra.mxu0 %v592
  %2374 = vmatprep.subr.bf16.mxu0 0
  %2375 = vmatpush2.bf16.msra.mxu0 0
  %2376 = vmatprep.subr.bf16.mxu0 0
  %2377 = vmatpush2.bf16.msra.mxu0 0
  %2378 = vmatprep.subr.bf16.mxu0 0
  %2379 = vmatpush2.bf16.msra.mxu0 0
  %2380 = vmatprep.subr.bf16.mxu0 0
  %2381 = vmatpush2.bf16.msra.mxu0 0
  %2382 = vmatprep.subr.bf16.mxu0 0
  %2383 = vmatpush2.bf16.msra.mxu0 0
  %2384 = vmatprep.subr.bf16.mxu0 0
  %2385 = vmatpush2.bf16.msra.mxu0 0
  %2386 = vmatprep.subr.bf16.mxu0 0
  %2387 = vmatpush2.bf16.msra.mxu0 0
  %2388 = vmatprep.subr.bf16.mxu0 0
  %2389 = vmatpush2.bf16.msra.mxu0 0
  %2390 = vmatprep.mubr.bf16.mxu0 0
  %2391 = vmatmul.mubr.bf16.gmra.mxu0 %v2316
  %v2392 = vpop.f32.mrf.mxu0
  %v2393 = vadd.f32 0.0, %v2392
  %v2394 = vpop.f32.mrf.mxu0
  %v2395 = vadd.f32 0.0, %v2394
  %v2396 = vpop.f32.mrf.mxu0
  %v2397 = vpop.f32.mrf.mxu0
  %2398 = vdwg.mxu0
  %v2399 = vadd.f32 %v2312, %v2352
  %v2400 = vadd.f32 %v2313, %v2354
  %v2401 = vadd.f32 %v2314, %v2393
  %v2402 = vadd.f32 %v2315, %v2395
  %v2403 = vxor.u32 %v2399, 2147483648
  %v2404 = vxor.u32 %v2400, 2147483648
  %v2405 = vxor.u32 %v2401, 2147483648
  %v2406 = vmul.f32 %v2403, 1.442695
  %v2407 = vpow.pop %v2406
  %v2408 = vmul.f32 %v2404, 1.442695
  %v2409 = vpow.pop %v2408
  %v2410 = vmul.f32 %v2405, 1.442695
  %v2411 = vpow.pop %v2410
  %v2412 = vadd.f32 %v2407, 1.0
  %v2413 = vadd.f32 %v2409, 1.0
  %v2414 = vadd.f32 %v2411, 1.0
  %v2415 = vrcp.pop %v2412
  %v2416 = vmul.f32 1.0, %v2415
  %v2417 = vrcp.pop %v2413
  %v2418 = vmul.f32 1.0, %v2417
  %v2419 = vrcp.pop %v2414
  %v2420 = vmul.f32 1.0, %v2419
  %v2421 = vtanh.pop %v2402
  %v2422 = vmul.f32 %v2418, %v2308
  %v2423 = vmul.f32 %v2416, %v2421
  %v2424 = vadd.f32 %v2422, %v2423
  %v2425 = vtanh.pop %v2424
  %v2426 = vmul.f32 %v2420, %v2425
  %s2427 = sadd.s32 %s483, 13
  %v2428 = vstv %s2427
  %vm2429 = vcmp.lt.s32.totalorder %v2428, %v450
  %v2430 = vsel %vm2429, 1, 0
  %2431 = vset.pattern.permute.xlu0 0
  %2432 = vperm.xlu0 %2431, %v2430
  %v2433 = vpop.permute.xlu0 %2432
  %vm2434 = vcmp.eq.s32.totalorder %v2433, 1
  %v2435 = vsel %vm2434, %v2426, %v2307
  %v2436 = vsel %vm2434, %v2424, %v2308
  %s2437 = smul.u32 14, 4
  %s2438 = smul.addr %s2437, 8
  %s2439 = scalar_lea.vmem [#allocation2], %s2438
  %v2440 = vld [vmem:[%s2439] sm:$0xff]
  %v2441 = vld [vmem:[%s2439 + $0x8] sm:$0xff]
  %v2442 = vld [vmem:[%s2439 + $0x10] sm:$0xff]
  %v2443 = vld [vmem:[%s2439 + $0x18] sm:$0xff]
  %v2444 = vpack.c.bf16 %v2435, %v2435
  %2445 = vmatprep.subr.bf16.mxu0 %v619
  %2446 = vmatpush1.bf16.msra.mxu0 %v618
  %2447 = vmatprep.subr.bf16.mxu0 %v615
  %2448 = vmatpush1.bf16.msra.mxu0 %v614
  %2449 = vmatprep.subr.bf16.mxu0 %v611
  %2450 = vmatpush1.bf16.msra.mxu0 %v610
  %2451 = vmatprep.subr.bf16.mxu0 %v607
  %2452 = vmatpush1.bf16.msra.mxu0 %v606
  %2453 = vmatprep.subr.bf16.mxu0 %v603
  %2454 = vmatpush1.bf16.msra.mxu0 %v602
  %2455 = vmatprep.subr.bf16.mxu0 %v599
  %2456 = vmatpush1.bf16.msra.mxu0 %v598
  %2457 = vmatprep.subr.bf16.mxu0 %v595
  %2458 = vmatpush1.bf16.msra.mxu0 %v594
  %2459 = vmatprep.subr.bf16.mxu0 %v591
  %2460 = vmatpush1.bf16.msra.mxu0 %v590
  %2461 = vmatprep.subr.bf16.mxu0 0
  %2462 = vmatpush2.bf16.msra.mxu0 0
  %2463 = vmatprep.subr.bf16.mxu0 0
  %2464 = vmatpush2.bf16.msra.mxu0 0
  %2465 = vmatprep.subr.bf16.mxu0 0
  %2466 = vmatpush2.bf16.msra.mxu0 0
  %2467 = vmatprep.subr.bf16.mxu0 0
  %2468 = vmatpush2.bf16.msra.mxu0 0
  %2469 = vmatprep.subr.bf16.mxu0 0
  %2470 = vmatpush2.bf16.msra.mxu0 0
  %2471 = vmatprep.subr.bf16.mxu0 0
  %2472 = vmatpush2.bf16.msra.mxu0 0
  %2473 = vmatprep.subr.bf16.mxu0 0
  %2474 = vmatpush2.bf16.msra.mxu0 0
  %2475 = vmatprep.subr.bf16.mxu0 0
  %2476 = vmatpush2.bf16.msra.mxu0 0
  %2477 = vmatprep.mubr.bf16.mxu0 0
  %2478 = vmatmul.mubr.bf16.gmra.mxu0 %v2444
  %v2479 = vpop.f32.mrf.mxu0
  %v2480 = vadd.f32 0.0, %v2479
  %v2481 = vpop.f32.mrf.mxu0
  %v2482 = vadd.f32 0.0, %v2481
  %v2483 = vpop.f32.mrf.mxu0
  %v2484 = vpop.f32.mrf.mxu0
  %2485 = vdwg.mxu0
  %2486 = vmatprep.subr.bf16.mxu0 %v621
  %2487 = vmatpush1.bf16.msra.mxu0 %v620
  %2488 = vmatprep.subr.bf16.mxu0 %v617
  %2489 = vmatpush1.bf16.msra.mxu0 %v616
  %2490 = vmatprep.subr.bf16.mxu0 %v613
  %2491 = vmatpush1.bf16.msra.mxu0 %v612
  %2492 = vmatprep.subr.bf16.mxu0 %v609
  %2493 = vmatpush1.bf16.msra.mxu0 %v608
  %2494 = vmatprep.subr.bf16.mxu0 %v605
  %2495 = vmatpush1.bf16.msra.mxu0 %v604
  %2496 = vmatprep.subr.bf16.mxu0 %v601
  %2497 = vmatpush1.bf16.msra.mxu0 %v600
  %2498 = vmatprep.subr.bf16.mxu0 %v597
  %2499 = vmatpush1.bf16.msra.mxu0 %v596
  %2500 = vmatprep.subr.bf16.mxu0 %v593
  %2501 = vmatpush1.bf16.msra.mxu0 %v592
  %2502 = vmatprep.subr.bf16.mxu0 0
  %2503 = vmatpush2.bf16.msra.mxu0 0
  %2504 = vmatprep.subr.bf16.mxu0 0
  %2505 = vmatpush2.bf16.msra.mxu0 0
  %2506 = vmatprep.subr.bf16.mxu0 0
  %2507 = vmatpush2.bf16.msra.mxu0 0
  %2508 = vmatprep.subr.bf16.mxu0 0
  %2509 = vmatpush2.bf16.msra.mxu0 0
  %2510 = vmatprep.subr.bf16.mxu0 0
  %2511 = vmatpush2.bf16.msra.mxu0 0
  %2512 = vmatprep.subr.bf16.mxu0 0
  %2513 = vmatpush2.bf16.msra.mxu0 0
  %2514 = vmatprep.subr.bf16.mxu0 0
  %2515 = vmatpush2.bf16.msra.mxu0 0
  %2516 = vmatprep.subr.bf16.mxu0 0
  %2517 = vmatpush2.bf16.msra.mxu0 0
  %2518 = vmatprep.mubr.bf16.mxu0 0
  %2519 = vmatmul.mubr.bf16.gmra.mxu0 %v2444
  %v2520 = vpop.f32.mrf.mxu0
  %v2521 = vadd.f32 0.0, %v2520
  %v2522 = vpop.f32.mrf.mxu0
  %v2523 = vadd.f32 0.0, %v2522
  %v2524 = vpop.f32.mrf.mxu0
  %v2525 = vpop.f32.mrf.mxu0
  %2526 = vdwg.mxu0
  %v2527 = vadd.f32 %v2440, %v2480
  %v2528 = vadd.f32 %v2441, %v2482
  %v2529 = vadd.f32 %v2442, %v2521
  %v2530 = vadd.f32 %v2443, %v2523
  %v2531 = vxor.u32 %v2527, 2147483648
  %v2532 = vxor.u32 %v2528, 2147483648
  %v2533 = vxor.u32 %v2529, 2147483648
  %v2534 = vmul.f32 %v2531, 1.442695
  %v2535 = vpow.pop %v2534
  %v2536 = vmul.f32 %v2532, 1.442695
  %v2537 = vpow.pop %v2536
  %v2538 = vmul.f32 %v2533, 1.442695
  %v2539 = vpow.pop %v2538
  %v2540 = vadd.f32 %v2535, 1.0
  %v2541 = vadd.f32 %v2537, 1.0
  %v2542 = vadd.f32 %v2539, 1.0
  %v2543 = vrcp.pop %v2540
  %v2544 = vmul.f32 1.0, %v2543
  %v2545 = vrcp.pop %v2541
  %v2546 = vmul.f32 1.0, %v2545
  %v2547 = vrcp.pop %v2542
  %v2548 = vmul.f32 1.0, %v2547
  %v2549 = vtanh.pop %v2530
  %v2550 = vmul.f32 %v2546, %v2436
  %v2551 = vmul.f32 %v2544, %v2549
  %v2552 = vadd.f32 %v2550, %v2551
  %v2553 = vtanh.pop %v2552
  %v2554 = vmul.f32 %v2548, %v2553
  %s2555 = sadd.s32 %s483, 14
  %v2556 = vstv %s2555
  %vm2557 = vcmp.lt.s32.totalorder %v2556, %v450
  %v2558 = vsel %vm2557, 1, 0
  %2559 = vset.pattern.permute.xlu0 0
  %2560 = vperm.xlu0 %2559, %v2558
  %v2561 = vpop.permute.xlu0 %2560
  %vm2562 = vcmp.eq.s32.totalorder %v2561, 1
  %v2563 = vsel %vm2562, %v2554, %v2435
  %v2564 = vsel %vm2562, %v2552, %v2436
  %s2565 = smul.u32 15, 4
  %s2566 = smul.addr %s2565, 8
  %s2567 = scalar_lea.vmem [#allocation2], %s2566
  %v2568 = vld [vmem:[%s2567] sm:$0xff]
  %v2569 = vld [vmem:[%s2567 + $0x8] sm:$0xff]
  %v2570 = vld [vmem:[%s2567 + $0x10] sm:$0xff]
  %v2571 = vld [vmem:[%s2567 + $0x18] sm:$0xff]
  %v2572 = vpack.c.bf16 %v2563, %v2563
  %2573 = vmatprep.subr.bf16.mxu0 %v619
  %2574 = vmatpush1.bf16.msra.mxu0 %v618
  %2575 = vmatprep.subr.bf16.mxu0 %v615
  %2576 = vmatpush1.bf16.msra.mxu0 %v614
  %2577 = vmatprep.subr.bf16.mxu0 %v611
  %2578 = vmatpush1.bf16.msra.mxu0 %v610
  %2579 = vmatprep.subr.bf16.mxu0 %v607
  %2580 = vmatpush1.bf16.msra.mxu0 %v606
  %2581 = vmatprep.subr.bf16.mxu0 %v603
  %2582 = vmatpush1.bf16.msra.mxu0 %v602
  %2583 = vmatprep.subr.bf16.mxu0 %v599
  %2584 = vmatpush1.bf16.msra.mxu0 %v598
  %2585 = vmatprep.subr.bf16.mxu0 %v595
  %2586 = vmatpush1.bf16.msra.mxu0 %v594
  %2587 = vmatprep.subr.bf16.mxu0 %v591
  %2588 = vmatpush1.bf16.msra.mxu0 %v590
  %2589 = vmatprep.subr.bf16.mxu0 0
  %2590 = vmatpush2.bf16.msra.mxu0 0
  %2591 = vmatprep.subr.bf16.mxu0 0
  %2592 = vmatpush2.bf16.msra.mxu0 0
  %2593 = vmatprep.subr.bf16.mxu0 0
  %2594 = vmatpush2.bf16.msra.mxu0 0
  %2595 = vmatprep.subr.bf16.mxu0 0
  %2596 = vmatpush2.bf16.msra.mxu0 0
  %2597 = vmatprep.subr.bf16.mxu0 0
  %2598 = vmatpush2.bf16.msra.mxu0 0
  %2599 = vmatprep.subr.bf16.mxu0 0
  %2600 = vmatpush2.bf16.msra.mxu0 0
  %2601 = vmatprep.subr.bf16.mxu0 0
  %2602 = vmatpush2.bf16.msra.mxu0 0
  %2603 = vmatprep.subr.bf16.mxu0 0
  %2604 = vmatpush2.bf16.msra.mxu0 0
  %2605 = vmatprep.mubr.bf16.mxu0 0
  %2606 = vmatmul.mubr.bf16.gmra.mxu0 %v2572
  %v2607 = vpop.f32.mrf.mxu0
  %v2608 = vadd.f32 0.0, %v2607
  %v2609 = vpop.f32.mrf.mxu0
  %v2610 = vadd.f32 0.0, %v2609
  %v2611 = vpop.f32.mrf.mxu0
  %v2612 = vpop.f32.mrf.mxu0
  %2613 = vdwg.mxu0
  %2614 = vmatprep.subr.bf16.mxu0 %v621
  %2615 = vmatpush1.bf16.msra.mxu0 %v620
  %2616 = vmatprep.subr.bf16.mxu0 %v617
  %2617 = vmatpush1.bf16.msra.mxu0 %v616
  %2618 = vmatprep.subr.bf16.mxu0 %v613
  %2619 = vmatpush1.bf16.msra.mxu0 %v612
  %2620 = vmatprep.subr.bf16.mxu0 %v609
  %2621 = vmatpush1.bf16.msra.mxu0 %v608
  %2622 = vmatprep.subr.bf16.mxu0 %v605
  %2623 = vmatpush1.bf16.msra.mxu0 %v604
  %2624 = vmatprep.subr.bf16.mxu0 %v601
  %2625 = vmatpush1.bf16.msra.mxu0 %v600
  %2626 = vmatprep.subr.bf16.mxu0 %v597
  %2627 = vmatpush1.bf16.msra.mxu0 %v596
  %2628 = vmatprep.subr.bf16.mxu0 %v593
  %2629 = vmatpush1.bf16.msra.mxu0 %v592
  %2630 = vmatprep.subr.bf16.mxu0 0
  %2631 = vmatpush2.bf16.msra.mxu0 0
  %2632 = vmatprep.subr.bf16.mxu0 0
  %2633 = vmatpush2.bf16.msra.mxu0 0
  %2634 = vmatprep.subr.bf16.mxu0 0
  %2635 = vmatpush2.bf16.msra.mxu0 0
  %2636 = vmatprep.subr.bf16.mxu0 0
  %2637 = vmatpush2.bf16.msra.mxu0 0
  %2638 = vmatprep.subr.bf16.mxu0 0
  %2639 = vmatpush2.bf16.msra.mxu0 0
  %2640 = vmatprep.subr.bf16.mxu0 0
  %2641 = vmatpush2.bf16.msra.mxu0 0
  %2642 = vmatprep.subr.bf16.mxu0 0
  %2643 = vmatpush2.bf16.msra.mxu0 0
  %2644 = vmatprep.subr.bf16.mxu0 0
  %2645 = vmatpush2.bf16.msra.mxu0 0
  %2646 = vmatprep.mubr.bf16.mxu0 0
  %2647 = vmatmul.mubr.bf16.gmra.mxu0 %v2572
  %v2648 = vpop.f32.mrf.mxu0
  %v2649 = vadd.f32 0.0, %v2648
  %v2650 = vpop.f32.mrf.mxu0
  %v2651 = vadd.f32 0.0, %v2650
  %v2652 = vpop.f32.mrf.mxu0
  %v2653 = vpop.f32.mrf.mxu0
  %2654 = vdwg.mxu0
  %v2655 = vadd.f32 %v2568, %v2608
  %v2656 = vadd.f32 %v2569, %v2610
  %v2657 = vadd.f32 %v2570, %v2649
  %v2658 = vadd.f32 %v2571, %v2651
  %v2659 = vxor.u32 %v2655, 2147483648
  %v2660 = vxor.u32 %v2656, 2147483648
  %v2661 = vxor.u32 %v2657, 2147483648
  %v2662 = vmul.f32 %v2659, 1.442695
  %v2663 = vpow.pop %v2662
  %v2664 = vmul.f32 %v2660, 1.442695
  %v2665 = vpow.pop %v2664
  %v2666 = vmul.f32 %v2661, 1.442695
  %v2667 = vpow.pop %v2666
  %v2668 = vadd.f32 %v2663, 1.0
  %v2669 = vadd.f32 %v2665, 1.0
  %v2670 = vadd.f32 %v2667, 1.0
  %v2671 = vrcp.pop %v2668
  %v2672 = vmul.f32 1.0, %v2671
  %v2673 = vrcp.pop %v2669
  %v2674 = vmul.f32 1.0, %v2673
  %v2675 = vrcp.pop %v2670
  %v2676 = vmul.f32 1.0, %v2675
  %v2677 = vtanh.pop %v2658
  %v2678 = vmul.f32 %v2674, %v2564
  %v2679 = vmul.f32 %v2672, %v2677
  %v2680 = vadd.f32 %v2678, %v2679
  %v2681 = vtanh.pop %v2680
  %v2682 = vmul.f32 %v2676, %v2681
  %s2683 = sadd.s32 %s483, 15
  %v2684 = vstv %s2683
  %vm2685 = vcmp.lt.s32.totalorder %v2684, %v450
  %v2686 = vsel %vm2685, 1, 0
  %2687 = vset.pattern.permute.xlu0 0
  %2688 = vperm.xlu0 %2687, %v2686
  %v2689 = vpop.permute.xlu0 %2688
  %vm2690 = vcmp.eq.s32.totalorder %v2689, 1
  %v2691 = vsel %vm2690, %v2682, %v2563
  %v2692 = vsel %vm2690, %v2680, %v2564
  %2693 = vst [vmem:[#allocation3] sm:$0xff] %v2691
  %2694 = vst [vmem:[#allocation4] sm:$0xff] %v2692
  // Predicated region
  $region34: #{rnn_classifier_forward.1} parent=0 // pred_check
    %p2695 = pneg %p27
  $region35: #{rnn_classifier_forward.1} parent=0 // pred_check_branch
    %2697 = sbr.rel (%p2695) target = $region37
  $region36: #{rnn_classifier_forward.1} parent=0 // pred_region
    %v2698 = vpack.c.bf16 %v2691, %v2691
    %v2699 = vld [vmem:[%s5] sm:$0xf]
    %v2700 = vld [vmem:[%s5 + $0x4] sm:$0xf]
    %v2701 = vld [vmem:[%s5 + $0x8] sm:$0xf]
    %v2702 = vld [vmem:[%s5 + $0xc] sm:$0xf]
    %v2703 = vld [vmem:[%s5 + $0x10] sm:$0xf]
    %v2704 = vld [vmem:[%s5 + $0x14] sm:$0xf]
    %v2705 = vld [vmem:[%s5 + $0x18] sm:$0xf]
    %v2706 = vld [vmem:[%s5 + $0x1c] sm:$0xf]
    %v2707 = vld [vmem:[%s5 + $0x20] sm:$0xf]
    %v2708 = vld [vmem:[%s5 + $0x24] sm:$0xf]
    %v2709 = vld [vmem:[%s5 + $0x28] sm:$0xf]
    %v2710 = vld [vmem:[%s5 + $0x2c] sm:$0xf]
    %v2711 = vld [vmem:[%s5 + $0x30] sm:$0xf]
    %v2712 = vld [vmem:[%s5 + $0x34] sm:$0xf]
    %v2713 = vld [vmem:[%s5 + $0x38] sm:$0xf]
    %v2714 = vld [vmem:[%s5 + $0x3c] sm:$0xf]
    %v2715 = vld [vmem:[%s6] sm:$0x1]
    %v2717 = vlaneseq
    %v2718 = vshrl.u32 %v2717, 7
    %v2719 = vsub.s32 0, %v2718
    %v2720 = vrot.slane %v2715, %v2719
    %v2738 = vunpack.c.l.b16 %v2699
    %v2739 = vunpack.c.l.b16 %v2700
    %v2740 = vunpack.c.l.b16 %v2701
    %v2741 = vunpack.c.l.b16 %v2702
    %v2742 = vunpack.c.l.b16 %v2703
    %v2743 = vunpack.c.l.b16 %v2704
    %v2744 = vunpack.c.l.b16 %v2705
    %v2745 = vunpack.c.l.b16 %v2706
    %v2746 = vunpack.c.l.b16 %v2707
    %v2747 = vunpack.c.l.b16 %v2708
    %v2748 = vunpack.c.l.b16 %v2709
    %v2749 = vunpack.c.l.b16 %v2710
    %v2750 = vunpack.c.l.b16 %v2711
    %v2751 = vunpack.c.l.b16 %v2712
    %v2752 = vunpack.c.l.b16 %v2713
    %v2753 = vunpack.c.l.b16 %v2714
    %v2754 = vpack.c.b16 %v2739, %v2738
    %v2755 = vpack.c.b16 %v2741, %v2740
    %v2756 = vpack.c.b16 %v2743, %v2742
    %v2757 = vpack.c.b16 %v2745, %v2744
    %v2758 = vpack.c.b16 %v2747, %v2746
    %v2759 = vpack.c.b16 %v2749, %v2748
    %v2760 = vpack.c.b16 %v2751, %v2750
    %v2761 = vpack.c.b16 %v2753, %v2752
    %2770 = vmatprep.subr.bf16.mxu0 0
    %2771 = vmatpush1.bf16.msra.mxu0 %v2761
    %2772 = vmatprep.subr.bf16.mxu0 0
    %2773 = vmatpush1.bf16.msra.mxu0 %v2760
    %2774 = vmatprep.subr.bf16.mxu0 0
    %2775 = vmatpush1.bf16.msra.mxu0 %v2759
    %2776 = vmatprep.subr.bf16.mxu0 0
    %2777 = vmatpush1.bf16.msra.mxu0 %v2758
    %2778 = vmatprep.subr.bf16.mxu0 0
    %2779 = vmatpush1.bf16.msra.mxu0 %v2757
    %2780 = vmatprep.subr.bf16.mxu0 0
    %2781 = vmatpush1.bf16.msra.mxu0 %v2756
    %2782 = vmatprep.subr.bf16.mxu0 0
    %2783 = vmatpush1.bf16.msra.mxu0 %v2755
    %2784 = vmatprep.subr.bf16.mxu0 0
    %2785 = vmatpush1.bf16.msra.mxu0 %v2754
    %2786 = vmatprep.subr.bf16.mxu0 0
    %2787 = vmatpush2.bf16.msra.mxu0 0
    %2788 = vmatprep.subr.bf16.mxu0 0
    %2789 = vmatpush2.bf16.msra.mxu0 0
    %2790 = vmatprep.subr.bf16.mxu0 0
    %2791 = vmatpush2.bf16.msra.mxu0 0
    %2792 = vmatprep.subr.bf16.mxu0 0
    %2793 = vmatpush2.bf16.msra.mxu0 0
    %2794 = vmatprep.subr.bf16.mxu0 0
    %2795 = vmatpush2.bf16.msra.mxu0 0
    %2796 = vmatprep.subr.bf16.mxu0 0
    %2797 = vmatpush2.bf16.msra.mxu0 0
    %2798 = vmatprep.subr.bf16.mxu0 0
    %2799 = vmatpush2.bf16.msra.mxu0 0
    %2800 = vmatprep.subr.bf16.mxu0 0
    %2801 = vmatpush2.bf16.msra.mxu0 0
    %2802 = vmatprep.mubr.bf16.mxu0 0
    %2803 = vmatmul.mubr.bf16.gmra.mxu0 %v2698
    %v2804 = vpop.f32.mrf.mxu0
    %v2805 = vadd.f32 %v2720, %v2804
    %v2806 = vpop.f32.mrf.mxu0
    %v2807 = vpop.f32.mrf.mxu0
    %v2808 = vpop.f32.mrf.mxu0
    %2809 = vdwg.mxu0
    %v2810 = vxor.u32 %v2805, 2147483648
    %v2811 = vmul.f32 %v2810, 1.442695
    %v2812 = vpow.pop %v2811
    %v2813 = vadd.f32 %v2812, 1.0
    %v2814 = vrcp.pop %v2813
    %v2815 = vmul.f32 1.0, %v2814
    %2816 = vst [vmem:[%s7] sm:$0xff] %v2815
  $region37: #{rnn_classifier_forward.1} parent=0 // pred_fallthru
    _
  // Predicated region
  $region38: #{rnn_classifier_forward.1} parent=0 // pred_check
    _
  $region39: #{rnn_classifier_forward.1} parent=0 // pred_check_branch
    %2818 = sbr.rel (0) target = $region41
  $region40: #{rnn_classifier_forward.1} parent=0 // pred_region
    _
  $region41: #{rnn_classifier_forward.1} parent=0 // pred_fallthru
    _
  // Predicated region
  $region42: #{rnn_classifier_forward.1} parent=0 // pred_check
    _
  $region43: #{rnn_classifier_forward.1} parent=0 // pred_check_branch
    %2820 = sbr.rel (0) target = $region45
  $region44: #{rnn_classifier_forward.1} parent=0 // pred_region
    _
  $region45: #{rnn_classifier_forward.1} parent=0 // pred_fallthru
    _

</llo_original>
